<compile_context>
chip_gen: v6e
topology: v6e:2x2x1
jax: 0.10.0
libtpu: 0.0.40
codegen_flags: <defaults>
</compile_context>

<pallas_src>
import math

import jax
import jax.numpy as jnp
from jax.experimental import pallas as pl
from jax.experimental.pallas import tpu as pltpu


# bf16 MXU operands (v6e/v7x native path, halves weight DMA/VMEM). Set to jnp.float32
# if bit-faithfulness vs. an f32 reference is required (e.g. v5e validation).
MATMUL_DTYPE = jnp.bfloat16


def _mm(a, b):
    """MXU matmul with f32 accumulation; casts the activation to the weight dtype."""
    return jnp.dot(a.astype(b.dtype), b, preferred_element_type=jnp.float32)


# ----------------------------------------------------------------------------
# Fused kernel: LSTM1 & LSTM2 (interleaved) -> attention pooling -> FC head
# Activations are time-major inside the kernel; x arrives pre-flattened (T*B, D).
# ----------------------------------------------------------------------------
def fused_kernel(x_ref,
                 wih1_ref, whh1_ref, b1_ref,
                 w2_hbm, b2_ref,
                 wa1_ref, ba1_ref, wa2_ref, ba2_ref,
                 wf1_ref, bf1_ref, wf2_ref, bf2_ref,
                 out_ref,
                 h2_scr, w2_vmem, w2_sem):
    T, B, H = h2_scr.shape

    # Start pulling the fused layer-2 weight [Wih2^T; Whh2^T] (largest weight) from HBM
    # while the layer-1 input projection and layer-1 step 0 run -> hides part of the
    # serial weight-DMA prologue (no grid, so everything else lands before the body).
    w2_copy = pltpu.make_async_copy(w2_hbm, w2_vmem, w2_sem)
    w2_copy.start()

    def gates_to_hc(g, c):
        # gate order (i, f, g, o) as in PyTorch; one fused sigmoid over the contiguous
        # [i, f] slice, one over o, one tanh (fewer EUP pushes on the critical path).
        sig_if = jax.nn.sigmoid(g[:, :2 * H])
        i = sig_if[:, :H]
        f = sig_if[:, H:]
        gg = jnp.tanh(g[:, 2 * H:3 * H])
        o = jax.nn.sigmoid(g[:, 3 * H:])
        c = f * c + i * gg
        h = o * jnp.tanh(c)
        return h, c

    # ---- layer-1 input projection, hoisted out of the recurrence -----------------
    xg1 = (_mm(x_ref[...], wih1_ref[...]) + b1_ref[...]).reshape(T, B, 4 * H)
    whh1 = whh1_ref[...]

    # ---- layer-1 step 0 (h1_{-1} = 0 -> gates are just xg1[0]); overlaps w2 DMA ---
    h1, c1 = gates_to_hc(xg1[0], jnp.zeros((B, H), jnp.float32))
    h2 = jnp.zeros((B, H), jnp.float32)
    c2 = jnp.zeros((B, H), jnp.float32)

    w2_copy.wait()
    w2 = w2_vmem[...]
    b2 = b2_ref[...]

    # ---- skewed / interleaved recurrence ------------------------------------------
    # Per iteration: layer-2 step t (needs h1_t, h2_{t-1}) and layer-1 step t+1
    # (needs h1_t, c1_t) are mutually independent -> ILP across MXU/EUP/VPU.
    # T is small & static -> fully unrolled; no per-step grid / scf overhead.
    for t in range(T):
        g2 = _mm(jnp.concatenate([h1, h2], axis=-1), w2) + b2            # (B, 4H)
        if t + 1 < T:
            g1 = xg1[t + 1] + _mm(h1, whh1)                              # (B, 4H)
        h2, c2 = gates_to_hc(g2, c2)
        h2_scr[t] = h2
        if t + 1 < T:
            h1, c1 = gates_to_hc(g1, c1)
    # dropout1 / dropout in fc: identity (inference).

    # ---- attention pooling over time ------------------------------------------------
    h2_all = h2_scr[...]                                                  # (T, B, H)
    a1 = jnp.tanh(_mm(h2_all.reshape(T * B, H), wa1_ref[...]) + ba1_ref[...])  # (T*B, H2)
    s = jnp.sum(a1 * wa2_ref[...], axis=-1, keepdims=True) + ba2_ref[...]      # (T*B, 1)
    s = s.reshape(T, B, 1)
    # softmax over time (time-major axis 0 == PyTorch Softmax(dim=1) on (B, T, 1))
    s = s - jnp.max(s, axis=0, keepdims=True)
    e = jnp.exp(s)
    w = e * pl.reciprocal(jnp.sum(e, axis=0, keepdims=True), approx=True)
    ctx = jnp.sum(w * h2_all, axis=0)                                     # (B, H)

    # ---- FC head ---------------------------------------------------------------------
    f1 = jnp.maximum(_mm(ctx, wf1_ref[...]) + bf1_ref[...], 0.0)          # (B, H2)
    if wf2_ref.shape[0] == 1:
        # output_size == 1: VPU multiply + lane reduce (no N=1 MXU pass); broadcast into
        # a lane-dense (B, 128) output slab -> plain vst instead of a masked store.
        val = jnp.sum(f1 * wf2_ref[...], axis=-1, keepdims=True) + bf2_ref[...]  # (B, 1)
        out_ref[...] = jnp.broadcast_to(val, out_ref.shape)
    else:
        out_ref[...] = _mm(f1, wf2_ref[...]) + bf2_ref[...]               # (B, OUT_PAD)


# ----------------------------------------------------------------------------
# One-time parameter packing (transposes / casts / bias folding hoisted here)
# ----------------------------------------------------------------------------
def pack_params(p):
    H = p['w_hh1'].shape[1]
    H2 = p['wa1'].shape[0]
    OUT = p['wf2'].shape[0]
    md = MATMUL_DTYPE
    packed = dict(
        wih1=jnp.transpose(p['w_ih1']).astype(md),                        # (D, 4H)
        whh1=jnp.transpose(p['w_hh1']).astype(md),                        # (H, 4H)
        b1=(p['b_ih1'] + p['b_hh1']).reshape(1, 4 * H),
        # fused layer-2 weight: [Wih2^T ; Whh2^T]  -> (2H, 4H)
        w2cat=jnp.concatenate(
            [jnp.transpose(p['w_ih2']), jnp.transpose(p['w_hh2'])], axis=0).astype(md),
        b2=(p['b_ih2'] + p['b_hh2']).reshape(1, 4 * H),
        wa1=jnp.transpose(p['wa1']).astype(md),                           # (H, H2)
        ba1=p['ba1'].reshape(1, H2),
        wa2=p['wa2'].reshape(1, H2),                                      # VPU path, f32
        ba2=p['ba2'].reshape(1, 1),
        wf1=jnp.transpose(p['wf1']).astype(md),                           # (H, H2)
        bf1=p['bf1'].reshape(1, H2),
    )
    if OUT == 1:
        packed['wf2'] = p['wf2'].reshape(1, H2)                           # VPU path, f32
        packed['bf2'] = p['bf2'].reshape(1, 1)
    else:
        out_pad = ((OUT + 127) // 128) * 128
        packed['wf2'] = jnp.zeros((H2, out_pad), md).at[:, :OUT].set(
            jnp.transpose(p['wf2']).astype(md))
        packed['bf2'] = jnp.zeros((1, out_pad), jnp.float32).at[:, :OUT].set(
            p['bf2'].reshape(1, OUT))
    return packed


# ----------------------------------------------------------------------------
# Wrapper: (B, T, D) batch-first input -> (B,) / (B, OUT) output
# ----------------------------------------------------------------------------
def forward(x, packed, *, out_size):
    B, T, D = x.shape
    H = packed['whh1'].shape[0]
    out_lanes = 128 if out_size == 1 else ((out_size + 127) // 128) * 128

    # time-major + flattened (T*B, D) so the first matmul LHS needs no in-kernel relayout
    x2d = jnp.transpose(x, (1, 0, 2)).reshape(T * B, D).astype(MATMUL_DTYPE)

    vmem = pl.BlockSpec(memory_space=pltpu.MemorySpace.VMEM)
    out = pl.pallas_call(
        fused_kernel,
        out_shape=jax.ShapeDtypeStruct((B, out_lanes), jnp.float32),
        in_specs=[vmem] * 4                     # x, wih1, whh1, b1
                 + [pl.BlockSpec(memory_space=pl.ANY)]   # w2cat stays in HBM, manual DMA
                 + [vmem] * 9,                  # b2, attention + fc weights/biases
        out_specs=vmem,
        scratch_shapes=[
            pltpu.VMEM((T, B, H), jnp.float32),           # h2 (all timesteps)
            pltpu.VMEM((2 * H, 4 * H), MATMUL_DTYPE),     # w2cat landing buffer
            pltpu.SemaphoreType.DMA,                      # w2cat DMA semaphore
        ],
    )(
        x2d,
        packed['wih1'], packed['whh1'], packed['b1'],
        packed['w2cat'], packed['b2'],
        packed['wa1'], packed['ba1'], packed['wa2'], packed['ba2'],
        packed['wf1'], packed['bf1'], packed['wf2'], packed['bf2'],
    )
    return out[:, 0] if out_size == 1 else out[:, :out_size]   # squeeze(-1) like PyTorch


# ----------------------------------------------------------------------------
# Pure-JAX reference (same math, f32 end-to-end) for a sanity check
# ----------------------------------------------------------------------------
def lstm_ref(x, w_ih, w_hh, b_ih, b_hh):
    B, T, _ = x.shape
    H = w_hh.shape[1]
    h = jnp.zeros((B, H), jnp.float32)
    c = jnp.zeros((B, H), jnp.float32)
    outs = []
    for t in range(T):
        gates = x[:, t] @ w_ih.T + h @ w_hh.T + b_ih + b_hh
        i, f, g, o = jnp.split(gates, 4, axis=-1)
        i, f, o = jax.nn.sigmoid(i), jax.nn.sigmoid(f), jax.nn.sigmoid(o)
        g = jnp.tanh(g)
        c = f * c + i * g
        h = o * jnp.tanh(c)
        outs.append(h)
    return jnp.stack(outs, axis=1)  # (B, T, H)


def forward_ref(x, p):
    h1 = lstm_ref(x, p['w_ih1'], p['w_hh1'], p['b_ih1'], p['b_hh1'])
    h2 = lstm_ref(h1, p['w_ih2'], p['w_hh2'], p['b_ih2'], p['b_hh2'])
    a1 = jnp.tanh(h2 @ p['wa1'].T + p['ba1'])
    s = a1 @ p['wa2'].T + p['ba2']                    # (B, T, 1)
    w = jax.nn.softmax(s, axis=1)
    ctx = jnp.sum(w * h2, axis=1)                     # (B, H)
    f1 = jnp.maximum(ctx @ p['wf1'].T + p['bf1'], 0.0)
    out = f1 @ p['wf2'].T + p['bf2']
    return out[:, 0] if out.shape[-1] == 1 else out


# ----------------------------------------------------------------------------
# Deterministic parameter init (xavier_uniform for 2-D weights, zeros for biases)
# ----------------------------------------------------------------------------
def xavier_uniform(key, shape):
    fan_out, fan_in = shape  # PyTorch weight convention: (out_features, in_features)
    limit = math.sqrt(6.0 / (fan_in + fan_out))
    return jax.random.uniform(key, shape, jnp.float32, -limit, limit)


def make_params(key, input_size, hidden, output_size):
    H, H2 = hidden, hidden // 2
    ks = jax.random.split(key, 8)
    return dict(
        w_ih1=xavier_uniform(ks[0], (4 * H, input_size)),
        w_hh1=xavier_uniform(ks[1], (4 * H, H)),
        b_ih1=jnp.zeros((4 * H,), jnp.float32),
        b_hh1=jnp.zeros((4 * H,), jnp.float32),
        w_ih2=xavier_uniform(ks[2], (4 * H, H)),
        w_hh2=xavier_uniform(ks[3], (4 * H, H)),
        b_ih2=jnp.zeros((4 * H,), jnp.float32),
        b_hh2=jnp.zeros((4 * H,), jnp.float32),
        wa1=xavier_uniform(ks[4], (H2, H)),
        ba1=jnp.zeros((H2,), jnp.float32),
        wa2=xavier_uniform(ks[5], (1, H2)),
        ba2=jnp.zeros((1,), jnp.float32),
        wf1=xavier_uniform(ks[6], (H2, H)),
        bf1=jnp.zeros((H2,), jnp.float32),
        wf2=xavier_uniform(ks[7], (output_size, H2)),
        bf2=jnp.zeros((output_size,), jnp.float32),
    )


if __name__ == "__main__":
    # B=8 (sublane-aligned), H=128 (lane-aligned gate slices), T=8, input_size=3, OUT=1
    B, T, INPUT, HIDDEN, OUT = 8, 8, 3, 128, 1

    key = jax.random.PRNGKey(0)
    k_x, k_p = jax.random.split(key)
    x = jax.random.normal(k_x, (B, T, INPUT), jnp.float32)
    params = make_params(k_p, INPUT, HIDDEN, OUT)

    packed = pack_params(params)                      # one-time kernel-layout packing
    fwd = jax.jit(forward, static_argnames=("out_size",))
    y = jax.block_until_ready(fwd(x, packed, out_size=OUT))

    y_ref = jax.block_until_ready(forward_ref(x, params))
    max_err = float(jnp.max(jnp.abs(y - y_ref)))
    # f32 reference; bf16 MXU operands loosen the bound (T=8 keeps drift small).
    tol = 1e-3 if MATMUL_DTYPE == jnp.float32 else 1e-2
    assert y.shape == (B,), y.shape
    assert max_err < tol, f"mismatch vs reference: {max_err}"

    print("KERNEL_OK")
</pallas_src>

<mosaic_0001>
module attributes {stable_mosaic.version = 11 : i64} {
  func.func @fused_kernel(%arg0: memref<64x3xbf16, #tpu.memory_space<vmem>>, %arg1: memref<3x512xbf16, #tpu.memory_space<vmem>>, %arg2: memref<128x512xbf16, #tpu.memory_space<vmem>>, %arg3: memref<1x512xf32, #tpu.memory_space<vmem>>, %arg4: memref<256x512xbf16, #tpu.memory_space<any>>, %arg5: memref<1x512xf32, #tpu.memory_space<vmem>>, %arg6: memref<128x64xbf16, #tpu.memory_space<vmem>>, %arg7: memref<1x64xf32, #tpu.memory_space<vmem>>, %arg8: memref<1x64xf32, #tpu.memory_space<vmem>>, %arg9: memref<1x1xf32, #tpu.memory_space<vmem>>, %arg10: memref<128x64xbf16, #tpu.memory_space<vmem>>, %arg11: memref<1x64xf32, #tpu.memory_space<vmem>>, %arg12: memref<1x64xf32, #tpu.memory_space<vmem>>, %arg13: memref<1x1xf32, #tpu.memory_space<vmem>>, %arg14: memref<8x128xf32, #tpu.memory_space<vmem>>, %arg15: memref<8x8x128xf32, #tpu.memory_space<vmem>>, %arg16: memref<256x512xbf16, #tpu.memory_space<vmem>>, %arg17: memref<!tpu.dma_semaphore, #tpu.memory_space<semaphore_mem>>) attributes {dimension_semantics = [], scalar_prefetch = 0 : i64, scratch_operands = 3 : i64, tpu.core_type = #tpu.core_type<tc>} {
    tpu.enqueue_dma source(%arg4 : memref<256x512xbf16, #tpu.memory_space<any>>) target(%arg16 : memref<256x512xbf16, #tpu.memory_space<vmem>>) target_semaphore(%arg17 : memref<!tpu.dma_semaphore, #tpu.memory_space<semaphore_mem>>)
    %c0 = arith.constant 0 : index
    %c0_0 = arith.constant 0 : index
    %0 = vector.load %arg0[%c0, %c0_0] : memref<64x3xbf16, #tpu.memory_space<vmem>>, vector<64x3xbf16>
    %c0_1 = arith.constant 0 : index
    %c0_2 = arith.constant 0 : index
    %1 = vector.load %arg1[%c0_1, %c0_2] : memref<3x512xbf16, #tpu.memory_space<vmem>>, vector<3x512xbf16>
    %cst = arith.constant dense<0.000000e+00> : vector<64x512xf32>
    %2 = tpu.matmul %0, %1, %cst {dimension_numbers = #tpu.dot_dimension_numbers<[1], [0], [0], [1], [0, 0, 1, 1], [], []>} : vector<64x3xbf16>, vector<3x512xbf16>, vector<64x512xf32> -> vector<64x512xf32>
    %c0_3 = arith.constant 0 : index
    %c0_4 = arith.constant 0 : index
    %3 = vector.load %arg3[%c0_3, %c0_4] : memref<1x512xf32, #tpu.memory_space<vmem>>, vector<1x512xf32>
    %4 = vector.broadcast %3 : vector<1x512xf32> to vector<64x512xf32>
    %5 = arith.addf %2, %4 : vector<64x512xf32>
    %6 = vector.shape_cast %5 : vector<64x512xf32> to vector<8x8x512xf32>
    %c0_5 = arith.constant 0 : index
    %c0_6 = arith.constant 0 : index
    %7 = vector.load %arg2[%c0_5, %c0_6] : memref<128x512xbf16, #tpu.memory_space<vmem>>, vector<128x512xbf16>
    %8 = vector.extract_strided_slice %6 {offsets = [0, 0, 0], sizes = [1, 8, 512], strides = [1, 1, 1]} : vector<8x8x512xf32> to vector<1x8x512xf32>
    %9 = vector.shape_cast %8 : vector<1x8x512xf32> to vector<8x512xf32>
    %cst_7 = arith.constant 0.000000e+00 : f32
    %10 = vector.broadcast %cst_7 : f32 to vector<8x128xf32>
    %11 = vector.extract_strided_slice %9 {offsets = [0, 0], sizes = [8, 256], strides = [1, 1]} : vector<8x512xf32> to vector<8x256xf32>
    %12 = arith.negf %11 : vector<8x256xf32>
    %13 = math.exp %12 : vector<8x256xf32>
    %cst_8 = arith.constant 1.000000e+00 : f32
    %14 = vector.broadcast %cst_8 : f32 to vector<8x256xf32>
    %15 = arith.addf %14, %13 : vector<8x256xf32>
    %16 = arith.divf %14, %15 : vector<8x256xf32>
    %17 = vector.extract_strided_slice %16 {offsets = [0, 0], sizes = [8, 128], strides = [1, 1]} : vector<8x256xf32> to vector<8x128xf32>
    %18 = vector.extract_strided_slice %16 {offsets = [0, 128], sizes = [8, 128], strides = [1, 1]} : vector<8x256xf32> to vector<8x128xf32>
    %19 = vector.extract_strided_slice %9 {offsets = [0, 256], sizes = [8, 128], strides = [1, 1]} : vector<8x512xf32> to vector<8x128xf32>
    %20 = math.tanh %19 : vector<8x128xf32>
    %21 = vector.extract_strided_slice %9 {offsets = [0, 384], sizes = [8, 128], strides = [1, 1]} : vector<8x512xf32> to vector<8x128xf32>
    %22 = arith.negf %21 : vector<8x128xf32>
    %23 = math.exp %22 : vector<8x128xf32>
    %cst_9 = arith.constant 1.000000e+00 : f32
    %24 = vector.broadcast %cst_9 : f32 to vector<8x128xf32>
    %25 = arith.addf %24, %23 : vector<8x128xf32>
    %26 = arith.divf %24, %25 : vector<8x128xf32>
    %27 = arith.mulf %18, %10 : vector<8x128xf32>
    %28 = arith.mulf %17, %20 : vector<8x128xf32>
    %29 = arith.addf %27, %28 : vector<8x128xf32>
    %30 = math.tanh %29 : vector<8x128xf32>
    %31 = arith.mulf %26, %30 : vector<8x128xf32>
    %cst_10 = arith.constant 0.000000e+00 : f32
    %32 = vector.broadcast %cst_10 : f32 to vector<8x128xf32>
    %cst_11 = arith.constant 0.000000e+00 : f32
    %33 = vector.broadcast %cst_11 : f32 to vector<8x128xf32>
    tpu.wait_dma2 semaphore(%arg17 : memref<!tpu.dma_semaphore, #tpu.memory_space<semaphore_mem>>) src(%arg4 : memref<256x512xbf16, #tpu.memory_space<any>>) dst(%arg16 : memref<256x512xbf16, #tpu.memory_space<vmem>>)
    %c0_12 = arith.constant 0 : index
    %c0_13 = arith.constant 0 : index
    %34 = vector.load %arg16[%c0_12, %c0_13] : memref<256x512xbf16, #tpu.memory_space<vmem>>, vector<256x512xbf16>
    %c0_14 = arith.constant 0 : index
    %c0_15 = arith.constant 0 : index
    %35 = vector.load %arg5[%c0_14, %c0_15] : memref<1x512xf32, #tpu.memory_space<vmem>>, vector<1x512xf32>
    %36 = tpu.concatenate %31, %32 in 1 : vector<8x128xf32>, vector<8x128xf32> -> vector<8x256xf32>
    %37 = arith.truncf %36 : vector<8x256xf32> to vector<8x256xbf16>
    %cst_16 = arith.constant dense<0.000000e+00> : vector<8x512xf32>
    %38 = tpu.matmul %37, %34, %cst_16 {dimension_numbers = #tpu.dot_dimension_numbers<[1], [0], [0], [1], [0, 0, 1, 1], [], []>} : vector<8x256xbf16>, vector<256x512xbf16>, vector<8x512xf32> -> vector<8x512xf32>
    %39 = vector.broadcast %35 : vector<1x512xf32> to vector<8x512xf32>
    %40 = arith.addf %38, %39 : vector<8x512xf32>
    %41 = vector.extract_strided_slice %6 {offsets = [1, 0, 0], sizes = [1, 8, 512], strides = [1, 1, 1]} : vector<8x8x512xf32> to vector<1x8x512xf32>
    %42 = vector.shape_cast %41 : vector<1x8x512xf32> to vector<8x512xf32>
    %43 = arith.truncf %31 : vector<8x128xf32> to vector<8x128xbf16>
    %cst_17 = arith.constant dense<0.000000e+00> : vector<8x512xf32>
    %44 = tpu.matmul %43, %7, %cst_17 {dimension_numbers = #tpu.dot_dimension_numbers<[1], [0], [0], [1], [0, 0, 1, 1], [], []>} : vector<8x128xbf16>, vector<128x512xbf16>, vector<8x512xf32> -> vector<8x512xf32>
    %45 = arith.addf %42, %44 : vector<8x512xf32>
    %46 = vector.extract_strided_slice %40 {offsets = [0, 0], sizes = [8, 256], strides = [1, 1]} : vector<8x512xf32> to vector<8x256xf32>
    %47 = arith.negf %46 : vector<8x256xf32>
    %48 = math.exp %47 : vector<8x256xf32>
    %cst_18 = arith.constant 1.000000e+00 : f32
    %49 = vector.broadcast %cst_18 : f32 to vector<8x256xf32>
    %50 = arith.addf %49, %48 : vector<8x256xf32>
    %51 = arith.divf %49, %50 : vector<8x256xf32>
    %52 = vector.extract_strided_slice %51 {offsets = [0, 0], sizes = [8, 128], strides = [1, 1]} : vector<8x256xf32> to vector<8x128xf32>
    %53 = vector.extract_strided_slice %51 {offsets = [0, 128], sizes = [8, 128], strides = [1, 1]} : vector<8x256xf32> to vector<8x128xf32>
    %54 = vector.extract_strided_slice %40 {offsets = [0, 256], sizes = [8, 128], strides = [1, 1]} : vector<8x512xf32> to vector<8x128xf32>
    %55 = math.tanh %54 : vector<8x128xf32>
    %56 = vector.extract_strided_slice %40 {offsets = [0, 384], sizes = [8, 128], strides = [1, 1]} : vector<8x512xf32> to vector<8x128xf32>
    %57 = arith.negf %56 : vector<8x128xf32>
    %58 = math.exp %57 : vector<8x128xf32>
    %cst_19 = arith.constant 1.000000e+00 : f32
    %59 = vector.broadcast %cst_19 : f32 to vector<8x128xf32>
    %60 = arith.addf %59, %58 : vector<8x128xf32>
    %61 = arith.divf %59, %60 : vector<8x128xf32>
    %62 = arith.mulf %53, %33 : vector<8x128xf32>
    %63 = arith.mulf %52, %55 : vector<8x128xf32>
    %64 = arith.addf %62, %63 : vector<8x128xf32>
    %65 = math.tanh %64 : vector<8x128xf32>
    %66 = arith.mulf %61, %65 : vector<8x128xf32>
    %c0_20 = arith.constant 0 : index
    %c0_21 = arith.constant 0 : index
    %c0_22 = arith.constant 0 : index
    %67 = vector.load %arg15[%c0_20, %c0_21, %c0_22] : memref<8x8x128xf32, #tpu.memory_space<vmem>>, vector<1x8x128xf32>
    %68 = vector.shape_cast %67 : vector<1x8x128xf32> to vector<8x128xf32>
    %69 = vector.shape_cast %66 : vector<8x128xf32> to vector<1x8x128xf32>
    tpu.vector_store %arg15[%c0_20, %c0_21, %c0_22], %69 {strides = array<i32>} : memref<8x8x128xf32, #tpu.memory_space<vmem>>, vector<1x8x128xf32>,
    %70 = vector.extract_strided_slice %45 {offsets = [0, 0], sizes = [8, 256], strides = [1, 1]} : vector<8x512xf32> to vector<8x256xf32>
    %71 = arith.negf %70 : vector<8x256xf32>
    %72 = math.exp %71 : vector<8x256xf32>
    %cst_23 = arith.constant 1.000000e+00 : f32
    %73 = vector.broadcast %cst_23 : f32 to vector<8x256xf32>
    %74 = arith.addf %73, %72 : vector<8x256xf32>
    %75 = arith.divf %73, %74 : vector<8x256xf32>
    %76 = vector.extract_strided_slice %75 {offsets = [0, 0], sizes = [8, 128], strides = [1, 1]} : vector<8x256xf32> to vector<8x128xf32>
    %77 = vector.extract_strided_slice %75 {offsets = [0, 128], sizes = [8, 128], strides = [1, 1]} : vector<8x256xf32> to vector<8x128xf32>
    %78 = vector.extract_strided_slice %45 {offsets = [0, 256], sizes = [8, 128], strides = [1, 1]} : vector<8x512xf32> to vector<8x128xf32>
    %79 = math.tanh %78 : vector<8x128xf32>
    %80 = vector.extract_strided_slice %45 {offsets = [0, 384], sizes = [8, 128], strides = [1, 1]} : vector<8x512xf32> to vector<8x128xf32>
    %81 = arith.negf %80 : vector<8x128xf32>
    %82 = math.exp %81 : vector<8x128xf32>
    %cst_24 = arith.constant 1.000000e+00 : f32
    %83 = vector.broadcast %cst_24 : f32 to vector<8x128xf32>
    %84 = arith.addf %83, %82 : vector<8x128xf32>
    %85 = arith.divf %83, %84 : vector<8x128xf32>
    %86 = arith.mulf %77, %29 : vector<8x128xf32>
    %87 = arith.mulf %76, %79 : vector<8x128xf32>
    %88 = arith.addf %86, %87 : vector<8x128xf32>
    %89 = math.tanh %88 : vector<8x128xf32>
    %90 = arith.mulf %85, %89 : vector<8x128xf32>
    %91 = tpu.concatenate %90, %66 in 1 : vector<8x128xf32>, vector<8x128xf32> -> vector<8x256xf32>
    %92 = arith.truncf %91 : vector<8x256xf32> to vector<8x256xbf16>
    %cst_25 = arith.constant dense<0.000000e+00> : vector<8x512xf32>
    %93 = tpu.matmul %92, %34, %cst_25 {dimension_numbers = #tpu.dot_dimension_numbers<[1], [0], [0], [1], [0, 0, 1, 1], [], []>} : vector<8x256xbf16>, vector<256x512xbf16>, vector<8x512xf32> -> vector<8x512xf32>
    %94 = vector.broadcast %35 : vector<1x512xf32> to vector<8x512xf32>
    %95 = arith.addf %93, %94 : vector<8x512xf32>
    %96 = vector.extract_strided_slice %6 {offsets = [2, 0, 0], sizes = [1, 8, 512], strides = [1, 1, 1]} : vector<8x8x512xf32> to vector<1x8x512xf32>
    %97 = vector.shape_cast %96 : vector<1x8x512xf32> to vector<8x512xf32>
    %98 = arith.truncf %90 : vector<8x128xf32> to vector<8x128xbf16>
    %cst_26 = arith.constant dense<0.000000e+00> : vector<8x512xf32>
    %99 = tpu.matmul %98, %7, %cst_26 {dimension_numbers = #tpu.dot_dimension_numbers<[1], [0], [0], [1], [0, 0, 1, 1], [], []>} : vector<8x128xbf16>, vector<128x512xbf16>, vector<8x512xf32> -> vector<8x512xf32>
    %100 = arith.addf %97, %99 : vector<8x512xf32>
    %101 = vector.extract_strided_slice %95 {offsets = [0, 0], sizes = [8, 256], strides = [1, 1]} : vector<8x512xf32> to vector<8x256xf32>
    %102 = arith.negf %101 : vector<8x256xf32>
    %103 = math.exp %102 : vector<8x256xf32>
    %cst_27 = arith.constant 1.000000e+00 : f32
    %104 = vector.broadcast %cst_27 : f32 to vector<8x256xf32>
    %105 = arith.addf %104, %103 : vector<8x256xf32>
    %106 = arith.divf %104, %105 : vector<8x256xf32>
    %107 = vector.extract_strided_slice %106 {offsets = [0, 0], sizes = [8, 128], strides = [1, 1]} : vector<8x256xf32> to vector<8x128xf32>
    %108 = vector.extract_strided_slice %106 {offsets = [0, 128], sizes = [8, 128], strides = [1, 1]} : vector<8x256xf32> to vector<8x128xf32>
    %109 = vector.extract_strided_slice %95 {offsets = [0, 256], sizes = [8, 128], strides = [1, 1]} : vector<8x512xf32> to vector<8x128xf32>
    %110 = math.tanh %109 : vector<8x128xf32>
    %111 = vector.extract_strided_slice %95 {offsets = [0, 384], sizes = [8, 128], strides = [1, 1]} : vector<8x512xf32> to vector<8x128xf32>
    %112 = arith.negf %111 : vector<8x128xf32>
    %113 = math.exp %112 : vector<8x128xf32>
    %cst_28 = arith.constant 1.000000e+00 : f32
    %114 = vector.broadcast %cst_28 : f32 to vector<8x128xf32>
    %115 = arith.addf %114, %113 : vector<8x128xf32>
    %116 = arith.divf %114, %115 : vector<8x128xf32>
    %117 = arith.mulf %108, %64 : vector<8x128xf32>
    %118 = arith.mulf %107, %110 : vector<8x128xf32>
    %119 = arith.addf %117, %118 : vector<8x128xf32>
    %120 = math.tanh %119 : vector<8x128xf32>
    %121 = arith.mulf %116, %120 : vector<8x128xf32>
    %c1 = arith.constant 1 : index
    %c0_29 = arith.constant 0 : index
    %c0_30 = arith.constant 0 : index
    %122 = vector.load %arg15[%c1, %c0_29, %c0_30] : memref<8x8x128xf32, #tpu.memory_space<vmem>>, vector<1x8x128xf32>
    %123 = vector.shape_cast %122 : vector<1x8x128xf32> to vector<8x128xf32>
    %124 = vector.shape_cast %121 : vector<8x128xf32> to vector<1x8x128xf32>
    tpu.vector_store %arg15[%c1, %c0_29, %c0_30], %124 {strides = array<i32>} : memref<8x8x128xf32, #tpu.memory_space<vmem>>, vector<1x8x128xf32>,
    %125 = vector.extract_strided_slice %100 {offsets = [0, 0], sizes = [8, 256], strides = [1, 1]} : vector<8x512xf32> to vector<8x256xf32>
    %126 = arith.negf %125 : vector<8x256xf32>
    %127 = math.exp %126 : vector<8x256xf32>
    %cst_31 = arith.constant 1.000000e+00 : f32
    %128 = vector.broadcast %cst_31 : f32 to vector<8x256xf32>
    %129 = arith.addf %128, %127 : vector<8x256xf32>
    %130 = arith.divf %128, %129 : vector<8x256xf32>
    %131 = vector.extract_strided_slice %130 {offsets = [0, 0], sizes = [8, 128], strides = [1, 1]} : vector<8x256xf32> to vector<8x128xf32>
    %132 = vector.extract_strided_slice %130 {offsets = [0, 128], sizes = [8, 128], strides = [1, 1]} : vector<8x256xf32> to vector<8x128xf32>
    %133 = vector.extract_strided_slice %100 {offsets = [0, 256], sizes = [8, 128], strides = [1, 1]} : vector<8x512xf32> to vector<8x128xf32>
    %134 = math.tanh %133 : vector<8x128xf32>
    %135 = vector.extract_strided_slice %100 {offsets = [0, 384], sizes = [8, 128], strides = [1, 1]} : vector<8x512xf32> to vector<8x128xf32>
    %136 = arith.negf %135 : vector<8x128xf32>
    %137 = math.exp %136 : vector<8x128xf32>
    %cst_32 = arith.constant 1.000000e+00 : f32
    %138 = vector.broadcast %cst_32 : f32 to vector<8x128xf32>
    %139 = arith.addf %138, %137 : vector<8x128xf32>
    %140 = arith.divf %138, %139 : vector<8x128xf32>
    %141 = arith.mulf %132, %88 : vector<8x128xf32>
    %142 = arith.mulf %131, %134 : vector<8x128xf32>
    %143 = arith.addf %141, %142 : vector<8x128xf32>
    %144 = math.tanh %143 : vector<8x128xf32>
    %145 = arith.mulf %140, %144 : vector<8x128xf32>
    %146 = tpu.concatenate %145, %121 in 1 : vector<8x128xf32>, vector<8x128xf32> -> vector<8x256xf32>
    %147 = arith.truncf %146 : vector<8x256xf32> to vector<8x256xbf16>
    %cst_33 = arith.constant dense<0.000000e+00> : vector<8x512xf32>
    %148 = tpu.matmul %147, %34, %cst_33 {dimension_numbers = #tpu.dot_dimension_numbers<[1], [0], [0], [1], [0, 0, 1, 1], [], []>} : vector<8x256xbf16>, vector<256x512xbf16>, vector<8x512xf32> -> vector<8x512xf32>
    %149 = vector.broadcast %35 : vector<1x512xf32> to vector<8x512xf32>
    %150 = arith.addf %148, %149 : vector<8x512xf32>
    %151 = vector.extract_strided_slice %6 {offsets = [3, 0, 0], sizes = [1, 8, 512], strides = [1, 1, 1]} : vector<8x8x512xf32> to vector<1x8x512xf32>
    %152 = vector.shape_cast %151 : vector<1x8x512xf32> to vector<8x512xf32>
    %153 = arith.truncf %145 : vector<8x128xf32> to vector<8x128xbf16>
    %cst_34 = arith.constant dense<0.000000e+00> : vector<8x512xf32>
    %154 = tpu.matmul %153, %7, %cst_34 {dimension_numbers = #tpu.dot_dimension_numbers<[1], [0], [0], [1], [0, 0, 1, 1], [], []>} : vector<8x128xbf16>, vector<128x512xbf16>, vector<8x512xf32> -> vector<8x512xf32>
    %155 = arith.addf %152, %154 : vector<8x512xf32>
    %156 = vector.extract_strided_slice %150 {offsets = [0, 0], sizes = [8, 256], strides = [1, 1]} : vector<8x512xf32> to vector<8x256xf32>
    %157 = arith.negf %156 : vector<8x256xf32>
    %158 = math.exp %157 : vector<8x256xf32>
    %cst_35 = arith.constant 1.000000e+00 : f32
    %159 = vector.broadcast %cst_35 : f32 to vector<8x256xf32>
    %160 = arith.addf %159, %158 : vector<8x256xf32>
    %161 = arith.divf %159, %160 : vector<8x256xf32>
    %162 = vector.extract_strided_slice %161 {offsets = [0, 0], sizes = [8, 128], strides = [1, 1]} : vector<8x256xf32> to vector<8x128xf32>
    %163 = vector.extract_strided_slice %161 {offsets = [0, 128], sizes = [8, 128], strides = [1, 1]} : vector<8x256xf32> to vector<8x128xf32>
    %164 = vector.extract_strided_slice %150 {offsets = [0, 256], sizes = [8, 128], strides = [1, 1]} : vector<8x512xf32> to vector<8x128xf32>
    %165 = math.tanh %164 : vector<8x128xf32>
    %166 = vector.extract_strided_slice %150 {offsets = [0, 384], sizes = [8, 128], strides = [1, 1]} : vector<8x512xf32> to vector<8x128xf32>
    %167 = arith.negf %166 : vector<8x128xf32>
    %168 = math.exp %167 : vector<8x128xf32>
    %cst_36 = arith.constant 1.000000e+00 : f32
    %169 = vector.broadcast %cst_36 : f32 to vector<8x128xf32>
    %170 = arith.addf %169, %168 : vector<8x128xf32>
    %171 = arith.divf %169, %170 : vector<8x128xf32>
    %172 = arith.mulf %163, %119 : vector<8x128xf32>
    %173 = arith.mulf %162, %165 : vector<8x128xf32>
    %174 = arith.addf %172, %173 : vector<8x128xf32>
    %175 = math.tanh %174 : vector<8x128xf32>
    %176 = arith.mulf %171, %175 : vector<8x128xf32>
    %c2 = arith.constant 2 : index
    %c0_37 = arith.constant 0 : index
    %c0_38 = arith.constant 0 : index
    %177 = vector.load %arg15[%c2, %c0_37, %c0_38] : memref<8x8x128xf32, #tpu.memory_space<vmem>>, vector<1x8x128xf32>
    %178 = vector.shape_cast %177 : vector<1x8x128xf32> to vector<8x128xf32>
    %179 = vector.shape_cast %176 : vector<8x128xf32> to vector<1x8x128xf32>
    tpu.vector_store %arg15[%c2, %c0_37, %c0_38], %179 {strides = array<i32>} : memref<8x8x128xf32, #tpu.memory_space<vmem>>, vector<1x8x128xf32>,
    %180 = vector.extract_strided_slice %155 {offsets = [0, 0], sizes = [8, 256], strides = [1, 1]} : vector<8x512xf32> to vector<8x256xf32>
    %181 = arith.negf %180 : vector<8x256xf32>
    %182 = math.exp %181 : vector<8x256xf32>
    %cst_39 = arith.constant 1.000000e+00 : f32
    %183 = vector.broadcast %cst_39 : f32 to vector<8x256xf32>
    %184 = arith.addf %183, %182 : vector<8x256xf32>
    %185 = arith.divf %183, %184 : vector<8x256xf32>
    %186 = vector.extract_strided_slice %185 {offsets = [0, 0], sizes = [8, 128], strides = [1, 1]} : vector<8x256xf32> to vector<8x128xf32>
    %187 = vector.extract_strided_slice %185 {offsets = [0, 128], sizes = [8, 128], strides = [1, 1]} : vector<8x256xf32> to vector<8x128xf32>
    %188 = vector.extract_strided_slice %155 {offsets = [0, 256], sizes = [8, 128], strides = [1, 1]} : vector<8x512xf32> to vector<8x128xf32>
    %189 = math.tanh %188 : vector<8x128xf32>
    %190 = vector.extract_strided_slice %155 {offsets = [0, 384], sizes = [8, 128], strides = [1, 1]} : vector<8x512xf32> to vector<8x128xf32>
    %191 = arith.negf %190 : vector<8x128xf32>
    %192 = math.exp %191 : vector<8x128xf32>
    %cst_40 = arith.constant 1.000000e+00 : f32
    %193 = vector.broadcast %cst_40 : f32 to vector<8x128xf32>
    %194 = arith.addf %193, %192 : vector<8x128xf32>
    %195 = arith.divf %193, %194 : vector<8x128xf32>
    %196 = arith.mulf %187, %143 : vector<8x128xf32>
    %197 = arith.mulf %186, %189 : vector<8x128xf32>
    %198 = arith.addf %196, %197 : vector<8x128xf32>
    %199 = math.tanh %198 : vector<8x128xf32>
    %200 = arith.mulf %195, %199 : vector<8x128xf32>
    %201 = tpu.concatenate %200, %176 in 1 : vector<8x128xf32>, vector<8x128xf32> -> vector<8x256xf32>
    %202 = arith.truncf %201 : vector<8x256xf32> to vector<8x256xbf16>
    %cst_41 = arith.constant dense<0.000000e+00> : vector<8x512xf32>
    %203 = tpu.matmul %202, %34, %cst_41 {dimension_numbers = #tpu.dot_dimension_numbers<[1], [0], [0], [1], [0, 0, 1, 1], [], []>} : vector<8x256xbf16>, vector<256x512xbf16>, vector<8x512xf32> -> vector<8x512xf32>
    %204 = vector.broadcast %35 : vector<1x512xf32> to vector<8x512xf32>
    %205 = arith.addf %203, %204 : vector<8x512xf32>
    %206 = vector.extract_strided_slice %6 {offsets = [4, 0, 0], sizes = [1, 8, 512], strides = [1, 1, 1]} : vector<8x8x512xf32> to vector<1x8x512xf32>
    %207 = vector.shape_cast %206 : vector<1x8x512xf32> to vector<8x512xf32>
    %208 = arith.truncf %200 : vector<8x128xf32> to vector<8x128xbf16>
    %cst_42 = arith.constant dense<0.000000e+00> : vector<8x512xf32>
    %209 = tpu.matmul %208, %7, %cst_42 {dimension_numbers = #tpu.dot_dimension_numbers<[1], [0], [0], [1], [0, 0, 1, 1], [], []>} : vector<8x128xbf16>, vector<128x512xbf16>, vector<8x512xf32> -> vector<8x512xf32>
    %210 = arith.addf %207, %209 : vector<8x512xf32>
    %211 = vector.extract_strided_slice %205 {offsets = [0, 0], sizes = [8, 256], strides = [1, 1]} : vector<8x512xf32> to vector<8x256xf32>
    %212 = arith.negf %211 : vector<8x256xf32>
    %213 = math.exp %212 : vector<8x256xf32>
    %cst_43 = arith.constant 1.000000e+00 : f32
    %214 = vector.broadcast %cst_43 : f32 to vector<8x256xf32>
    %215 = arith.addf %214, %213 : vector<8x256xf32>
    %216 = arith.divf %214, %215 : vector<8x256xf32>
    %217 = vector.extract_strided_slice %216 {offsets = [0, 0], sizes = [8, 128], strides = [1, 1]} : vector<8x256xf32> to vector<8x128xf32>
    %218 = vector.extract_strided_slice %216 {offsets = [0, 128], sizes = [8, 128], strides = [1, 1]} : vector<8x256xf32> to vector<8x128xf32>
    %219 = vector.extract_strided_slice %205 {offsets = [0, 256], sizes = [8, 128], strides = [1, 1]} : vector<8x512xf32> to vector<8x128xf32>
    %220 = math.tanh %219 : vector<8x128xf32>
    %221 = vector.extract_strided_slice %205 {offsets = [0, 384], sizes = [8, 128], strides = [1, 1]} : vector<8x512xf32> to vector<8x128xf32>
    %222 = arith.negf %221 : vector<8x128xf32>
    %223 = math.exp %222 : vector<8x128xf32>
    %cst_44 = arith.constant 1.000000e+00 : f32
    %224 = vector.broadcast %cst_44 : f32 to vector<8x128xf32>
    %225 = arith.addf %224, %223 : vector<8x128xf32>
    %226 = arith.divf %224, %225 : vector<8x128xf32>
    %227 = arith.mulf %218, %174 : vector<8x128xf32>
    %228 = arith.mulf %217, %220 : vector<8x128xf32>
    %229 = arith.addf %227, %228 : vector<8x128xf32>
    %230 = math.tanh %229 : vector<8x128xf32>
    %231 = arith.mulf %226, %230 : vector<8x128xf32>
    %c3 = arith.constant 3 : index
    %c0_45 = arith.constant 0 : index
    %c0_46 = arith.constant 0 : index
    %232 = vector.load %arg15[%c3, %c0_45, %c0_46] : memref<8x8x128xf32, #tpu.memory_space<vmem>>, vector<1x8x128xf32>
    %233 = vector.shape_cast %232 : vector<1x8x128xf32> to vector<8x128xf32>
    %234 = vector.shape_cast %231 : vector<8x128xf32> to vector<1x8x128xf32>
    tpu.vector_store %arg15[%c3, %c0_45, %c0_46], %234 {strides = array<i32>} : memref<8x8x128xf32, #tpu.memory_space<vmem>>, vector<1x8x128xf32>,
    %235 = vector.extract_strided_slice %210 {offsets = [0, 0], sizes = [8, 256], strides = [1, 1]} : vector<8x512xf32> to vector<8x256xf32>
    %236 = arith.negf %235 : vector<8x256xf32>
    %237 = math.exp %236 : vector<8x256xf32>
    %cst_47 = arith.constant 1.000000e+00 : f32
    %238 = vector.broadcast %cst_47 : f32 to vector<8x256xf32>
    %239 = arith.addf %238, %237 : vector<8x256xf32>
    %240 = arith.divf %238, %239 : vector<8x256xf32>
    %241 = vector.extract_strided_slice %240 {offsets = [0, 0], sizes = [8, 128], strides = [1, 1]} : vector<8x256xf32> to vector<8x128xf32>
    %242 = vector.extract_strided_slice %240 {offsets = [0, 128], sizes = [8, 128], strides = [1, 1]} : vector<8x256xf32> to vector<8x128xf32>
    %243 = vector.extract_strided_slice %210 {offsets = [0, 256], sizes = [8, 128], strides = [1, 1]} : vector<8x512xf32> to vector<8x128xf32>
    %244 = math.tanh %243 : vector<8x128xf32>
    %245 = vector.extract_strided_slice %210 {offsets = [0, 384], sizes = [8, 128], strides = [1, 1]} : vector<8x512xf32> to vector<8x128xf32>
    %246 = arith.negf %245 : vector<8x128xf32>
    %247 = math.exp %246 : vector<8x128xf32>
    %cst_48 = arith.constant 1.000000e+00 : f32
    %248 = vector.broadcast %cst_48 : f32 to vector<8x128xf32>
    %249 = arith.addf %248, %247 : vector<8x128xf32>
    %250 = arith.divf %248, %249 : vector<8x128xf32>
    %251 = arith.mulf %242, %198 : vector<8x128xf32>
    %252 = arith.mulf %241, %244 : vector<8x128xf32>
    %253 = arith.addf %251, %252 : vector<8x128xf32>
    %254 = math.tanh %253 : vector<8x128xf32>
    %255 = arith.mulf %250, %254 : vector<8x128xf32>
    %256 = tpu.concatenate %255, %231 in 1 : vector<8x128xf32>, vector<8x128xf32> -> vector<8x256xf32>
    %257 = arith.truncf %256 : vector<8x256xf32> to vector<8x256xbf16>
    %cst_49 = arith.constant dense<0.000000e+00> : vector<8x512xf32>
    %258 = tpu.matmul %257, %34, %cst_49 {dimension_numbers = #tpu.dot_dimension_numbers<[1], [0], [0], [1], [0, 0, 1, 1], [], []>} : vector<8x256xbf16>, vector<256x512xbf16>, vector<8x512xf32> -> vector<8x512xf32>
    %259 = vector.broadcast %35 : vector<1x512xf32> to vector<8x512xf32>
    %260 = arith.addf %258, %259 : vector<8x512xf32>
    %261 = vector.extract_strided_slice %6 {offsets = [5, 0, 0], sizes = [1, 8, 512], strides = [1, 1, 1]} : vector<8x8x512xf32> to vector<1x8x512xf32>
    %262 = vector.shape_cast %261 : vector<1x8x512xf32> to vector<8x512xf32>
    %263 = arith.truncf %255 : vector<8x128xf32> to vector<8x128xbf16>
    %cst_50 = arith.constant dense<0.000000e+00> : vector<8x512xf32>
    %264 = tpu.matmul %263, %7, %cst_50 {dimension_numbers = #tpu.dot_dimension_numbers<[1], [0], [0], [1], [0, 0, 1, 1], [], []>} : vector<8x128xbf16>, vector<128x512xbf16>, vector<8x512xf32> -> vector<8x512xf32>
    %265 = arith.addf %262, %264 : vector<8x512xf32>
    %266 = vector.extract_strided_slice %260 {offsets = [0, 0], sizes = [8, 256], strides = [1, 1]} : vector<8x512xf32> to vector<8x256xf32>
    %267 = arith.negf %266 : vector<8x256xf32>
    %268 = math.exp %267 : vector<8x256xf32>
    %cst_51 = arith.constant 1.000000e+00 : f32
    %269 = vector.broadcast %cst_51 : f32 to vector<8x256xf32>
    %270 = arith.addf %269, %268 : vector<8x256xf32>
    %271 = arith.divf %269, %270 : vector<8x256xf32>
    %272 = vector.extract_strided_slice %271 {offsets = [0, 0], sizes = [8, 128], strides = [1, 1]} : vector<8x256xf32> to vector<8x128xf32>
    %273 = vector.extract_strided_slice %271 {offsets = [0, 128], sizes = [8, 128], strides = [1, 1]} : vector<8x256xf32> to vector<8x128xf32>
    %274 = vector.extract_strided_slice %260 {offsets = [0, 256], sizes = [8, 128], strides = [1, 1]} : vector<8x512xf32> to vector<8x128xf32>
    %275 = math.tanh %274 : vector<8x128xf32>
    %276 = vector.extract_strided_slice %260 {offsets = [0, 384], sizes = [8, 128], strides = [1, 1]} : vector<8x512xf32> to vector<8x128xf32>
    %277 = arith.negf %276 : vector<8x128xf32>
    %278 = math.exp %277 : vector<8x128xf32>
    %cst_52 = arith.constant 1.000000e+00 : f32
    %279 = vector.broadcast %cst_52 : f32 to vector<8x128xf32>
    %280 = arith.addf %279, %278 : vector<8x128xf32>
    %281 = arith.divf %279, %280 : vector<8x128xf32>
    %282 = arith.mulf %273, %229 : vector<8x128xf32>
    %283 = arith.mulf %272, %275 : vector<8x128xf32>
    %284 = arith.addf %282, %283 : vector<8x128xf32>
    %285 = math.tanh %284 : vector<8x128xf32>
    %286 = arith.mulf %281, %285 : vector<8x128xf32>
    %c4 = arith.constant 4 : index
    %c0_53 = arith.constant 0 : index
    %c0_54 = arith.constant 0 : index
    %287 = vector.load %arg15[%c4, %c0_53, %c0_54] : memref<8x8x128xf32, #tpu.memory_space<vmem>>, vector<1x8x128xf32>
    %288 = vector.shape_cast %287 : vector<1x8x128xf32> to vector<8x128xf32>
    %289 = vector.shape_cast %286 : vector<8x128xf32> to vector<1x8x128xf32>
    tpu.vector_store %arg15[%c4, %c0_53, %c0_54], %289 {strides = array<i32>} : memref<8x8x128xf32, #tpu.memory_space<vmem>>, vector<1x8x128xf32>,
    %290 = vector.extract_strided_slice %265 {offsets = [0, 0], sizes = [8, 256], strides = [1, 1]} : vector<8x512xf32> to vector<8x256xf32>
    %291 = arith.negf %290 : vector<8x256xf32>
    %292 = math.exp %291 : vector<8x256xf32>
    %cst_55 = arith.constant 1.000000e+00 : f32
    %293 = vector.broadcast %cst_55 : f32 to vector<8x256xf32>
    %294 = arith.addf %293, %292 : vector<8x256xf32>
    %295 = arith.divf %293, %294 : vector<8x256xf32>
    %296 = vector.extract_strided_slice %295 {offsets = [0, 0], sizes = [8, 128], strides = [1, 1]} : vector<8x256xf32> to vector<8x128xf32>
    %297 = vector.extract_strided_slice %295 {offsets = [0, 128], sizes = [8, 128], strides = [1, 1]} : vector<8x256xf32> to vector<8x128xf32>
    %298 = vector.extract_strided_slice %265 {offsets = [0, 256], sizes = [8, 128], strides = [1, 1]} : vector<8x512xf32> to vector<8x128xf32>
    %299 = math.tanh %298 : vector<8x128xf32>
    %300 = vector.extract_strided_slice %265 {offsets = [0, 384], sizes = [8, 128], strides = [1, 1]} : vector<8x512xf32> to vector<8x128xf32>
    %301 = arith.negf %300 : vector<8x128xf32>
    %302 = math.exp %301 : vector<8x128xf32>
    %cst_56 = arith.constant 1.000000e+00 : f32
    %303 = vector.broadcast %cst_56 : f32 to vector<8x128xf32>
    %304 = arith.addf %303, %302 : vector<8x128xf32>
    %305 = arith.divf %303, %304 : vector<8x128xf32>
    %306 = arith.mulf %297, %253 : vector<8x128xf32>
    %307 = arith.mulf %296, %299 : vector<8x128xf32>
    %308 = arith.addf %306, %307 : vector<8x128xf32>
    %309 = math.tanh %308 : vector<8x128xf32>
    %310 = arith.mulf %305, %309 : vector<8x128xf32>
    %311 = tpu.concatenate %310, %286 in 1 : vector<8x128xf32>, vector<8x128xf32> -> vector<8x256xf32>
    %312 = arith.truncf %311 : vector<8x256xf32> to vector<8x256xbf16>
    %cst_57 = arith.constant dense<0.000000e+00> : vector<8x512xf32>
    %313 = tpu.matmul %312, %34, %cst_57 {dimension_numbers = #tpu.dot_dimension_numbers<[1], [0], [0], [1], [0, 0, 1, 1], [], []>} : vector<8x256xbf16>, vector<256x512xbf16>, vector<8x512xf32> -> vector<8x512xf32>
    %314 = vector.broadcast %35 : vector<1x512xf32> to vector<8x512xf32>
    %315 = arith.addf %313, %314 : vector<8x512xf32>
    %316 = vector.extract_strided_slice %6 {offsets = [6, 0, 0], sizes = [1, 8, 512], strides = [1, 1, 1]} : vector<8x8x512xf32> to vector<1x8x512xf32>
    %317 = vector.shape_cast %316 : vector<1x8x512xf32> to vector<8x512xf32>
    %318 = arith.truncf %310 : vector<8x128xf32> to vector<8x128xbf16>
    %cst_58 = arith.constant dense<0.000000e+00> : vector<8x512xf32>
    %319 = tpu.matmul %318, %7, %cst_58 {dimension_numbers = #tpu.dot_dimension_numbers<[1], [0], [0], [1], [0, 0, 1, 1], [], []>} : vector<8x128xbf16>, vector<128x512xbf16>, vector<8x512xf32> -> vector<8x512xf32>
    %320 = arith.addf %317, %319 : vector<8x512xf32>
    %321 = vector.extract_strided_slice %315 {offsets = [0, 0], sizes = [8, 256], strides = [1, 1]} : vector<8x512xf32> to vector<8x256xf32>
    %322 = arith.negf %321 : vector<8x256xf32>
    %323 = math.exp %322 : vector<8x256xf32>
    %cst_59 = arith.constant 1.000000e+00 : f32
    %324 = vector.broadcast %cst_59 : f32 to vector<8x256xf32>
    %325 = arith.addf %324, %323 : vector<8x256xf32>
    %326 = arith.divf %324, %325 : vector<8x256xf32>
    %327 = vector.extract_strided_slice %326 {offsets = [0, 0], sizes = [8, 128], strides = [1, 1]} : vector<8x256xf32> to vector<8x128xf32>
    %328 = vector.extract_strided_slice %326 {offsets = [0, 128], sizes = [8, 128], strides = [1, 1]} : vector<8x256xf32> to vector<8x128xf32>
    %329 = vector.extract_strided_slice %315 {offsets = [0, 256], sizes = [8, 128], strides = [1, 1]} : vector<8x512xf32> to vector<8x128xf32>
    %330 = math.tanh %329 : vector<8x128xf32>
    %331 = vector.extract_strided_slice %315 {offsets = [0, 384], sizes = [8, 128], strides = [1, 1]} : vector<8x512xf32> to vector<8x128xf32>
    %332 = arith.negf %331 : vector<8x128xf32>
    %333 = math.exp %332 : vector<8x128xf32>
    %cst_60 = arith.constant 1.000000e+00 : f32
    %334 = vector.broadcast %cst_60 : f32 to vector<8x128xf32>
    %335 = arith.addf %334, %333 : vector<8x128xf32>
    %336 = arith.divf %334, %335 : vector<8x128xf32>
    %337 = arith.mulf %328, %284 : vector<8x128xf32>
    %338 = arith.mulf %327, %330 : vector<8x128xf32>
    %339 = arith.addf %337, %338 : vector<8x128xf32>
    %340 = math.tanh %339 : vector<8x128xf32>
    %341 = arith.mulf %336, %340 : vector<8x128xf32>
    %c5 = arith.constant 5 : index
    %c0_61 = arith.constant 0 : index
    %c0_62 = arith.constant 0 : index
    %342 = vector.load %arg15[%c5, %c0_61, %c0_62] : memref<8x8x128xf32, #tpu.memory_space<vmem>>, vector<1x8x128xf32>
    %343 = vector.shape_cast %342 : vector<1x8x128xf32> to vector<8x128xf32>
    %344 = vector.shape_cast %341 : vector<8x128xf32> to vector<1x8x128xf32>
    tpu.vector_store %arg15[%c5, %c0_61, %c0_62], %344 {strides = array<i32>} : memref<8x8x128xf32, #tpu.memory_space<vmem>>, vector<1x8x128xf32>,
    %345 = vector.extract_strided_slice %320 {offsets = [0, 0], sizes = [8, 256], strides = [1, 1]} : vector<8x512xf32> to vector<8x256xf32>
    %346 = arith.negf %345 : vector<8x256xf32>
    %347 = math.exp %346 : vector<8x256xf32>
    %cst_63 = arith.constant 1.000000e+00 : f32
    %348 = vector.broadcast %cst_63 : f32 to vector<8x256xf32>
    %349 = arith.addf %348, %347 : vector<8x256xf32>
    %350 = arith.divf %348, %349 : vector<8x256xf32>
    %351 = vector.extract_strided_slice %350 {offsets = [0, 0], sizes = [8, 128], strides = [1, 1]} : vector<8x256xf32> to vector<8x128xf32>
    %352 = vector.extract_strided_slice %350 {offsets = [0, 128], sizes = [8, 128], strides = [1, 1]} : vector<8x256xf32> to vector<8x128xf32>
    %353 = vector.extract_strided_slice %320 {offsets = [0, 256], sizes = [8, 128], strides = [1, 1]} : vector<8x512xf32> to vector<8x128xf32>
    %354 = math.tanh %353 : vector<8x128xf32>
    %355 = vector.extract_strided_slice %320 {offsets = [0, 384], sizes = [8, 128], strides = [1, 1]} : vector<8x512xf32> to vector<8x128xf32>
    %356 = arith.negf %355 : vector<8x128xf32>
    %357 = math.exp %356 : vector<8x128xf32>
    %cst_64 = arith.constant 1.000000e+00 : f32
    %358 = vector.broadcast %cst_64 : f32 to vector<8x128xf32>
    %359 = arith.addf %358, %357 : vector<8x128xf32>
    %360 = arith.divf %358, %359 : vector<8x128xf32>
    %361 = arith.mulf %352, %308 : vector<8x128xf32>
    %362 = arith.mulf %351, %354 : vector<8x128xf32>
    %363 = arith.addf %361, %362 : vector<8x128xf32>
    %364 = math.tanh %363 : vector<8x128xf32>
    %365 = arith.mulf %360, %364 : vector<8x128xf32>
    %366 = tpu.concatenate %365, %341 in 1 : vector<8x128xf32>, vector<8x128xf32> -> vector<8x256xf32>
    %367 = arith.truncf %366 : vector<8x256xf32> to vector<8x256xbf16>
    %cst_65 = arith.constant dense<0.000000e+00> : vector<8x512xf32>
    %368 = tpu.matmul %367, %34, %cst_65 {dimension_numbers = #tpu.dot_dimension_numbers<[1], [0], [0], [1], [0, 0, 1, 1], [], []>} : vector<8x256xbf16>, vector<256x512xbf16>, vector<8x512xf32> -> vector<8x512xf32>
    %369 = vector.broadcast %35 : vector<1x512xf32> to vector<8x512xf32>
    %370 = arith.addf %368, %369 : vector<8x512xf32>
    %371 = vector.extract_strided_slice %6 {offsets = [7, 0, 0], sizes = [1, 8, 512], strides = [1, 1, 1]} : vector<8x8x512xf32> to vector<1x8x512xf32>
    %372 = vector.shape_cast %371 : vector<1x8x512xf32> to vector<8x512xf32>
    %373 = arith.truncf %365 : vector<8x128xf32> to vector<8x128xbf16>
    %cst_66 = arith.constant dense<0.000000e+00> : vector<8x512xf32>
    %374 = tpu.matmul %373, %7, %cst_66 {dimension_numbers = #tpu.dot_dimension_numbers<[1], [0], [0], [1], [0, 0, 1, 1], [], []>} : vector<8x128xbf16>, vector<128x512xbf16>, vector<8x512xf32> -> vector<8x512xf32>
    %375 = arith.addf %372, %374 : vector<8x512xf32>
    %376 = vector.extract_strided_slice %370 {offsets = [0, 0], sizes = [8, 256], strides = [1, 1]} : vector<8x512xf32> to vector<8x256xf32>
    %377 = arith.negf %376 : vector<8x256xf32>
    %378 = math.exp %377 : vector<8x256xf32>
    %cst_67 = arith.constant 1.000000e+00 : f32
    %379 = vector.broadcast %cst_67 : f32 to vector<8x256xf32>
    %380 = arith.addf %379, %378 : vector<8x256xf32>
    %381 = arith.divf %379, %380 : vector<8x256xf32>
    %382 = vector.extract_strided_slice %381 {offsets = [0, 0], sizes = [8, 128], strides = [1, 1]} : vector<8x256xf32> to vector<8x128xf32>
    %383 = vector.extract_strided_slice %381 {offsets = [0, 128], sizes = [8, 128], strides = [1, 1]} : vector<8x256xf32> to vector<8x128xf32>
    %384 = vector.extract_strided_slice %370 {offsets = [0, 256], sizes = [8, 128], strides = [1, 1]} : vector<8x512xf32> to vector<8x128xf32>
    %385 = math.tanh %384 : vector<8x128xf32>
    %386 = vector.extract_strided_slice %370 {offsets = [0, 384], sizes = [8, 128], strides = [1, 1]} : vector<8x512xf32> to vector<8x128xf32>
    %387 = arith.negf %386 : vector<8x128xf32>
    %388 = math.exp %387 : vector<8x128xf32>
    %cst_68 = arith.constant 1.000000e+00 : f32
    %389 = vector.broadcast %cst_68 : f32 to vector<8x128xf32>
    %390 = arith.addf %389, %388 : vector<8x128xf32>
    %391 = arith.divf %389, %390 : vector<8x128xf32>
    %392 = arith.mulf %383, %339 : vector<8x128xf32>
    %393 = arith.mulf %382, %385 : vector<8x128xf32>
    %394 = arith.addf %392, %393 : vector<8x128xf32>
    %395 = math.tanh %394 : vector<8x128xf32>
    %396 = arith.mulf %391, %395 : vector<8x128xf32>
    %c6 = arith.constant 6 : index
    %c0_69 = arith.constant 0 : index
    %c0_70 = arith.constant 0 : index
    %397 = vector.load %arg15[%c6, %c0_69, %c0_70] : memref<8x8x128xf32, #tpu.memory_space<vmem>>, vector<1x8x128xf32>
    %398 = vector.shape_cast %397 : vector<1x8x128xf32> to vector<8x128xf32>
    %399 = vector.shape_cast %396 : vector<8x128xf32> to vector<1x8x128xf32>
    tpu.vector_store %arg15[%c6, %c0_69, %c0_70], %399 {strides = array<i32>} : memref<8x8x128xf32, #tpu.memory_space<vmem>>, vector<1x8x128xf32>,
    %400 = vector.extract_strided_slice %375 {offsets = [0, 0], sizes = [8, 256], strides = [1, 1]} : vector<8x512xf32> to vector<8x256xf32>
    %401 = arith.negf %400 : vector<8x256xf32>
    %402 = math.exp %401 : vector<8x256xf32>
    %cst_71 = arith.constant 1.000000e+00 : f32
    %403 = vector.broadcast %cst_71 : f32 to vector<8x256xf32>
    %404 = arith.addf %403, %402 : vector<8x256xf32>
    %405 = arith.divf %403, %404 : vector<8x256xf32>
    %406 = vector.extract_strided_slice %405 {offsets = [0, 0], sizes = [8, 128], strides = [1, 1]} : vector<8x256xf32> to vector<8x128xf32>
    %407 = vector.extract_strided_slice %405 {offsets = [0, 128], sizes = [8, 128], strides = [1, 1]} : vector<8x256xf32> to vector<8x128xf32>
    %408 = vector.extract_strided_slice %375 {offsets = [0, 256], sizes = [8, 128], strides = [1, 1]} : vector<8x512xf32> to vector<8x128xf32>
    %409 = math.tanh %408 : vector<8x128xf32>
    %410 = vector.extract_strided_slice %375 {offsets = [0, 384], sizes = [8, 128], strides = [1, 1]} : vector<8x512xf32> to vector<8x128xf32>
    %411 = arith.negf %410 : vector<8x128xf32>
    %412 = math.exp %411 : vector<8x128xf32>
    %cst_72 = arith.constant 1.000000e+00 : f32
    %413 = vector.broadcast %cst_72 : f32 to vector<8x128xf32>
    %414 = arith.addf %413, %412 : vector<8x128xf32>
    %415 = arith.divf %413, %414 : vector<8x128xf32>
    %416 = arith.mulf %407, %363 : vector<8x128xf32>
    %417 = arith.mulf %406, %409 : vector<8x128xf32>
    %418 = arith.addf %416, %417 : vector<8x128xf32>
    %419 = math.tanh %418 : vector<8x128xf32>
    %420 = arith.mulf %415, %419 : vector<8x128xf32>
    %421 = tpu.concatenate %420, %396 in 1 : vector<8x128xf32>, vector<8x128xf32> -> vector<8x256xf32>
    %422 = arith.truncf %421 : vector<8x256xf32> to vector<8x256xbf16>
    %cst_73 = arith.constant dense<0.000000e+00> : vector<8x512xf32>
    %423 = tpu.matmul %422, %34, %cst_73 {dimension_numbers = #tpu.dot_dimension_numbers<[1], [0], [0], [1], [0, 0, 1, 1], [], []>} : vector<8x256xbf16>, vector<256x512xbf16>, vector<8x512xf32> -> vector<8x512xf32>
    %424 = vector.broadcast %35 : vector<1x512xf32> to vector<8x512xf32>
    %425 = arith.addf %423, %424 : vector<8x512xf32>
    %426 = vector.extract_strided_slice %425 {offsets = [0, 0], sizes = [8, 256], strides = [1, 1]} : vector<8x512xf32> to vector<8x256xf32>
    %427 = arith.negf %426 : vector<8x256xf32>
    %428 = math.exp %427 : vector<8x256xf32>
    %cst_74 = arith.constant 1.000000e+00 : f32
    %429 = vector.broadcast %cst_74 : f32 to vector<8x256xf32>
    %430 = arith.addf %429, %428 : vector<8x256xf32>
    %431 = arith.divf %429, %430 : vector<8x256xf32>
    %432 = vector.extract_strided_slice %431 {offsets = [0, 0], sizes = [8, 128], strides = [1, 1]} : vector<8x256xf32> to vector<8x128xf32>
    %433 = vector.extract_strided_slice %431 {offsets = [0, 128], sizes = [8, 128], strides = [1, 1]} : vector<8x256xf32> to vector<8x128xf32>
    %434 = vector.extract_strided_slice %425 {offsets = [0, 256], sizes = [8, 128], strides = [1, 1]} : vector<8x512xf32> to vector<8x128xf32>
    %435 = math.tanh %434 : vector<8x128xf32>
    %436 = vector.extract_strided_slice %425 {offsets = [0, 384], sizes = [8, 128], strides = [1, 1]} : vector<8x512xf32> to vector<8x128xf32>
    %437 = arith.negf %436 : vector<8x128xf32>
    %438 = math.exp %437 : vector<8x128xf32>
    %cst_75 = arith.constant 1.000000e+00 : f32
    %439 = vector.broadcast %cst_75 : f32 to vector<8x128xf32>
    %440 = arith.addf %439, %438 : vector<8x128xf32>
    %441 = arith.divf %439, %440 : vector<8x128xf32>
    %442 = arith.mulf %433, %394 : vector<8x128xf32>
    %443 = arith.mulf %432, %435 : vector<8x128xf32>
    %444 = arith.addf %442, %443 : vector<8x128xf32>
    %445 = math.tanh %444 : vector<8x128xf32>
    %446 = arith.mulf %441, %445 : vector<8x128xf32>
    %c7 = arith.constant 7 : index
    %c0_76 = arith.constant 0 : index
    %c0_77 = arith.constant 0 : index
    %447 = vector.load %arg15[%c7, %c0_76, %c0_77] : memref<8x8x128xf32, #tpu.memory_space<vmem>>, vector<1x8x128xf32>
    %448 = vector.shape_cast %447 : vector<1x8x128xf32> to vector<8x128xf32>
    %449 = vector.shape_cast %446 : vector<8x128xf32> to vector<1x8x128xf32>
    tpu.vector_store %arg15[%c7, %c0_76, %c0_77], %449 {strides = array<i32>} : memref<8x8x128xf32, #tpu.memory_space<vmem>>, vector<1x8x128xf32>,
    %c0_78 = arith.constant 0 : index
    %c0_79 = arith.constant 0 : index
    %c0_80 = arith.constant 0 : index
    %450 = vector.load %arg15[%c0_78, %c0_79, %c0_80] : memref<8x8x128xf32, #tpu.memory_space<vmem>>, vector<8x8x128xf32>
    %451 = vector.shape_cast %450 : vector<8x8x128xf32> to vector<64x128xf32>
    %c0_81 = arith.constant 0 : index
    %c0_82 = arith.constant 0 : index
    %452 = vector.load %arg6[%c0_81, %c0_82] : memref<128x64xbf16, #tpu.memory_space<vmem>>, vector<128x64xbf16>
    %453 = arith.truncf %451 : vector<64x128xf32> to vector<64x128xbf16>
    %cst_83 = arith.constant dense<0.000000e+00> : vector<64x64xf32>
    %454 = tpu.matmul %453, %452, %cst_83 {dimension_numbers = #tpu.dot_dimension_numbers<[1], [0], [0], [1], [0, 0, 1, 1], [], []>} : vector<64x128xbf16>, vector<128x64xbf16>, vector<64x64xf32> -> vector<64x64xf32>
    %c0_84 = arith.constant 0 : index
    %c0_85 = arith.constant 0 : index
    %455 = vector.load %arg7[%c0_84, %c0_85] : memref<1x64xf32, #tpu.memory_space<vmem>>, vector<1x64xf32>
    %456 = vector.broadcast %455 : vector<1x64xf32> to vector<64x64xf32>
    %457 = arith.addf %454, %456 : vector<64x64xf32>
    %458 = math.tanh %457 : vector<64x64xf32>
    %c0_86 = arith.constant 0 : index
    %c0_87 = arith.constant 0 : index
    %459 = vector.load %arg8[%c0_86, %c0_87] : memref<1x64xf32, #tpu.memory_space<vmem>>, vector<1x64xf32>
    %460 = vector.broadcast %459 : vector<1x64xf32> to vector<64x64xf32>
    %461 = arith.mulf %458, %460 : vector<64x64xf32>
    %cst_88 = arith.constant dense<0.000000e+00> : vector<64xf32>
    %462 = vector.multi_reduction <add>, %461, %cst_88 [1] : vector<64x64xf32> to vector<64xf32>
    %463 = vector.shape_cast %462 : vector<64xf32> to vector<64x1xf32>
    %c0_89 = arith.constant 0 : index
    %c0_90 = arith.constant 0 : index
    %464 = vector.load %arg9[%c0_89, %c0_90] : memref<1x1xf32, #tpu.memory_space<vmem>>, vector<1x1xf32>
    %465 = vector.broadcast %464 : vector<1x1xf32> to vector<64x1xf32>
    %466 = arith.addf %463, %465 : vector<64x1xf32>
    %467 = vector.shape_cast %466 : vector<64x1xf32> to vector<8x8x1xf32>
    %cst_91 = arith.constant dense<0xFF800000> : vector<8x1xf32>
    %468 = vector.multi_reduction <maximumf>, %467, %cst_91 [0] : vector<8x8x1xf32> to vector<8x1xf32>
    %469 = vector.shape_cast %468 : vector<8x1xf32> to vector<1x8x1xf32>
    %470 = vector.broadcast %469 : vector<1x8x1xf32> to vector<8x8x1xf32>
    %471 = arith.subf %467, %470 : vector<8x8x1xf32>
    %472 = math.exp %471 : vector<8x8x1xf32>
    %cst_92 = arith.constant dense<0.000000e+00> : vector<8x1xf32>
    %473 = vector.multi_reduction <add>, %472, %cst_92 [0] : vector<8x8x1xf32> to vector<8x1xf32>
    %474 = vector.shape_cast %473 : vector<8x1xf32> to vector<1x8x1xf32>
    %475 = tpu.reciprocal %474 {approx = true} : vector<1x8x1xf32> -> vector<1x8x1xf32>
    %476 = vector.broadcast %475 : vector<1x8x1xf32> to vector<8x8x1xf32>
    %477 = arith.mulf %472, %476 : vector<8x8x1xf32>
    %478 = vector.broadcast %477 : vector<8x8x1xf32> to vector<8x8x128xf32>
    %479 = arith.mulf %478, %450 : vector<8x8x128xf32>
    %cst_93 = arith.constant dense<0.000000e+00> : vector<8x128xf32>
    %480 = vector.multi_reduction <add>, %479, %cst_93 [0] : vector<8x8x128xf32> to vector<8x128xf32>
    %c0_94 = arith.constant 0 : index
    %c0_95 = arith.constant 0 : index
    %481 = vector.load %arg10[%c0_94, %c0_95] : memref<128x64xbf16, #tpu.memory_space<vmem>>, vector<128x64xbf16>
    %482 = arith.truncf %480 : vector<8x128xf32> to vector<8x128xbf16>
    %cst_96 = arith.constant dense<0.000000e+00> : vector<8x64xf32>
    %483 = tpu.matmul %482, %481, %cst_96 {dimension_numbers = #tpu.dot_dimension_numbers<[1], [0], [0], [1], [0, 0, 1, 1], [], []>} : vector<8x128xbf16>, vector<128x64xbf16>, vector<8x64xf32> -> vector<8x64xf32>
    %c0_97 = arith.constant 0 : index
    %c0_98 = arith.constant 0 : index
    %484 = vector.load %arg11[%c0_97, %c0_98] : memref<1x64xf32, #tpu.memory_space<vmem>>, vector<1x64xf32>
    %485 = vector.broadcast %484 : vector<1x64xf32> to vector<8x64xf32>
    %486 = arith.addf %483, %485 : vector<8x64xf32>
    %cst_99 = arith.constant 0.000000e+00 : f32
    %487 = vector.broadcast %cst_99 : f32 to vector<8x64xf32>
    %488 = arith.maximumf %486, %487 : vector<8x64xf32>
    %c0_100 = arith.constant 0 : index
    %c0_101 = arith.constant 0 : index
    %489 = vector.load %arg12[%c0_100, %c0_101] : memref<1x64xf32, #tpu.memory_space<vmem>>, vector<1x64xf32>
    %490 = vector.broadcast %489 : vector<1x64xf32> to vector<8x64xf32>
    %491 = arith.mulf %488, %490 : vector<8x64xf32>
    %cst_102 = arith.constant dense<0.000000e+00> : vector<8xf32>
    %492 = vector.multi_reduction <add>, %491, %cst_102 [1] : vector<8x64xf32> to vector<8xf32>
    %493 = vector.shape_cast %492 : vector<8xf32> to vector<8x1xf32>
    %c0_103 = arith.constant 0 : index
    %c0_104 = arith.constant 0 : index
    %494 = vector.load %arg13[%c0_103, %c0_104] : memref<1x1xf32, #tpu.memory_space<vmem>>, vector<1x1xf32>
    %495 = vector.broadcast %494 : vector<1x1xf32> to vector<8x1xf32>
    %496 = arith.addf %493, %495 : vector<8x1xf32>
    %497 = vector.shape_cast %496 : vector<8x1xf32> to vector<8x1xf32>
    %498 = vector.broadcast %497 : vector<8x1xf32> to vector<8x128xf32>
    %c0_105 = arith.constant 0 : index
    %c0_106 = arith.constant 0 : index
    %499 = vector.load %arg14[%c0_105, %c0_106] : memref<8x128xf32, #tpu.memory_space<vmem>>, vector<8x128xf32>
    tpu.vector_store %arg14[%c0_105, %c0_106], %498 {strides = array<i32>} : memref<8x128xf32, #tpu.memory_space<vmem>>, vector<8x128xf32>,
    return
  }
}

</mosaic_0001>

<llo_original>
// kernel: forward.1
$region0: #{forward.1}
  #allocation0 [shape = 'u32[]', space=smem, size = 0x4, offset = 0x4, fixed_abs, tag = 'smem constant byte address 0x4 - core index']
  #allocation1 [shape = 'u32[144,128]{1,0:T(1,128)}', space=vmem, size = 0x12000, scoped, tag = 'internal scratch']
  #allocation2 [shape = 'f32[8,8,128]{2,1,0:T(8,128)}', space=vmem, size = 0x8000, scoped, tag = 'scratch operand']
  #allocation3 [shape = 'bf16[256,512]{1,0:T(8,128)(2,1)}', space=vmem, size = 0x40000, scoped, tag = 'scratch operand']
  #allocation4 [shape = 's32[1]{0}', space=sflag, size = 0x4, scoped, tag = 'scratch operand']
  #allocation5 [shape = 'f32[1,1]{1,0:T(1,128)S(1)}', space=vmem, size = 0x200, scoped, tag = 'scoped memory for forward.1']
  #allocation6 [shape = 'f32[1,1]{1,0:T(1,128)S(1)}', space=vmem, size = 0x200, scoped, tag = 'scoped memory for forward.1']
  #allocation7 [shape = 's32[]', space=sflag, size = 0x4, offset = 0, fixed_abs, tag = 'sflag constant byte address 0x0 - dummy sync flag']
  #allocation8 [shape = 's32[]', space=sflag, size = 0x4, offset = 0, fixed_abs, tag = 'sflag constant byte address 0x0 - dummy sync flag']
  #allocation9 [shape = 'u32[]', space=smem, size = 0x4, offset = 0x44, fixed_abs, tag = 'smem constant byte address 0x44 - assertion arg 0']
  #allocation10 [shape = 'u32[]', space=smem, size = 0x4, offset = 0x48, fixed_abs, tag = 'smem constant byte address 0x48 - assertion arg 1']
  %s0 = inlined_call_operand.vmem [shape: bf16[64,3], index: 0, kind: input, shape index: {}]
  %s1 = inlined_call_operand.vmem [shape: bf16[3,512], index: 1, kind: input, shape index: {}]
  %s2 = inlined_call_operand.vmem [shape: bf16[128,512], index: 2, kind: input, shape index: {}]
  %s3 = inlined_call_operand.vmem [shape: f32[1,512], index: 3, kind: input, shape index: {}]
  %s4 = inlined_call_operand.hbm [shape: bf16[256,512], index: 4, kind: input, shape index: {}]
  %s5 = inlined_call_operand.vmem [shape: f32[1,512], index: 5, kind: input, shape index: {}]
  %s6 = inlined_call_operand.vmem [shape: bf16[128,64], index: 6, kind: input, shape index: {}]
  %s7 = inlined_call_operand.vmem [shape: f32[1,64], index: 7, kind: input, shape index: {}]
  %s8 = inlined_call_operand.vmem [shape: f32[1,64], index: 8, kind: input, shape index: {}]
  %s9 = inlined_call_operand.<no memory space> [shape: f32[1,1], index: 9, kind: input, shape index: {}]
  %s10 = inlined_call_operand.vmem [shape: bf16[128,64], index: 10, kind: input, shape index: {}]
  %s11 = inlined_call_operand.vmem [shape: f32[1,64], index: 11, kind: input, shape index: {}]
  %s12 = inlined_call_operand.vmem [shape: f32[1,64], index: 12, kind: input, shape index: {}]
  %s13 = inlined_call_operand.<no memory space> [shape: f32[1,1], index: 13, kind: input, shape index: {}]
  %s14 = inlined_call_operand.vmem [shape: f32[8,128], index: 14, kind: output, shape index: {}]
  %s15 = sld [smem:[#allocation0]]
  $region66: #{forward.1} parent=0
    _
  %s17 = ssub.s32 1, %s15
  %s18 = scalar_select 0, %s17, %s15
  %v19 = vstv %s9
  %20 = vst [vmem:[#allocation5] sm:$0x1] %v19
  %v21 = vstv %s13
  %22 = vst [vmem:[#allocation6] sm:$0x1] %v21
  // Predicated region
  $region2: #{forward.1} parent=0 // pred_check
    _
  $region3: #{forward.1} parent=0 // pred_check_branch
    %24 = sbr.rel (0) target = $region5
  $region4: #{forward.1} parent=0 // pred_region
    _
  $region5: #{forward.1} parent=0 // pred_fallthru
    _
  // Predicated region
  $region6: #{forward.1} parent=0 // pred_check
    _
  $region7: #{forward.1} parent=0 // pred_check_branch
    %26 = sbr.rel (0) target = $region9
  $region8: #{forward.1} parent=0 // pred_region
    _
  $region9: #{forward.1} parent=0 // pred_fallthru
    _
  // Predicated region
  $region10: #{forward.1} parent=0 // pred_check
    _
  $region11: #{forward.1} parent=0 // pred_check_branch
    %28 = sbr.rel (0) target = $region13
  $region12: #{forward.1} parent=0 // pred_region
    _
  $region13: #{forward.1} parent=0 // pred_fallthru
    _
  // Predicated region
  $region14: #{forward.1} parent=0 // pred_check
    _
  $region15: #{forward.1} parent=0 // pred_check_branch
    %30 = sbr.rel (0) target = $region17
  $region16: #{forward.1} parent=0 // pred_region
    _
  $region17: #{forward.1} parent=0 // pred_fallthru
    _
  // Predicated region
  $region18: #{forward.1} parent=0 // pred_check
    _
  $region19: #{forward.1} parent=0 // pred_check_branch
    %32 = sbr.rel (0) target = $region21
  $region20: #{forward.1} parent=0 // pred_region
    _
  $region21: #{forward.1} parent=0 // pred_fallthru
    _
  // Predicated region
  $region22: #{forward.1} parent=0 // pred_check
    _
  $region23: #{forward.1} parent=0 // pred_check_branch
    %34 = sbr.rel (0) target = $region25
  $region24: #{forward.1} parent=0 // pred_region
    _
  $region25: #{forward.1} parent=0 // pred_fallthru
    _
  // Predicated region
  $region26: #{forward.1} parent=0 // pred_check
    _
  $region27: #{forward.1} parent=0 // pred_check_branch
    %36 = sbr.rel (0) target = $region29
  $region28: #{forward.1} parent=0 // pred_region
    _
  $region29: #{forward.1} parent=0 // pred_fallthru
    _
  // Predicated region
  $region30: #{forward.1} parent=0 // pred_check
    _
  $region31: #{forward.1} parent=0 // pred_check_branch
    %38 = sbr.rel (0) target = $region33
  $region32: #{forward.1} parent=0 // pred_region
    _
  $region33: #{forward.1} parent=0 // pred_fallthru
    _
  // Predicated region
  $region34: #{forward.1} parent=0 // pred_check
    _
  $region35: #{forward.1} parent=0 // pred_check_branch
    %40 = sbr.rel (0) target = $region37
  $region36: #{forward.1} parent=0 // pred_region
    _
  $region37: #{forward.1} parent=0 // pred_fallthru
    _
  // Predicated region
  $region38: #{forward.1} parent=0 // pred_check
    _
  $region39: #{forward.1} parent=0 // pred_check_branch
    %42 = sbr.rel (0) target = $region41
  $region40: #{forward.1} parent=0 // pred_region
    _
  $region41: #{forward.1} parent=0 // pred_fallthru
    _
  // Predicated region
  $region42: #{forward.1} parent=0 // pred_check
    _
  $region43: #{forward.1} parent=0 // pred_check_branch
    %44 = sbr.rel (0) target = $region45
  $region44: #{forward.1} parent=0 // pred_region
    _
  $region45: #{forward.1} parent=0 // pred_fallthru
    _
  // Predicated region
  $region46: #{forward.1} parent=0 // pred_check
    _
  $region47: #{forward.1} parent=0 // pred_check_branch
    %46 = sbr.rel (0) target = $region49
  $region48: #{forward.1} parent=0 // pred_region
    _
  $region49: #{forward.1} parent=0 // pred_fallthru
    _
  // Predicated region
  $region50: #{forward.1} parent=0 // pred_check
    _
  $region51: #{forward.1} parent=0 // pred_check_branch
    %48 = sbr.rel (0) target = $region53
  $region52: #{forward.1} parent=0 // pred_region
    _
  $region53: #{forward.1} parent=0 // pred_fallthru
    _
  // Predicated region
  $region54: #{forward.1} parent=0 // pred_check
    _
  $region55: #{forward.1} parent=0 // pred_check_branch
    %51 = sbr.rel target = $region57
  $region56: #{forward.1} parent=0 // pred_region
    %52 = sst [smem:[#allocation9]] [#allocation8]
    %53 = sst [smem:[#allocation10]] [#allocation7]
  $region57: #{forward.1} parent=0 // pred_fallthru
    _
  %55 = shalt.err (0)
  %s57 = sshll.u32 [#allocation3], 4
  %s58 = int_to_ptr.vmem [resolvable:$true] %s57
  %60 = dma.hbm_to_vmem [thread:$0]  %s4, 8192, %s58, [#allocation4]
  %v61 = vld [vmem:[%s0] sm:$0xf]
  %v62 = vld [vmem:[%s0 + $0x4] sm:$0xf]
  %v63 = vld [vmem:[%s0 + $0x8] sm:$0xf]
  %v64 = vld [vmem:[%s0 + $0xc] sm:$0xf]
  %v65 = vld [vmem:[%s0 + $0x10] sm:$0xf]
  %v66 = vld [vmem:[%s0 + $0x14] sm:$0xf]
  %v67 = vld [vmem:[%s0 + $0x18] sm:$0xf]
  %v68 = vld [vmem:[%s0 + $0x1c] sm:$0xf]
  %v69 = vld [vmem:[%s1] sm:$0xff]
  %v70 = vld [vmem:[%s3] sm:$0xf]
  %v72 = vlaneseq
  %v73 = vshrl.u32 %v72, 7
  %v74 = vsub.s32 0, %v73
  %v75 = vrot.slane %v70, %v74
  %v76 = vlaneseq
  %v77 = vshrl.u32 %v76, 7
  %v78 = vsub.s32 1, %v77
  %v79 = vrot.slane %v70, %v78
  %v80 = vlaneseq
  %v81 = vshrl.u32 %v80, 7
  %v82 = vsub.s32 2, %v81
  %v83 = vrot.slane %v70, %v82
  %v84 = vlaneseq
  %v85 = vshrl.u32 %v84, 7
  %v86 = vsub.s32 3, %v85
  %v87 = vrot.slane %v70, %v86
  %v100 = vunpack.c.l.b16 %v61
  %v101 = vunpack.c.l.b16 %v62
  %v102 = vunpack.c.l.b16 %v63
  %v103 = vunpack.c.l.b16 %v64
  %v104 = vunpack.c.l.b16 %v65
  %v105 = vunpack.c.l.b16 %v66
  %v106 = vunpack.c.l.b16 %v67
  %v107 = vunpack.c.l.b16 %v68
  %v108 = vpack.c.b16 %v101, %v100
  %v109 = vpack.c.b16 %v103, %v102
  %v110 = vpack.c.b16 %v105, %v104
  %v111 = vpack.c.b16 %v107, %v106
  %v113 = vcombine.high %v69, %v69
  %v115 = vunpack.c.l.s4 1983009808
  %v116 = vunpack.c.0.s8 %v115
  %v117 = vlaneseq
  %v118 = vshrl.u32 %v117, 7
  %v119 = vsub.s32 %v116, %v118
  %v120 = vrot.slane %v69, %v119
  %v122 = vunpack.c.l.s4 1983009808
  %v123 = vunpack.c.0.s8 %v122
  %v124 = vlaneseq
  %v125 = vshrl.u32 %v124, 7
  %v126 = vsub.s32 %v123, %v125
  %v127 = vrot.slane %v113, %v126
  %v128 = vcombine.high %v120, %v120
  %v129 = vcombine.high %v127, %v127
  %vm130 = vcmask 23552
  %v132 = vsel %vm130, %v108, 0
  %v135 = vsel %vm130, %v109, 0
  %v138 = vsel %vm130, %v110, 0
  %v141 = vsel %vm130, %v111, 0
  %vm143 = vcmask 1040384
  %vm144 = vcmask 1041408
  %v145 = vsel %vm143, 4294967295, 65535
  %v146 = vsel %vm144, %v145, 0
  %v148 = vand.u32 %v120, %v146
  %v151 = vand.u32 %v128, %v146
  %v154 = vand.u32 %v127, %v146
  %v157 = vand.u32 %v129, %v146
  %159 = vmatprep.subr.bf16.mxu0 0
  %160 = vmatpush1.bf16.msra.mxu0 0
  %161 = vmatprep.subr.bf16.mxu0 0
  %162 = vmatpush1.bf16.msra.mxu0 0
  %163 = vmatprep.subr.bf16.mxu0 0
  %164 = vmatpush1.bf16.msra.mxu0 0
  %165 = vmatprep.subr.bf16.mxu0 0
  %166 = vmatpush1.bf16.msra.mxu0 0
  %167 = vmatprep.subr.bf16.mxu0 0
  %168 = vmatpush1.bf16.msra.mxu0 0
  %169 = vmatprep.subr.bf16.mxu0 0
  %170 = vmatpush1.bf16.msra.mxu0 0
  %171 = vmatprep.subr.bf16.mxu0 0
  %172 = vmatpush1.bf16.msra.mxu0 0
  %173 = vmatprep.subr.bf16.mxu0 %v151
  %174 = vmatpush1.bf16.msra.mxu0 %v148
  %175 = vmatprep.subr.bf16.mxu0 0
  %176 = vmatpush2.bf16.msra.mxu0 0
  %177 = vmatprep.subr.bf16.mxu0 0
  %178 = vmatpush2.bf16.msra.mxu0 0
  %179 = vmatprep.subr.bf16.mxu0 0
  %180 = vmatpush2.bf16.msra.mxu0 0
  %181 = vmatprep.subr.bf16.mxu0 0
  %182 = vmatpush2.bf16.msra.mxu0 0
  %183 = vmatprep.subr.bf16.mxu0 0
  %184 = vmatpush2.bf16.msra.mxu0 0
  %185 = vmatprep.subr.bf16.mxu0 0
  %186 = vmatpush2.bf16.msra.mxu0 0
  %187 = vmatprep.subr.bf16.mxu0 0
  %188 = vmatpush2.bf16.msra.mxu0 0
  %189 = vmatprep.subr.bf16.mxu0 0
  %190 = vmatpush2.bf16.msra.mxu0 0
  %191 = vmatprep.mubr.bf16.mxu0 0
  %192 = vmatmul.mubr.bf16.gmra.mxu0 %v132
  %v193 = vpop.f32.mrf.mxu0
  %v194 = vadd.f32 %v75, %v193
  %v195 = vpop.f32.mrf.mxu0
  %v196 = vadd.f32 %v79, %v195
  %v197 = vpop.f32.mrf.mxu0
  %v198 = vadd.f32 %v75, %v197
  %v199 = vpop.f32.mrf.mxu0
  %v200 = vadd.f32 %v79, %v199
  %201 = vmatprep.mubr.bf16.mxu0 0
  %202 = vmatmul.mubr.bf16.gmra.mxu0 %v135
  %v203 = vpop.f32.mrf.mxu0
  %v204 = vadd.f32 %v75, %v203
  %v205 = vpop.f32.mrf.mxu0
  %v206 = vadd.f32 %v79, %v205
  %v207 = vpop.f32.mrf.mxu0
  %v208 = vadd.f32 %v75, %v207
  %v209 = vpop.f32.mrf.mxu0
  %v210 = vadd.f32 %v79, %v209
  %211 = vmatprep.mubr.bf16.mxu0 0
  %212 = vmatmul.mubr.bf16.gmra.mxu0 %v138
  %v213 = vpop.f32.mrf.mxu0
  %v214 = vadd.f32 %v75, %v213
  %v215 = vpop.f32.mrf.mxu0
  %v216 = vadd.f32 %v79, %v215
  %v217 = vpop.f32.mrf.mxu0
  %v218 = vadd.f32 %v75, %v217
  %v219 = vpop.f32.mrf.mxu0
  %v220 = vadd.f32 %v79, %v219
  %221 = vmatprep.mubr.bf16.mxu0 0
  %222 = vmatmul.mubr.bf16.gmra.mxu0 %v141
  %v223 = vpop.f32.mrf.mxu0
  %v224 = vadd.f32 %v75, %v223
  %v225 = vpop.f32.mrf.mxu0
  %v226 = vadd.f32 %v79, %v225
  %v227 = vpop.f32.mrf.mxu0
  %v228 = vadd.f32 %v75, %v227
  %v229 = vpop.f32.mrf.mxu0
  %v230 = vadd.f32 %v79, %v229
  %231 = vdwg.mxu0
  %232 = vmatprep.subr.bf16.mxu0 0
  %233 = vmatpush1.bf16.msra.mxu0 0
  %234 = vmatprep.subr.bf16.mxu0 0
  %235 = vmatpush1.bf16.msra.mxu0 0
  %236 = vmatprep.subr.bf16.mxu0 0
  %237 = vmatpush1.bf16.msra.mxu0 0
  %238 = vmatprep.subr.bf16.mxu0 0
  %239 = vmatpush1.bf16.msra.mxu0 0
  %240 = vmatprep.subr.bf16.mxu0 0
  %241 = vmatpush1.bf16.msra.mxu0 0
  %242 = vmatprep.subr.bf16.mxu0 0
  %243 = vmatpush1.bf16.msra.mxu0 0
  %244 = vmatprep.subr.bf16.mxu0 0
  %245 = vmatpush1.bf16.msra.mxu0 0
  %246 = vmatprep.subr.bf16.mxu0 %v157
  %247 = vmatpush1.bf16.msra.mxu0 %v154
  %248 = vmatprep.subr.bf16.mxu0 0
  %249 = vmatpush2.bf16.msra.mxu0 0
  %250 = vmatprep.subr.bf16.mxu0 0
  %251 = vmatpush2.bf16.msra.mxu0 0
  %252 = vmatprep.subr.bf16.mxu0 0
  %253 = vmatpush2.bf16.msra.mxu0 0
  %254 = vmatprep.subr.bf16.mxu0 0
  %255 = vmatpush2.bf16.msra.mxu0 0
  %256 = vmatprep.subr.bf16.mxu0 0
  %257 = vmatpush2.bf16.msra.mxu0 0
  %258 = vmatprep.subr.bf16.mxu0 0
  %259 = vmatpush2.bf16.msra.mxu0 0
  %260 = vmatprep.subr.bf16.mxu0 0
  %261 = vmatpush2.bf16.msra.mxu0 0
  %262 = vmatprep.subr.bf16.mxu0 0
  %263 = vmatpush2.bf16.msra.mxu0 0
  %264 = vmatprep.mubr.bf16.mxu0 0
  %265 = vmatmul.mubr.bf16.gmra.mxu0 %v132
  %v266 = vpop.f32.mrf.mxu0
  %v267 = vadd.f32 %v83, %v266
  %v268 = vpop.f32.mrf.mxu0
  %v269 = vadd.f32 %v87, %v268
  %v270 = vpop.f32.mrf.mxu0
  %v271 = vadd.f32 %v83, %v270
  %v272 = vpop.f32.mrf.mxu0
  %v273 = vadd.f32 %v87, %v272
  %274 = vmatprep.mubr.bf16.mxu0 0
  %275 = vmatmul.mubr.bf16.gmra.mxu0 %v135
  %v276 = vpop.f32.mrf.mxu0
  %v277 = vadd.f32 %v83, %v276
  %v278 = vpop.f32.mrf.mxu0
  %v279 = vadd.f32 %v87, %v278
  %v280 = vpop.f32.mrf.mxu0
  %v281 = vadd.f32 %v83, %v280
  %v282 = vpop.f32.mrf.mxu0
  %v283 = vadd.f32 %v87, %v282
  %284 = vmatprep.mubr.bf16.mxu0 0
  %285 = vmatmul.mubr.bf16.gmra.mxu0 %v138
  %v286 = vpop.f32.mrf.mxu0
  %v287 = vadd.f32 %v83, %v286
  %v288 = vpop.f32.mrf.mxu0
  %v289 = vadd.f32 %v87, %v288
  %v290 = vpop.f32.mrf.mxu0
  %v291 = vadd.f32 %v83, %v290
  %v292 = vpop.f32.mrf.mxu0
  %v293 = vadd.f32 %v87, %v292
  %294 = vmatprep.mubr.bf16.mxu0 0
  %295 = vmatmul.mubr.bf16.gmra.mxu0 %v141
  %v296 = vpop.f32.mrf.mxu0
  %v297 = vadd.f32 %v83, %v296
  %v298 = vpop.f32.mrf.mxu0
  %v299 = vadd.f32 %v87, %v298
  %v300 = vpop.f32.mrf.mxu0
  %v301 = vadd.f32 %v83, %v300
  %v302 = vpop.f32.mrf.mxu0
  %v303 = vadd.f32 %v87, %v302
  %304 = vdwg.mxu0
  %v305 = vld [vmem:[%s2] sm:$0xff]
  %v306 = vld [vmem:[%s2 + $0x8] sm:$0xff]
  %v307 = vld [vmem:[%s2 + $0x10] sm:$0xff]
  %v308 = vld [vmem:[%s2 + $0x18] sm:$0xff]
  %v309 = vld [vmem:[%s2 + $0x20] sm:$0xff]
  %v310 = vld [vmem:[%s2 + $0x28] sm:$0xff]
  %v311 = vld [vmem:[%s2 + $0x30] sm:$0xff]
  %v312 = vld [vmem:[%s2 + $0x38] sm:$0xff]
  %v313 = vld [vmem:[%s2 + $0x40] sm:$0xff]
  %v314 = vld [vmem:[%s2 + $0x48] sm:$0xff]
  %v315 = vld [vmem:[%s2 + $0x50] sm:$0xff]
  %v316 = vld [vmem:[%s2 + $0x58] sm:$0xff]
  %v317 = vld [vmem:[%s2 + $0x60] sm:$0xff]
  %v318 = vld [vmem:[%s2 + $0x68] sm:$0xff]
  %v319 = vld [vmem:[%s2 + $0x70] sm:$0xff]
  %v320 = vld [vmem:[%s2 + $0x78] sm:$0xff]
  %v321 = vld [vmem:[%s2 + $0x80] sm:$0xff]
  %v322 = vld [vmem:[%s2 + $0x88] sm:$0xff]
  %v323 = vld [vmem:[%s2 + $0x90] sm:$0xff]
  %v324 = vld [vmem:[%s2 + $0x98] sm:$0xff]
  %v325 = vld [vmem:[%s2 + $0xa0] sm:$0xff]
  %v326 = vld [vmem:[%s2 + $0xa8] sm:$0xff]
  %v327 = vld [vmem:[%s2 + $0xb0] sm:$0xff]
  %v328 = vld [vmem:[%s2 + $0xb8] sm:$0xff]
  %v329 = vld [vmem:[%s2 + $0xc0] sm:$0xff]
  %v330 = vld [vmem:[%s2 + $0xc8] sm:$0xff]
  %v331 = vld [vmem:[%s2 + $0xd0] sm:$0xff]
  %v332 = vld [vmem:[%s2 + $0xd8] sm:$0xff]
  %v333 = vld [vmem:[%s2 + $0xe0] sm:$0xff]
  %v334 = vld [vmem:[%s2 + $0xe8] sm:$0xff]
  %v335 = vld [vmem:[%s2 + $0xf0] sm:$0xff]
  %v336 = vld [vmem:[%s2 + $0xf8] sm:$0xff]
  %v337 = vxor.u32 %v194, 2147483648
  %v338 = vxor.u32 %v196, 2147483648
  %v339 = vmul.f32 %v337, 1.442695
  %v340 = vpow.pop %v339
  %v341 = vmul.f32 %v338, 1.442695
  %v342 = vpow.pop %v341
  %v343 = vadd.f32 %v340, 1.0
  %v344 = vadd.f32 %v342, 1.0
  %v345 = vrcp.pop %v343
  %v346 = vmul.f32 1.0, %v345
  %v347 = vrcp.pop %v344
  %v348 = vmul.f32 1.0, %v347
  %v349 = vtanh.pop %v267
  %v350 = vxor.u32 %v269, 2147483648
  %v351 = vmul.f32 %v350, 1.442695
  %v352 = vpow.pop %v351
  %v353 = vadd.f32 %v352, 1.0
  %v354 = vrcp.pop %v353
  %v355 = vmul.f32 1.0, %v354
  %v356 = vmul.f32 %v348, 0.0
  %v357 = vmul.f32 %v346, %v349
  %v358 = vadd.f32 %v356, %v357
  %v359 = vtanh.pop %v358
  %v360 = vmul.f32 %v355, %v359
  %s361 = smul.u32 4, 32
  %s362 = smul.u32 %s361, 4
  %s363 = sshll.u32 %s362, 4
  %364 = dma.done [#allocation4], %s363
  %v365 = vld [vmem:[#allocation3] sm:$0xff]
  %v366 = vld [vmem:[#allocation3 + $0x8] sm:$0xff]
  %v367 = vld [vmem:[#allocation3 + $0x10] sm:$0xff]
  %v368 = vld [vmem:[#allocation3 + $0x18] sm:$0xff]
  %v369 = vld [vmem:[#allocation3 + $0x20] sm:$0xff]
  %v370 = vld [vmem:[#allocation3 + $0x28] sm:$0xff]
  %v371 = vld [vmem:[#allocation3 + $0x30] sm:$0xff]
  %v372 = vld [vmem:[#allocation3 + $0x38] sm:$0xff]
  %v373 = vld [vmem:[#allocation3 + $0x40] sm:$0xff]
  %v374 = vld [vmem:[#allocation3 + $0x48] sm:$0xff]
  %v375 = vld [vmem:[#allocation3 + $0x50] sm:$0xff]
  %v376 = vld [vmem:[#allocation3 + $0x58] sm:$0xff]
  %v377 = vld [vmem:[#allocation3 + $0x60] sm:$0xff]
  %v378 = vld [vmem:[#allocation3 + $0x68] sm:$0xff]
  %v379 = vld [vmem:[#allocation3 + $0x70] sm:$0xff]
  %v380 = vld [vmem:[#allocation3 + $0x78] sm:$0xff]
  %v381 = vld [vmem:[#allocation3 + $0x80] sm:$0xff]
  %v382 = vld [vmem:[#allocation3 + $0x88] sm:$0xff]
  %v383 = vld [vmem:[#allocation3 + $0x90] sm:$0xff]
  %v384 = vld [vmem:[#allocation3 + $0x98] sm:$0xff]
  %v385 = vld [vmem:[#allocation3 + $0xa0] sm:$0xff]
  %v386 = vld [vmem:[#allocation3 + $0xa8] sm:$0xff]
  %v387 = vld [vmem:[#allocation3 + $0xb0] sm:$0xff]
  %v388 = vld [vmem:[#allocation3 + $0xb8] sm:$0xff]
  %v389 = vld [vmem:[#allocation3 + $0xc0] sm:$0xff]
  %v390 = vld [vmem:[#allocation3 + $0xc8] sm:$0xff]
  %v391 = vld [vmem:[#allocation3 + $0xd0] sm:$0xff]
  %v392 = vld [vmem:[#allocation3 + $0xd8] sm:$0xff]
  %v393 = vld [vmem:[#allocation3 + $0xe0] sm:$0xff]
  %v394 = vld [vmem:[#allocation3 + $0xe8] sm:$0xff]
  %v395 = vld [vmem:[#allocation3 + $0xf0] sm:$0xff]
  %v396 = vld [vmem:[#allocation3 + $0xf8] sm:$0xff]
  %v397 = vld [vmem:[#allocation3 + $0x100] sm:$0xff]
  %v398 = vld [vmem:[#allocation3 + $0x108] sm:$0xff]
  %v399 = vld [vmem:[#allocation3 + $0x110] sm:$0xff]
  %v400 = vld [vmem:[#allocation3 + $0x118] sm:$0xff]
  %v401 = vld [vmem:[#allocation3 + $0x120] sm:$0xff]
  %v402 = vld [vmem:[#allocation3 + $0x128] sm:$0xff]
  %v403 = vld [vmem:[#allocation3 + $0x130] sm:$0xff]
  %v404 = vld [vmem:[#allocation3 + $0x138] sm:$0xff]
  %v405 = vld [vmem:[#allocation3 + $0x140] sm:$0xff]
  %v406 = vld [vmem:[#allocation3 + $0x148] sm:$0xff]
  %v407 = vld [vmem:[#allocation3 + $0x150] sm:$0xff]
  %v408 = vld [vmem:[#allocation3 + $0x158] sm:$0xff]
  %v409 = vld [vmem:[#allocation3 + $0x160] sm:$0xff]
  %v410 = vld [vmem:[#allocation3 + $0x168] sm:$0xff]
  %v411 = vld [vmem:[#allocation3 + $0x170] sm:$0xff]
  %v412 = vld [vmem:[#allocation3 + $0x178] sm:$0xff]
  %v413 = vld [vmem:[#allocation3 + $0x180] sm:$0xff]
  %v414 = vld [vmem:[#allocation3 + $0x188] sm:$0xff]
  %v415 = vld [vmem:[#allocation3 + $0x190] sm:$0xff]
  %v416 = vld [vmem:[#allocation3 + $0x198] sm:$0xff]
  %v417 = vld [vmem:[#allocation3 + $0x1a0] sm:$0xff]
  %v418 = vld [vmem:[#allocation3 + $0x1a8] sm:$0xff]
  %v419 = vld [vmem:[#allocation3 + $0x1b0] sm:$0xff]
  %v420 = vld [vmem:[#allocation3 + $0x1b8] sm:$0xff]
  %v421 = vld [vmem:[#allocation3 + $0x1c0] sm:$0xff]
  %v422 = vld [vmem:[#allocation3 + $0x1c8] sm:$0xff]
  %v423 = vld [vmem:[#allocation3 + $0x1d0] sm:$0xff]
  %v424 = vld [vmem:[#allocation3 + $0x1d8] sm:$0xff]
  %v425 = vld [vmem:[#allocation3 + $0x1e0] sm:$0xff]
  %v426 = vld [vmem:[#allocation3 + $0x1e8] sm:$0xff]
  %v427 = vld [vmem:[#allocation3 + $0x1f0] sm:$0xff]
  %v428 = vld [vmem:[#allocation3 + $0x1f8] sm:$0xff]
  %v429 = vld [vmem:[%s5] sm:$0xf]
  %v430 = vpack.c.bf16 %v360, %v360
  %v431 = vpack.c.bf16 0.0, 0.0
  %v433 = vlaneseq
  %v434 = vshrl.u32 %v433, 7
  %v435 = vsub.s32 0, %v434
  %v436 = vrot.slane %v429, %v435
  %v437 = vlaneseq
  %v438 = vshrl.u32 %v437, 7
  %v439 = vsub.s32 1, %v438
  %v440 = vrot.slane %v429, %v439
  %v441 = vlaneseq
  %v442 = vshrl.u32 %v441, 7
  %v443 = vsub.s32 2, %v442
  %v444 = vrot.slane %v429, %v443
  %v445 = vlaneseq
  %v446 = vshrl.u32 %v445, 7
  %v447 = vsub.s32 3, %v446
  %v448 = vrot.slane %v429, %v447
  %v517 = vunpack.c.l.b16 %v365
  %v518 = vunpack.c.h.b16 %v365
  %v519 = vunpack.c.l.b16 %v366
  %v520 = vunpack.c.h.b16 %v366
  %v521 = vunpack.c.l.b16 %v367
  %v522 = vunpack.c.h.b16 %v367
  %v523 = vunpack.c.l.b16 %v368
  %v524 = vunpack.c.h.b16 %v368
  %v525 = vunpack.c.l.b16 %v369
  %v526 = vunpack.c.h.b16 %v369
  %v527 = vunpack.c.l.b16 %v370
  %v528 = vunpack.c.h.b16 %v370
  %v529 = vunpack.c.l.b16 %v371
  %v530 = vunpack.c.h.b16 %v371
  %v531 = vunpack.c.l.b16 %v372
  %v532 = vunpack.c.h.b16 %v372
  %v533 = vunpack.c.l.b16 %v373
  %v534 = vunpack.c.h.b16 %v373
  %v535 = vunpack.c.l.b16 %v374
  %v536 = vunpack.c.h.b16 %v374
  %v537 = vunpack.c.l.b16 %v375
  %v538 = vunpack.c.h.b16 %v375
  %v539 = vunpack.c.l.b16 %v376
  %v540 = vunpack.c.h.b16 %v376
  %v541 = vunpack.c.l.b16 %v377
  %v542 = vunpack.c.h.b16 %v377
  %v543 = vunpack.c.l.b16 %v378
  %v544 = vunpack.c.h.b16 %v378
  %v545 = vunpack.c.l.b16 %v379
  %v546 = vunpack.c.h.b16 %v379
  %v547 = vunpack.c.l.b16 %v380
  %v548 = vunpack.c.h.b16 %v380
  %v549 = vunpack.c.l.b16 %v381
  %v550 = vunpack.c.h.b16 %v381
  %v551 = vunpack.c.l.b16 %v382
  %v552 = vunpack.c.h.b16 %v382
  %v553 = vunpack.c.l.b16 %v383
  %v554 = vunpack.c.h.b16 %v383
  %v555 = vunpack.c.l.b16 %v384
  %v556 = vunpack.c.h.b16 %v384
  %v557 = vunpack.c.l.b16 %v385
  %v558 = vunpack.c.h.b16 %v385
  %v559 = vunpack.c.l.b16 %v386
  %v560 = vunpack.c.h.b16 %v386
  %v561 = vunpack.c.l.b16 %v387
  %v562 = vunpack.c.h.b16 %v387
  %v563 = vunpack.c.l.b16 %v388
  %v564 = vunpack.c.h.b16 %v388
  %v565 = vunpack.c.l.b16 %v389
  %v566 = vunpack.c.h.b16 %v389
  %v567 = vunpack.c.l.b16 %v390
  %v568 = vunpack.c.h.b16 %v390
  %v569 = vunpack.c.l.b16 %v391
  %v570 = vunpack.c.h.b16 %v391
  %v571 = vunpack.c.l.b16 %v392
  %v572 = vunpack.c.h.b16 %v392
  %v573 = vunpack.c.l.b16 %v393
  %v574 = vunpack.c.h.b16 %v393
  %v575 = vunpack.c.l.b16 %v394
  %v576 = vunpack.c.h.b16 %v394
  %v577 = vunpack.c.l.b16 %v395
  %v578 = vunpack.c.h.b16 %v395
  %v579 = vunpack.c.l.b16 %v396
  %v580 = vunpack.c.h.b16 %v396
  %v581 = vunpack.c.l.b16 %v397
  %v582 = vunpack.c.h.b16 %v397
  %v583 = vunpack.c.l.b16 %v398
  %v584 = vunpack.c.h.b16 %v398
  %v585 = vunpack.c.l.b16 %v399
  %v586 = vunpack.c.h.b16 %v399
  %v587 = vunpack.c.l.b16 %v400
  %v588 = vunpack.c.h.b16 %v400
  %v589 = vunpack.c.l.b16 %v401
  %v590 = vunpack.c.h.b16 %v401
  %v591 = vunpack.c.l.b16 %v402
  %v592 = vunpack.c.h.b16 %v402
  %v593 = vunpack.c.l.b16 %v403
  %v594 = vunpack.c.h.b16 %v403
  %v595 = vunpack.c.l.b16 %v404
  %v596 = vunpack.c.h.b16 %v404
  %v597 = vunpack.c.l.b16 %v405
  %v598 = vunpack.c.h.b16 %v405
  %v599 = vunpack.c.l.b16 %v406
  %v600 = vunpack.c.h.b16 %v406
  %v601 = vunpack.c.l.b16 %v407
  %v602 = vunpack.c.h.b16 %v407
  %v603 = vunpack.c.l.b16 %v408
  %v604 = vunpack.c.h.b16 %v408
  %v605 = vunpack.c.l.b16 %v409
  %v606 = vunpack.c.h.b16 %v409
  %v607 = vunpack.c.l.b16 %v410
  %v608 = vunpack.c.h.b16 %v410
  %v609 = vunpack.c.l.b16 %v411
  %v610 = vunpack.c.h.b16 %v411
  %v611 = vunpack.c.l.b16 %v412
  %v612 = vunpack.c.h.b16 %v412
  %v613 = vunpack.c.l.b16 %v413
  %v614 = vunpack.c.h.b16 %v413
  %v615 = vunpack.c.l.b16 %v414
  %v616 = vunpack.c.h.b16 %v414
  %v617 = vunpack.c.l.b16 %v415
  %v618 = vunpack.c.h.b16 %v415
  %v619 = vunpack.c.l.b16 %v416
  %v620 = vunpack.c.h.b16 %v416
  %v621 = vunpack.c.l.b16 %v417
  %v622 = vunpack.c.h.b16 %v417
  %v623 = vunpack.c.l.b16 %v418
  %v624 = vunpack.c.h.b16 %v418
  %v625 = vunpack.c.l.b16 %v419
  %v626 = vunpack.c.h.b16 %v419
  %v627 = vunpack.c.l.b16 %v420
  %v628 = vunpack.c.h.b16 %v420
  %v629 = vunpack.c.l.b16 %v421
  %v630 = vunpack.c.h.b16 %v421
  %v631 = vunpack.c.l.b16 %v422
  %v632 = vunpack.c.h.b16 %v422
  %v633 = vunpack.c.l.b16 %v423
  %v634 = vunpack.c.h.b16 %v423
  %v635 = vunpack.c.l.b16 %v424
  %v636 = vunpack.c.h.b16 %v424
  %v637 = vunpack.c.l.b16 %v425
  %v638 = vunpack.c.h.b16 %v425
  %v639 = vunpack.c.l.b16 %v426
  %v640 = vunpack.c.h.b16 %v426
  %v641 = vunpack.c.l.b16 %v427
  %v642 = vunpack.c.h.b16 %v427
  %v643 = vunpack.c.l.b16 %v428
  %v644 = vunpack.c.h.b16 %v428
  %v645 = vpack.c.b16 %v521, %v517
  %v646 = vpack.c.b16 %v522, %v518
  %v647 = vpack.c.b16 %v523, %v519
  %v648 = vpack.c.b16 %v524, %v520
  %v649 = vpack.c.b16 %v529, %v525
  %v650 = vpack.c.b16 %v530, %v526
  %v651 = vpack.c.b16 %v531, %v527
  %v652 = vpack.c.b16 %v532, %v528
  %v653 = vpack.c.b16 %v537, %v533
  %v654 = vpack.c.b16 %v538, %v534
  %v655 = vpack.c.b16 %v539, %v535
  %v656 = vpack.c.b16 %v540, %v536
  %v657 = vpack.c.b16 %v545, %v541
  %v658 = vpack.c.b16 %v546, %v542
  %v659 = vpack.c.b16 %v547, %v543
  %v660 = vpack.c.b16 %v548, %v544
  %v661 = vpack.c.b16 %v553, %v549
  %v662 = vpack.c.b16 %v554, %v550
  %v663 = vpack.c.b16 %v555, %v551
  %v664 = vpack.c.b16 %v556, %v552
  %v665 = vpack.c.b16 %v561, %v557
  %v666 = vpack.c.b16 %v562, %v558
  %v667 = vpack.c.b16 %v563, %v559
  %v668 = vpack.c.b16 %v564, %v560
  %v669 = vpack.c.b16 %v569, %v565
  %v670 = vpack.c.b16 %v570, %v566
  %v671 = vpack.c.b16 %v571, %v567
  %v672 = vpack.c.b16 %v572, %v568
  %v673 = vpack.c.b16 %v577, %v573
  %v674 = vpack.c.b16 %v578, %v574
  %v675 = vpack.c.b16 %v579, %v575
  %v676 = vpack.c.b16 %v580, %v576
  %v677 = vpack.c.b16 %v585, %v581
  %v678 = vpack.c.b16 %v586, %v582
  %v679 = vpack.c.b16 %v587, %v583
  %v680 = vpack.c.b16 %v588, %v584
  %v681 = vpack.c.b16 %v593, %v589
  %v682 = vpack.c.b16 %v594, %v590
  %v683 = vpack.c.b16 %v595, %v591
  %v684 = vpack.c.b16 %v596, %v592
  %v685 = vpack.c.b16 %v601, %v597
  %v686 = vpack.c.b16 %v602, %v598
  %v687 = vpack.c.b16 %v603, %v599
  %v688 = vpack.c.b16 %v604, %v600
  %v689 = vpack.c.b16 %v609, %v605
  %v690 = vpack.c.b16 %v610, %v606
  %v691 = vpack.c.b16 %v611, %v607
  %v692 = vpack.c.b16 %v612, %v608
  %v693 = vpack.c.b16 %v617, %v613
  %v694 = vpack.c.b16 %v618, %v614
  %v695 = vpack.c.b16 %v619, %v615
  %v696 = vpack.c.b16 %v620, %v616
  %v697 = vpack.c.b16 %v625, %v621
  %v698 = vpack.c.b16 %v626, %v622
  %v699 = vpack.c.b16 %v627, %v623
  %v700 = vpack.c.b16 %v628, %v624
  %v701 = vpack.c.b16 %v633, %v629
  %v702 = vpack.c.b16 %v634, %v630
  %v703 = vpack.c.b16 %v635, %v631
  %v704 = vpack.c.b16 %v636, %v632
  %v705 = vpack.c.b16 %v641, %v637
  %v706 = vpack.c.b16 %v642, %v638
  %v707 = vpack.c.b16 %v643, %v639
  %v708 = vpack.c.b16 %v644, %v640
  %773 = vmatprep.subr.bf16.mxu0 %v674
  %774 = vmatpush1.bf16.msra.mxu0 %v673
  %775 = vmatprep.subr.bf16.mxu0 %v670
  %776 = vmatpush1.bf16.msra.mxu0 %v669
  %777 = vmatprep.subr.bf16.mxu0 %v666
  %778 = vmatpush1.bf16.msra.mxu0 %v665
  %779 = vmatprep.subr.bf16.mxu0 %v662
  %780 = vmatpush1.bf16.msra.mxu0 %v661
  %781 = vmatprep.subr.bf16.mxu0 %v658
  %782 = vmatpush1.bf16.msra.mxu0 %v657
  %783 = vmatprep.subr.bf16.mxu0 %v654
  %784 = vmatpush1.bf16.msra.mxu0 %v653
  %785 = vmatprep.subr.bf16.mxu0 %v650
  %786 = vmatpush1.bf16.msra.mxu0 %v649
  %787 = vmatprep.subr.bf16.mxu0 %v646
  %788 = vmatpush1.bf16.msra.mxu0 %v645
  %789 = vmatprep.subr.bf16.mxu0 %v706
  %790 = vmatpush2.bf16.msra.mxu0 %v705
  %791 = vmatprep.subr.bf16.mxu0 %v702
  %792 = vmatpush2.bf16.msra.mxu0 %v701
  %793 = vmatprep.subr.bf16.mxu0 %v698
  %794 = vmatpush2.bf16.msra.mxu0 %v697
  %795 = vmatprep.subr.bf16.mxu0 %v694
  %796 = vmatpush2.bf16.msra.mxu0 %v693
  %797 = vmatprep.subr.bf16.mxu0 %v690
  %798 = vmatpush2.bf16.msra.mxu0 %v689
  %799 = vmatprep.subr.bf16.mxu0 %v686
  %800 = vmatpush2.bf16.msra.mxu0 %v685
  %801 = vmatprep.subr.bf16.mxu0 %v682
  %802 = vmatpush2.bf16.msra.mxu0 %v681
  %803 = vmatprep.subr.bf16.mxu0 %v678
  %804 = vmatpush2.bf16.msra.mxu0 %v677
  %805 = vmatprep.mubr.bf16.mxu0 %v431
  %806 = vmatmul.mubr.bf16.gmra.mxu0 %v430
  %v807 = vpop.f32.mrf.mxu0
  %v808 = vadd.f32 %v436, %v807
  %v809 = vpop.f32.mrf.mxu0
  %v810 = vadd.f32 %v440, %v809
  %v811 = vpop.f32.mrf.mxu0
  %v812 = vpop.f32.mrf.mxu0
  %813 = vdwg.mxu0
  %814 = vmatprep.subr.bf16.mxu0 %v676
  %815 = vmatpush1.bf16.msra.mxu0 %v675
  %816 = vmatprep.subr.bf16.mxu0 %v672
  %817 = vmatpush1.bf16.msra.mxu0 %v671
  %818 = vmatprep.subr.bf16.mxu0 %v668
  %819 = vmatpush1.bf16.msra.mxu0 %v667
  %820 = vmatprep.subr.bf16.mxu0 %v664
  %821 = vmatpush1.bf16.msra.mxu0 %v663
  %822 = vmatprep.subr.bf16.mxu0 %v660
  %823 = vmatpush1.bf16.msra.mxu0 %v659
  %824 = vmatprep.subr.bf16.mxu0 %v656
  %825 = vmatpush1.bf16.msra.mxu0 %v655
  %826 = vmatprep.subr.bf16.mxu0 %v652
  %827 = vmatpush1.bf16.msra.mxu0 %v651
  %828 = vmatprep.subr.bf16.mxu0 %v648
  %829 = vmatpush1.bf16.msra.mxu0 %v647
  %830 = vmatprep.subr.bf16.mxu0 %v708
  %831 = vmatpush2.bf16.msra.mxu0 %v707
  %832 = vmatprep.subr.bf16.mxu0 %v704
  %833 = vmatpush2.bf16.msra.mxu0 %v703
  %834 = vmatprep.subr.bf16.mxu0 %v700
  %835 = vmatpush2.bf16.msra.mxu0 %v699
  %836 = vmatprep.subr.bf16.mxu0 %v696
  %837 = vmatpush2.bf16.msra.mxu0 %v695
  %838 = vmatprep.subr.bf16.mxu0 %v692
  %839 = vmatpush2.bf16.msra.mxu0 %v691
  %840 = vmatprep.subr.bf16.mxu0 %v688
  %841 = vmatpush2.bf16.msra.mxu0 %v687
  %842 = vmatprep.subr.bf16.mxu0 %v684
  %843 = vmatpush2.bf16.msra.mxu0 %v683
  %844 = vmatprep.subr.bf16.mxu0 %v680
  %845 = vmatpush2.bf16.msra.mxu0 %v679
  %846 = vmatprep.mubr.bf16.mxu0 %v431
  %847 = vmatmul.mubr.bf16.gmra.mxu0 %v430
  %v848 = vpop.f32.mrf.mxu0
  %v849 = vadd.f32 %v444, %v848
  %v850 = vpop.f32.mrf.mxu0
  %v851 = vadd.f32 %v448, %v850
  %v852 = vpop.f32.mrf.mxu0
  %v853 = vpop.f32.mrf.mxu0
  %854 = vdwg.mxu0
  %v887 = vunpack.c.l.b16 %v305
  %v888 = vunpack.c.h.b16 %v305
  %v889 = vunpack.c.l.b16 %v306
  %v890 = vunpack.c.h.b16 %v306
  %v891 = vunpack.c.l.b16 %v307
  %v892 = vunpack.c.h.b16 %v307
  %v893 = vunpack.c.l.b16 %v308
  %v894 = vunpack.c.h.b16 %v308
  %v895 = vunpack.c.l.b16 %v309
  %v896 = vunpack.c.h.b16 %v309
  %v897 = vunpack.c.l.b16 %v310
  %v898 = vunpack.c.h.b16 %v310
  %v899 = vunpack.c.l.b16 %v311
  %v900 = vunpack.c.h.b16 %v311
  %v901 = vunpack.c.l.b16 %v312
  %v902 = vunpack.c.h.b16 %v312
  %v903 = vunpack.c.l.b16 %v313
  %v904 = vunpack.c.h.b16 %v313
  %v905 = vunpack.c.l.b16 %v314
  %v906 = vunpack.c.h.b16 %v314
  %v907 = vunpack.c.l.b16 %v315
  %v908 = vunpack.c.h.b16 %v315
  %v909 = vunpack.c.l.b16 %v316
  %v910 = vunpack.c.h.b16 %v316
  %v911 = vunpack.c.l.b16 %v317
  %v912 = vunpack.c.h.b16 %v317
  %v913 = vunpack.c.l.b16 %v318
  %v914 = vunpack.c.h.b16 %v318
  %v915 = vunpack.c.l.b16 %v319
  %v916 = vunpack.c.h.b16 %v319
  %v917 = vunpack.c.l.b16 %v320
  %v918 = vunpack.c.h.b16 %v320
  %v919 = vunpack.c.l.b16 %v321
  %v920 = vunpack.c.h.b16 %v321
  %v921 = vunpack.c.l.b16 %v322
  %v922 = vunpack.c.h.b16 %v322
  %v923 = vunpack.c.l.b16 %v323
  %v924 = vunpack.c.h.b16 %v323
  %v925 = vunpack.c.l.b16 %v324
  %v926 = vunpack.c.h.b16 %v324
  %v927 = vunpack.c.l.b16 %v325
  %v928 = vunpack.c.h.b16 %v325
  %v929 = vunpack.c.l.b16 %v326
  %v930 = vunpack.c.h.b16 %v326
  %v931 = vunpack.c.l.b16 %v327
  %v932 = vunpack.c.h.b16 %v327
  %v933 = vunpack.c.l.b16 %v328
  %v934 = vunpack.c.h.b16 %v328
  %v935 = vunpack.c.l.b16 %v329
  %v936 = vunpack.c.h.b16 %v329
  %v937 = vunpack.c.l.b16 %v330
  %v938 = vunpack.c.h.b16 %v330
  %v939 = vunpack.c.l.b16 %v331
  %v940 = vunpack.c.h.b16 %v331
  %v941 = vunpack.c.l.b16 %v332
  %v942 = vunpack.c.h.b16 %v332
  %v943 = vunpack.c.l.b16 %v333
  %v944 = vunpack.c.h.b16 %v333
  %v945 = vunpack.c.l.b16 %v334
  %v946 = vunpack.c.h.b16 %v334
  %v947 = vunpack.c.l.b16 %v335
  %v948 = vunpack.c.h.b16 %v335
  %v949 = vunpack.c.l.b16 %v336
  %v950 = vunpack.c.h.b16 %v336
  %v951 = vpack.c.b16 %v891, %v887
  %v952 = vpack.c.b16 %v892, %v888
  %v953 = vpack.c.b16 %v893, %v889
  %v954 = vpack.c.b16 %v894, %v890
  %v955 = vpack.c.b16 %v899, %v895
  %v956 = vpack.c.b16 %v900, %v896
  %v957 = vpack.c.b16 %v901, %v897
  %v958 = vpack.c.b16 %v902, %v898
  %v959 = vpack.c.b16 %v907, %v903
  %v960 = vpack.c.b16 %v908, %v904
  %v961 = vpack.c.b16 %v909, %v905
  %v962 = vpack.c.b16 %v910, %v906
  %v963 = vpack.c.b16 %v915, %v911
  %v964 = vpack.c.b16 %v916, %v912
  %v965 = vpack.c.b16 %v917, %v913
  %v966 = vpack.c.b16 %v918, %v914
  %v967 = vpack.c.b16 %v923, %v919
  %v968 = vpack.c.b16 %v924, %v920
  %v969 = vpack.c.b16 %v925, %v921
  %v970 = vpack.c.b16 %v926, %v922
  %v971 = vpack.c.b16 %v931, %v927
  %v972 = vpack.c.b16 %v932, %v928
  %v973 = vpack.c.b16 %v933, %v929
  %v974 = vpack.c.b16 %v934, %v930
  %v975 = vpack.c.b16 %v939, %v935
  %v976 = vpack.c.b16 %v940, %v936
  %v977 = vpack.c.b16 %v941, %v937
  %v978 = vpack.c.b16 %v942, %v938
  %v979 = vpack.c.b16 %v947, %v943
  %v980 = vpack.c.b16 %v948, %v944
  %v981 = vpack.c.b16 %v949, %v945
  %v982 = vpack.c.b16 %v950, %v946
  %1015 = vmatprep.subr.bf16.mxu0 %v980
  %1016 = vmatpush1.bf16.msra.mxu0 %v979
  %1017 = vmatprep.subr.bf16.mxu0 %v976
  %1018 = vmatpush1.bf16.msra.mxu0 %v975
  %1019 = vmatprep.subr.bf16.mxu0 %v972
  %1020 = vmatpush1.bf16.msra.mxu0 %v971
  %1021 = vmatprep.subr.bf16.mxu0 %v968
  %1022 = vmatpush1.bf16.msra.mxu0 %v967
  %1023 = vmatprep.subr.bf16.mxu0 %v964
  %1024 = vmatpush1.bf16.msra.mxu0 %v963
  %1025 = vmatprep.subr.bf16.mxu0 %v960
  %1026 = vmatpush1.bf16.msra.mxu0 %v959
  %1027 = vmatprep.subr.bf16.mxu0 %v956
  %1028 = vmatpush1.bf16.msra.mxu0 %v955
  %1029 = vmatprep.subr.bf16.mxu0 %v952
  %1030 = vmatpush1.bf16.msra.mxu0 %v951
  %1031 = vmatprep.subr.bf16.mxu0 0
  %1032 = vmatpush2.bf16.msra.mxu0 0
  %1033 = vmatprep.subr.bf16.mxu0 0
  %1034 = vmatpush2.bf16.msra.mxu0 0
  %1035 = vmatprep.subr.bf16.mxu0 0
  %1036 = vmatpush2.bf16.msra.mxu0 0
  %1037 = vmatprep.subr.bf16.mxu0 0
  %1038 = vmatpush2.bf16.msra.mxu0 0
  %1039 = vmatprep.subr.bf16.mxu0 0
  %1040 = vmatpush2.bf16.msra.mxu0 0
  %1041 = vmatprep.subr.bf16.mxu0 0
  %1042 = vmatpush2.bf16.msra.mxu0 0
  %1043 = vmatprep.subr.bf16.mxu0 0
  %1044 = vmatpush2.bf16.msra.mxu0 0
  %1045 = vmatprep.subr.bf16.mxu0 0
  %1046 = vmatpush2.bf16.msra.mxu0 0
  %1047 = vmatprep.mubr.bf16.mxu0 0
  %1048 = vmatmul.mubr.bf16.gmra.mxu0 %v430
  %v1049 = vpop.f32.mrf.mxu0
  %v1050 = vadd.f32 0.0, %v1049
  %v1051 = vpop.f32.mrf.mxu0
  %v1052 = vadd.f32 0.0, %v1051
  %v1053 = vpop.f32.mrf.mxu0
  %v1054 = vpop.f32.mrf.mxu0
  %1055 = vdwg.mxu0
  %1056 = vmatprep.subr.bf16.mxu0 %v982
  %1057 = vmatpush1.bf16.msra.mxu0 %v981
  %1058 = vmatprep.subr.bf16.mxu0 %v978
  %1059 = vmatpush1.bf16.msra.mxu0 %v977
  %1060 = vmatprep.subr.bf16.mxu0 %v974
  %1061 = vmatpush1.bf16.msra.mxu0 %v973
  %1062 = vmatprep.subr.bf16.mxu0 %v970
  %1063 = vmatpush1.bf16.msra.mxu0 %v969
  %1064 = vmatprep.subr.bf16.mxu0 %v966
  %1065 = vmatpush1.bf16.msra.mxu0 %v965
  %1066 = vmatprep.subr.bf16.mxu0 %v962
  %1067 = vmatpush1.bf16.msra.mxu0 %v961
  %1068 = vmatprep.subr.bf16.mxu0 %v958
  %1069 = vmatpush1.bf16.msra.mxu0 %v957
  %1070 = vmatprep.subr.bf16.mxu0 %v954
  %1071 = vmatpush1.bf16.msra.mxu0 %v953
  %1072 = vmatprep.subr.bf16.mxu0 0
  %1073 = vmatpush2.bf16.msra.mxu0 0
  %1074 = vmatprep.subr.bf16.mxu0 0
  %1075 = vmatpush2.bf16.msra.mxu0 0
  %1076 = vmatprep.subr.bf16.mxu0 0
  %1077 = vmatpush2.bf16.msra.mxu0 0
  %1078 = vmatprep.subr.bf16.mxu0 0
  %1079 = vmatpush2.bf16.msra.mxu0 0
  %1080 = vmatprep.subr.bf16.mxu0 0
  %1081 = vmatpush2.bf16.msra.mxu0 0
  %1082 = vmatprep.subr.bf16.mxu0 0
  %1083 = vmatpush2.bf16.msra.mxu0 0
  %1084 = vmatprep.subr.bf16.mxu0 0
  %1085 = vmatpush2.bf16.msra.mxu0 0
  %1086 = vmatprep.subr.bf16.mxu0 0
  %1087 = vmatpush2.bf16.msra.mxu0 0
  %1088 = vmatprep.mubr.bf16.mxu0 0
  %1089 = vmatmul.mubr.bf16.gmra.mxu0 %v430
  %v1090 = vpop.f32.mrf.mxu0
  %v1091 = vadd.f32 0.0, %v1090
  %v1092 = vpop.f32.mrf.mxu0
  %v1093 = vadd.f32 0.0, %v1092
  %v1094 = vpop.f32.mrf.mxu0
  %v1095 = vpop.f32.mrf.mxu0
  %1096 = vdwg.mxu0
  %v1097 = vadd.f32 %v198, %v1050
  %v1098 = vadd.f32 %v200, %v1052
  %v1099 = vadd.f32 %v271, %v1091
  %v1100 = vadd.f32 %v273, %v1093
  %v1101 = vxor.u32 %v808, 2147483648
  %v1102 = vxor.u32 %v810, 2147483648
  %v1103 = vmul.f32 %v1101, 1.442695
  %v1104 = vpow.pop %v1103
  %v1105 = vmul.f32 %v1102, 1.442695
  %v1106 = vpow.pop %v1105
  %v1107 = vadd.f32 %v1104, 1.0
  %v1108 = vadd.f32 %v1106, 1.0
  %v1109 = vrcp.pop %v1107
  %v1110 = vmul.f32 1.0, %v1109
  %v1111 = vrcp.pop %v1108
  %v1112 = vmul.f32 1.0, %v1111
  %v1113 = vtanh.pop %v849
  %v1114 = vxor.u32 %v851, 2147483648
  %v1115 = vmul.f32 %v1114, 1.442695
  %v1116 = vpow.pop %v1115
  %v1117 = vadd.f32 %v1116, 1.0
  %v1118 = vrcp.pop %v1117
  %v1119 = vmul.f32 1.0, %v1118
  %v1120 = vmul.f32 %v1112, 0.0
  %v1121 = vmul.f32 %v1110, %v1113
  %v1122 = vadd.f32 %v1120, %v1121
  %v1123 = vtanh.pop %v1122
  %v1124 = vmul.f32 %v1119, %v1123
  %1125 = vst [vmem:[#allocation2] sm:$0xff] %v1124
  %v1126 = vxor.u32 %v1097, 2147483648
  %v1127 = vxor.u32 %v1098, 2147483648
  %v1128 = vmul.f32 %v1126, 1.442695
  %v1129 = vpow.pop %v1128
  %v1130 = vmul.f32 %v1127, 1.442695
  %v1131 = vpow.pop %v1130
  %v1132 = vadd.f32 %v1129, 1.0
  %v1133 = vadd.f32 %v1131, 1.0
  %v1134 = vrcp.pop %v1132
  %v1135 = vmul.f32 1.0, %v1134
  %v1136 = vrcp.pop %v1133
  %v1137 = vmul.f32 1.0, %v1136
  %v1138 = vtanh.pop %v1099
  %v1139 = vxor.u32 %v1100, 2147483648
  %v1140 = vmul.f32 %v1139, 1.442695
  %v1141 = vpow.pop %v1140
  %v1142 = vadd.f32 %v1141, 1.0
  %v1143 = vrcp.pop %v1142
  %v1144 = vmul.f32 1.0, %v1143
  %v1145 = vmul.f32 %v1137, %v358
  %v1146 = vmul.f32 %v1135, %v1138
  %v1147 = vadd.f32 %v1145, %v1146
  %v1148 = vtanh.pop %v1147
  %v1149 = vmul.f32 %v1144, %v1148
  %v1150 = vpack.c.bf16 %v1149, %v1149
  %v1151 = vpack.c.bf16 %v1124, %v1124
  %1152 = vmatprep.subr.bf16.mxu0 %v674
  %1153 = vmatpush1.bf16.msra.mxu0 %v673
  %1154 = vmatprep.subr.bf16.mxu0 %v670
  %1155 = vmatpush1.bf16.msra.mxu0 %v669
  %1156 = vmatprep.subr.bf16.mxu0 %v666
  %1157 = vmatpush1.bf16.msra.mxu0 %v665
  %1158 = vmatprep.subr.bf16.mxu0 %v662
  %1159 = vmatpush1.bf16.msra.mxu0 %v661
  %1160 = vmatprep.subr.bf16.mxu0 %v658
  %1161 = vmatpush1.bf16.msra.mxu0 %v657
  %1162 = vmatprep.subr.bf16.mxu0 %v654
  %1163 = vmatpush1.bf16.msra.mxu0 %v653
  %1164 = vmatprep.subr.bf16.mxu0 %v650
  %1165 = vmatpush1.bf16.msra.mxu0 %v649
  %1166 = vmatprep.subr.bf16.mxu0 %v646
  %1167 = vmatpush1.bf16.msra.mxu0 %v645
  %1168 = vmatprep.subr.bf16.mxu0 %v706
  %1169 = vmatpush2.bf16.msra.mxu0 %v705
  %1170 = vmatprep.subr.bf16.mxu0 %v702
  %1171 = vmatpush2.bf16.msra.mxu0 %v701
  %1172 = vmatprep.subr.bf16.mxu0 %v698
  %1173 = vmatpush2.bf16.msra.mxu0 %v697
  %1174 = vmatprep.subr.bf16.mxu0 %v694
  %1175 = vmatpush2.bf16.msra.mxu0 %v693
  %1176 = vmatprep.subr.bf16.mxu0 %v690
  %1177 = vmatpush2.bf16.msra.mxu0 %v689
  %1178 = vmatprep.subr.bf16.mxu0 %v686
  %1179 = vmatpush2.bf16.msra.mxu0 %v685
  %1180 = vmatprep.subr.bf16.mxu0 %v682
  %1181 = vmatpush2.bf16.msra.mxu0 %v681
  %1182 = vmatprep.subr.bf16.mxu0 %v678
  %1183 = vmatpush2.bf16.msra.mxu0 %v677
  %1184 = vmatprep.mubr.bf16.mxu0 %v1151
  %1185 = vmatmul.mubr.bf16.gmra.mxu0 %v1150
  %v1186 = vpop.f32.mrf.mxu0
  %v1187 = vadd.f32 %v436, %v1186
  %v1188 = vpop.f32.mrf.mxu0
  %v1189 = vadd.f32 %v440, %v1188
  %v1190 = vpop.f32.mrf.mxu0
  %v1191 = vpop.f32.mrf.mxu0
  %1192 = vdwg.mxu0
  %1193 = vmatprep.subr.bf16.mxu0 %v676
  %1194 = vmatpush1.bf16.msra.mxu0 %v675
  %1195 = vmatprep.subr.bf16.mxu0 %v672
  %1196 = vmatpush1.bf16.msra.mxu0 %v671
  %1197 = vmatprep.subr.bf16.mxu0 %v668
  %1198 = vmatpush1.bf16.msra.mxu0 %v667
  %1199 = vmatprep.subr.bf16.mxu0 %v664
  %1200 = vmatpush1.bf16.msra.mxu0 %v663
  %1201 = vmatprep.subr.bf16.mxu0 %v660
  %1202 = vmatpush1.bf16.msra.mxu0 %v659
  %1203 = vmatprep.subr.bf16.mxu0 %v656
  %1204 = vmatpush1.bf16.msra.mxu0 %v655
  %1205 = vmatprep.subr.bf16.mxu0 %v652
  %1206 = vmatpush1.bf16.msra.mxu0 %v651
  %1207 = vmatprep.subr.bf16.mxu0 %v648
  %1208 = vmatpush1.bf16.msra.mxu0 %v647
  %1209 = vmatprep.subr.bf16.mxu0 %v708
  %1210 = vmatpush2.bf16.msra.mxu0 %v707
  %1211 = vmatprep.subr.bf16.mxu0 %v704
  %1212 = vmatpush2.bf16.msra.mxu0 %v703
  %1213 = vmatprep.subr.bf16.mxu0 %v700
  %1214 = vmatpush2.bf16.msra.mxu0 %v699
  %1215 = vmatprep.subr.bf16.mxu0 %v696
  %1216 = vmatpush2.bf16.msra.mxu0 %v695
  %1217 = vmatprep.subr.bf16.mxu0 %v692
  %1218 = vmatpush2.bf16.msra.mxu0 %v691
  %1219 = vmatprep.subr.bf16.mxu0 %v688
  %1220 = vmatpush2.bf16.msra.mxu0 %v687
  %1221 = vmatprep.subr.bf16.mxu0 %v684
  %1222 = vmatpush2.bf16.msra.mxu0 %v683
  %1223 = vmatprep.subr.bf16.mxu0 %v680
  %1224 = vmatpush2.bf16.msra.mxu0 %v679
  %1225 = vmatprep.mubr.bf16.mxu0 %v1151
  %1226 = vmatmul.mubr.bf16.gmra.mxu0 %v1150
  %v1227 = vpop.f32.mrf.mxu0
  %v1228 = vadd.f32 %v444, %v1227
  %v1229 = vpop.f32.mrf.mxu0
  %v1230 = vadd.f32 %v448, %v1229
  %v1231 = vpop.f32.mrf.mxu0
  %v1232 = vpop.f32.mrf.mxu0
  %1233 = vdwg.mxu0
  %1234 = vmatprep.subr.bf16.mxu0 %v980
  %1235 = vmatpush1.bf16.msra.mxu0 %v979
  %1236 = vmatprep.subr.bf16.mxu0 %v976
  %1237 = vmatpush1.bf16.msra.mxu0 %v975
  %1238 = vmatprep.subr.bf16.mxu0 %v972
  %1239 = vmatpush1.bf16.msra.mxu0 %v971
  %1240 = vmatprep.subr.bf16.mxu0 %v968
  %1241 = vmatpush1.bf16.msra.mxu0 %v967
  %1242 = vmatprep.subr.bf16.mxu0 %v964
  %1243 = vmatpush1.bf16.msra.mxu0 %v963
  %1244 = vmatprep.subr.bf16.mxu0 %v960
  %1245 = vmatpush1.bf16.msra.mxu0 %v959
  %1246 = vmatprep.subr.bf16.mxu0 %v956
  %1247 = vmatpush1.bf16.msra.mxu0 %v955
  %1248 = vmatprep.subr.bf16.mxu0 %v952
  %1249 = vmatpush1.bf16.msra.mxu0 %v951
  %1250 = vmatprep.subr.bf16.mxu0 0
  %1251 = vmatpush2.bf16.msra.mxu0 0
  %1252 = vmatprep.subr.bf16.mxu0 0
  %1253 = vmatpush2.bf16.msra.mxu0 0
  %1254 = vmatprep.subr.bf16.mxu0 0
  %1255 = vmatpush2.bf16.msra.mxu0 0
  %1256 = vmatprep.subr.bf16.mxu0 0
  %1257 = vmatpush2.bf16.msra.mxu0 0
  %1258 = vmatprep.subr.bf16.mxu0 0
  %1259 = vmatpush2.bf16.msra.mxu0 0
  %1260 = vmatprep.subr.bf16.mxu0 0
  %1261 = vmatpush2.bf16.msra.mxu0 0
  %1262 = vmatprep.subr.bf16.mxu0 0
  %1263 = vmatpush2.bf16.msra.mxu0 0
  %1264 = vmatprep.subr.bf16.mxu0 0
  %1265 = vmatpush2.bf16.msra.mxu0 0
  %1266 = vmatprep.mubr.bf16.mxu0 0
  %1267 = vmatmul.mubr.bf16.gmra.mxu0 %v1150
  %v1268 = vpop.f32.mrf.mxu0
  %v1269 = vadd.f32 0.0, %v1268
  %v1270 = vpop.f32.mrf.mxu0
  %v1271 = vadd.f32 0.0, %v1270
  %v1272 = vpop.f32.mrf.mxu0
  %v1273 = vpop.f32.mrf.mxu0
  %1274 = vdwg.mxu0
  %1275 = vmatprep.subr.bf16.mxu0 %v982
  %1276 = vmatpush1.bf16.msra.mxu0 %v981
  %1277 = vmatprep.subr.bf16.mxu0 %v978
  %1278 = vmatpush1.bf16.msra.mxu0 %v977
  %1279 = vmatprep.subr.bf16.mxu0 %v974
  %1280 = vmatpush1.bf16.msra.mxu0 %v973
  %1281 = vmatprep.subr.bf16.mxu0 %v970
  %1282 = vmatpush1.bf16.msra.mxu0 %v969
  %1283 = vmatprep.subr.bf16.mxu0 %v966
  %1284 = vmatpush1.bf16.msra.mxu0 %v965
  %1285 = vmatprep.subr.bf16.mxu0 %v962
  %1286 = vmatpush1.bf16.msra.mxu0 %v961
  %1287 = vmatprep.subr.bf16.mxu0 %v958
  %1288 = vmatpush1.bf16.msra.mxu0 %v957
  %1289 = vmatprep.subr.bf16.mxu0 %v954
  %1290 = vmatpush1.bf16.msra.mxu0 %v953
  %1291 = vmatprep.subr.bf16.mxu0 0
  %1292 = vmatpush2.bf16.msra.mxu0 0
  %1293 = vmatprep.subr.bf16.mxu0 0
  %1294 = vmatpush2.bf16.msra.mxu0 0
  %1295 = vmatprep.subr.bf16.mxu0 0
  %1296 = vmatpush2.bf16.msra.mxu0 0
  %1297 = vmatprep.subr.bf16.mxu0 0
  %1298 = vmatpush2.bf16.msra.mxu0 0
  %1299 = vmatprep.subr.bf16.mxu0 0
  %1300 = vmatpush2.bf16.msra.mxu0 0
  %1301 = vmatprep.subr.bf16.mxu0 0
  %1302 = vmatpush2.bf16.msra.mxu0 0
  %1303 = vmatprep.subr.bf16.mxu0 0
  %1304 = vmatpush2.bf16.msra.mxu0 0
  %1305 = vmatprep.subr.bf16.mxu0 0
  %1306 = vmatpush2.bf16.msra.mxu0 0
  %1307 = vmatprep.mubr.bf16.mxu0 0
  %1308 = vmatmul.mubr.bf16.gmra.mxu0 %v1150
  %v1309 = vpop.f32.mrf.mxu0
  %v1310 = vadd.f32 0.0, %v1309
  %v1311 = vpop.f32.mrf.mxu0
  %v1312 = vadd.f32 0.0, %v1311
  %v1313 = vpop.f32.mrf.mxu0
  %v1314 = vpop.f32.mrf.mxu0
  %1315 = vdwg.mxu0
  %v1316 = vadd.f32 %v204, %v1269
  %v1317 = vadd.f32 %v206, %v1271
  %v1318 = vadd.f32 %v277, %v1310
  %v1319 = vadd.f32 %v279, %v1312
  %v1320 = vxor.u32 %v1187, 2147483648
  %v1321 = vxor.u32 %v1189, 2147483648
  %v1322 = vmul.f32 %v1320, 1.442695
  %v1323 = vpow.pop %v1322
  %v1324 = vmul.f32 %v1321, 1.442695
  %v1325 = vpow.pop %v1324
  %v1326 = vadd.f32 %v1323, 1.0
  %v1327 = vadd.f32 %v1325, 1.0
  %v1328 = vrcp.pop %v1326
  %v1329 = vmul.f32 1.0, %v1328
  %v1330 = vrcp.pop %v1327
  %v1331 = vmul.f32 1.0, %v1330
  %v1332 = vtanh.pop %v1228
  %v1333 = vxor.u32 %v1230, 2147483648
  %v1334 = vmul.f32 %v1333, 1.442695
  %v1335 = vpow.pop %v1334
  %v1336 = vadd.f32 %v1335, 1.0
  %v1337 = vrcp.pop %v1336
  %v1338 = vmul.f32 1.0, %v1337
  %v1339 = vmul.f32 %v1331, %v1122
  %v1340 = vmul.f32 %v1329, %v1332
  %v1341 = vadd.f32 %v1339, %v1340
  %v1342 = vtanh.pop %v1341
  %v1343 = vmul.f32 %v1338, %v1342
  %s1344 = scalar_lea.vmem [#allocation2], 8
  %1345 = vst [vmem:[%s1344] sm:$0xff] %v1343
  %v1346 = vxor.u32 %v1316, 2147483648
  %v1347 = vxor.u32 %v1317, 2147483648
  %v1348 = vmul.f32 %v1346, 1.442695
  %v1349 = vpow.pop %v1348
  %v1350 = vmul.f32 %v1347, 1.442695
  %v1351 = vpow.pop %v1350
  %v1352 = vadd.f32 %v1349, 1.0
  %v1353 = vadd.f32 %v1351, 1.0
  %v1354 = vrcp.pop %v1352
  %v1355 = vmul.f32 1.0, %v1354
  %v1356 = vrcp.pop %v1353
  %v1357 = vmul.f32 1.0, %v1356
  %v1358 = vtanh.pop %v1318
  %v1359 = vxor.u32 %v1319, 2147483648
  %v1360 = vmul.f32 %v1359, 1.442695
  %v1361 = vpow.pop %v1360
  %v1362 = vadd.f32 %v1361, 1.0
  %v1363 = vrcp.pop %v1362
  %v1364 = vmul.f32 1.0, %v1363
  %v1365 = vmul.f32 %v1357, %v1147
  %v1366 = vmul.f32 %v1355, %v1358
  %v1367 = vadd.f32 %v1365, %v1366
  %v1368 = vtanh.pop %v1367
  %v1369 = vmul.f32 %v1364, %v1368
  %v1370 = vpack.c.bf16 %v1369, %v1369
  %v1371 = vpack.c.bf16 %v1343, %v1343
  %1372 = vmatprep.subr.bf16.mxu0 %v674
  %1373 = vmatpush1.bf16.msra.mxu0 %v673
  %1374 = vmatprep.subr.bf16.mxu0 %v670
  %1375 = vmatpush1.bf16.msra.mxu0 %v669
  %1376 = vmatprep.subr.bf16.mxu0 %v666
  %1377 = vmatpush1.bf16.msra.mxu0 %v665
  %1378 = vmatprep.subr.bf16.mxu0 %v662
  %1379 = vmatpush1.bf16.msra.mxu0 %v661
  %1380 = vmatprep.subr.bf16.mxu0 %v658
  %1381 = vmatpush1.bf16.msra.mxu0 %v657
  %1382 = vmatprep.subr.bf16.mxu0 %v654
  %1383 = vmatpush1.bf16.msra.mxu0 %v653
  %1384 = vmatprep.subr.bf16.mxu0 %v650
  %1385 = vmatpush1.bf16.msra.mxu0 %v649
  %1386 = vmatprep.subr.bf16.mxu0 %v646
  %1387 = vmatpush1.bf16.msra.mxu0 %v645
  %1388 = vmatprep.subr.bf16.mxu0 %v706
  %1389 = vmatpush2.bf16.msra.mxu0 %v705
  %1390 = vmatprep.subr.bf16.mxu0 %v702
  %1391 = vmatpush2.bf16.msra.mxu0 %v701
  %1392 = vmatprep.subr.bf16.mxu0 %v698
  %1393 = vmatpush2.bf16.msra.mxu0 %v697
  %1394 = vmatprep.subr.bf16.mxu0 %v694
  %1395 = vmatpush2.bf16.msra.mxu0 %v693
  %1396 = vmatprep.subr.bf16.mxu0 %v690
  %1397 = vmatpush2.bf16.msra.mxu0 %v689
  %1398 = vmatprep.subr.bf16.mxu0 %v686
  %1399 = vmatpush2.bf16.msra.mxu0 %v685
  %1400 = vmatprep.subr.bf16.mxu0 %v682
  %1401 = vmatpush2.bf16.msra.mxu0 %v681
  %1402 = vmatprep.subr.bf16.mxu0 %v678
  %1403 = vmatpush2.bf16.msra.mxu0 %v677
  %1404 = vmatprep.mubr.bf16.mxu0 %v1371
  %1405 = vmatmul.mubr.bf16.gmra.mxu0 %v1370
  %v1406 = vpop.f32.mrf.mxu0
  %v1407 = vadd.f32 %v436, %v1406
  %v1408 = vpop.f32.mrf.mxu0
  %v1409 = vadd.f32 %v440, %v1408
  %v1410 = vpop.f32.mrf.mxu0
  %v1411 = vpop.f32.mrf.mxu0
  %1412 = vdwg.mxu0
  %1413 = vmatprep.subr.bf16.mxu0 %v676
  %1414 = vmatpush1.bf16.msra.mxu0 %v675
  %1415 = vmatprep.subr.bf16.mxu0 %v672
  %1416 = vmatpush1.bf16.msra.mxu0 %v671
  %1417 = vmatprep.subr.bf16.mxu0 %v668
  %1418 = vmatpush1.bf16.msra.mxu0 %v667
  %1419 = vmatprep.subr.bf16.mxu0 %v664
  %1420 = vmatpush1.bf16.msra.mxu0 %v663
  %1421 = vmatprep.subr.bf16.mxu0 %v660
  %1422 = vmatpush1.bf16.msra.mxu0 %v659
  %1423 = vmatprep.subr.bf16.mxu0 %v656
  %1424 = vmatpush1.bf16.msra.mxu0 %v655
  %1425 = vmatprep.subr.bf16.mxu0 %v652
  %1426 = vmatpush1.bf16.msra.mxu0 %v651
  %1427 = vmatprep.subr.bf16.mxu0 %v648
  %1428 = vmatpush1.bf16.msra.mxu0 %v647
  %1429 = vmatprep.subr.bf16.mxu0 %v708
  %1430 = vmatpush2.bf16.msra.mxu0 %v707
  %1431 = vmatprep.subr.bf16.mxu0 %v704
  %1432 = vmatpush2.bf16.msra.mxu0 %v703
  %1433 = vmatprep.subr.bf16.mxu0 %v700
  %1434 = vmatpush2.bf16.msra.mxu0 %v699
  %1435 = vmatprep.subr.bf16.mxu0 %v696
  %1436 = vmatpush2.bf16.msra.mxu0 %v695
  %1437 = vmatprep.subr.bf16.mxu0 %v692
  %1438 = vmatpush2.bf16.msra.mxu0 %v691
  %1439 = vmatprep.subr.bf16.mxu0 %v688
  %1440 = vmatpush2.bf16.msra.mxu0 %v687
  %1441 = vmatprep.subr.bf16.mxu0 %v684
  %1442 = vmatpush2.bf16.msra.mxu0 %v683
  %1443 = vmatprep.subr.bf16.mxu0 %v680
  %1444 = vmatpush2.bf16.msra.mxu0 %v679
  %1445 = vmatprep.mubr.bf16.mxu0 %v1371
  %1446 = vmatmul.mubr.bf16.gmra.mxu0 %v1370
  %v1447 = vpop.f32.mrf.mxu0
  %v1448 = vadd.f32 %v444, %v1447
  %v1449 = vpop.f32.mrf.mxu0
  %v1450 = vadd.f32 %v448, %v1449
  %v1451 = vpop.f32.mrf.mxu0
  %v1452 = vpop.f32.mrf.mxu0
  %1453 = vdwg.mxu0
  %1454 = vmatprep.subr.bf16.mxu0 %v980
  %1455 = vmatpush1.bf16.msra.mxu0 %v979
  %1456 = vmatprep.subr.bf16.mxu0 %v976
  %1457 = vmatpush1.bf16.msra.mxu0 %v975
  %1458 = vmatprep.subr.bf16.mxu0 %v972
  %1459 = vmatpush1.bf16.msra.mxu0 %v971
  %1460 = vmatprep.subr.bf16.mxu0 %v968
  %1461 = vmatpush1.bf16.msra.mxu0 %v967
  %1462 = vmatprep.subr.bf16.mxu0 %v964
  %1463 = vmatpush1.bf16.msra.mxu0 %v963
  %1464 = vmatprep.subr.bf16.mxu0 %v960
  %1465 = vmatpush1.bf16.msra.mxu0 %v959
  %1466 = vmatprep.subr.bf16.mxu0 %v956
  %1467 = vmatpush1.bf16.msra.mxu0 %v955
  %1468 = vmatprep.subr.bf16.mxu0 %v952
  %1469 = vmatpush1.bf16.msra.mxu0 %v951
  %1470 = vmatprep.subr.bf16.mxu0 0
  %1471 = vmatpush2.bf16.msra.mxu0 0
  %1472 = vmatprep.subr.bf16.mxu0 0
  %1473 = vmatpush2.bf16.msra.mxu0 0
  %1474 = vmatprep.subr.bf16.mxu0 0
  %1475 = vmatpush2.bf16.msra.mxu0 0
  %1476 = vmatprep.subr.bf16.mxu0 0
  %1477 = vmatpush2.bf16.msra.mxu0 0
  %1478 = vmatprep.subr.bf16.mxu0 0
  %1479 = vmatpush2.bf16.msra.mxu0 0
  %1480 = vmatprep.subr.bf16.mxu0 0
  %1481 = vmatpush2.bf16.msra.mxu0 0
  %1482 = vmatprep.subr.bf16.mxu0 0
  %1483 = vmatpush2.bf16.msra.mxu0 0
  %1484 = vmatprep.subr.bf16.mxu0 0
  %1485 = vmatpush2.bf16.msra.mxu0 0
  %1486 = vmatprep.mubr.bf16.mxu0 0
  %1487 = vmatmul.mubr.bf16.gmra.mxu0 %v1370
  %v1488 = vpop.f32.mrf.mxu0
  %v1489 = vadd.f32 0.0, %v1488
  %v1490 = vpop.f32.mrf.mxu0
  %v1491 = vadd.f32 0.0, %v1490
  %v1492 = vpop.f32.mrf.mxu0
  %v1493 = vpop.f32.mrf.mxu0
  %1494 = vdwg.mxu0
  %1495 = vmatprep.subr.bf16.mxu0 %v982
  %1496 = vmatpush1.bf16.msra.mxu0 %v981
  %1497 = vmatprep.subr.bf16.mxu0 %v978
  %1498 = vmatpush1.bf16.msra.mxu0 %v977
  %1499 = vmatprep.subr.bf16.mxu0 %v974
  %1500 = vmatpush1.bf16.msra.mxu0 %v973
  %1501 = vmatprep.subr.bf16.mxu0 %v970
  %1502 = vmatpush1.bf16.msra.mxu0 %v969
  %1503 = vmatprep.subr.bf16.mxu0 %v966
  %1504 = vmatpush1.bf16.msra.mxu0 %v965
  %1505 = vmatprep.subr.bf16.mxu0 %v962
  %1506 = vmatpush1.bf16.msra.mxu0 %v961
  %1507 = vmatprep.subr.bf16.mxu0 %v958
  %1508 = vmatpush1.bf16.msra.mxu0 %v957
  %1509 = vmatprep.subr.bf16.mxu0 %v954
  %1510 = vmatpush1.bf16.msra.mxu0 %v953
  %1511 = vmatprep.subr.bf16.mxu0 0
  %1512 = vmatpush2.bf16.msra.mxu0 0
  %1513 = vmatprep.subr.bf16.mxu0 0
  %1514 = vmatpush2.bf16.msra.mxu0 0
  %1515 = vmatprep.subr.bf16.mxu0 0
  %1516 = vmatpush2.bf16.msra.mxu0 0
  %1517 = vmatprep.subr.bf16.mxu0 0
  %1518 = vmatpush2.bf16.msra.mxu0 0
  %1519 = vmatprep.subr.bf16.mxu0 0
  %1520 = vmatpush2.bf16.msra.mxu0 0
  %1521 = vmatprep.subr.bf16.mxu0 0
  %1522 = vmatpush2.bf16.msra.mxu0 0
  %1523 = vmatprep.subr.bf16.mxu0 0
  %1524 = vmatpush2.bf16.msra.mxu0 0
  %1525 = vmatprep.subr.bf16.mxu0 0
  %1526 = vmatpush2.bf16.msra.mxu0 0
  %1527 = vmatprep.mubr.bf16.mxu0 0
  %1528 = vmatmul.mubr.bf16.gmra.mxu0 %v1370
  %v1529 = vpop.f32.mrf.mxu0
  %v1530 = vadd.f32 0.0, %v1529
  %v1531 = vpop.f32.mrf.mxu0
  %v1532 = vadd.f32 0.0, %v1531
  %v1533 = vpop.f32.mrf.mxu0
  %v1534 = vpop.f32.mrf.mxu0
  %1535 = vdwg.mxu0
  %v1536 = vadd.f32 %v208, %v1489
  %v1537 = vadd.f32 %v210, %v1491
  %v1538 = vadd.f32 %v281, %v1530
  %v1539 = vadd.f32 %v283, %v1532
  %v1540 = vxor.u32 %v1407, 2147483648
  %v1541 = vxor.u32 %v1409, 2147483648
  %v1542 = vmul.f32 %v1540, 1.442695
  %v1543 = vpow.pop %v1542
  %v1544 = vmul.f32 %v1541, 1.442695
  %v1545 = vpow.pop %v1544
  %v1546 = vadd.f32 %v1543, 1.0
  %v1547 = vadd.f32 %v1545, 1.0
  %v1548 = vrcp.pop %v1546
  %v1549 = vmul.f32 1.0, %v1548
  %v1550 = vrcp.pop %v1547
  %v1551 = vmul.f32 1.0, %v1550
  %v1552 = vtanh.pop %v1448
  %v1553 = vxor.u32 %v1450, 2147483648
  %v1554 = vmul.f32 %v1553, 1.442695
  %v1555 = vpow.pop %v1554
  %v1556 = vadd.f32 %v1555, 1.0
  %v1557 = vrcp.pop %v1556
  %v1558 = vmul.f32 1.0, %v1557
  %v1559 = vmul.f32 %v1551, %v1341
  %v1560 = vmul.f32 %v1549, %v1552
  %v1561 = vadd.f32 %v1559, %v1560
  %v1562 = vtanh.pop %v1561
  %v1563 = vmul.f32 %v1558, %v1562
  %s1564 = scalar_lea.vmem [#allocation2], 16
  %1565 = vst [vmem:[%s1564] sm:$0xff] %v1563
  %v1566 = vxor.u32 %v1536, 2147483648
  %v1567 = vxor.u32 %v1537, 2147483648
  %v1568 = vmul.f32 %v1566, 1.442695
  %v1569 = vpow.pop %v1568
  %v1570 = vmul.f32 %v1567, 1.442695
  %v1571 = vpow.pop %v1570
  %v1572 = vadd.f32 %v1569, 1.0
  %v1573 = vadd.f32 %v1571, 1.0
  %v1574 = vrcp.pop %v1572
  %v1575 = vmul.f32 1.0, %v1574
  %v1576 = vrcp.pop %v1573
  %v1577 = vmul.f32 1.0, %v1576
  %v1578 = vtanh.pop %v1538
  %v1579 = vxor.u32 %v1539, 2147483648
  %v1580 = vmul.f32 %v1579, 1.442695
  %v1581 = vpow.pop %v1580
  %v1582 = vadd.f32 %v1581, 1.0
  %v1583 = vrcp.pop %v1582
  %v1584 = vmul.f32 1.0, %v1583
  %v1585 = vmul.f32 %v1577, %v1367
  %v1586 = vmul.f32 %v1575, %v1578
  %v1587 = vadd.f32 %v1585, %v1586
  %v1588 = vtanh.pop %v1587
  %v1589 = vmul.f32 %v1584, %v1588
  %v1590 = vpack.c.bf16 %v1589, %v1589
  %v1591 = vpack.c.bf16 %v1563, %v1563
  %1592 = vmatprep.subr.bf16.mxu0 %v674
  %1593 = vmatpush1.bf16.msra.mxu0 %v673
  %1594 = vmatprep.subr.bf16.mxu0 %v670
  %1595 = vmatpush1.bf16.msra.mxu0 %v669
  %1596 = vmatprep.subr.bf16.mxu0 %v666
  %1597 = vmatpush1.bf16.msra.mxu0 %v665
  %1598 = vmatprep.subr.bf16.mxu0 %v662
  %1599 = vmatpush1.bf16.msra.mxu0 %v661
  %1600 = vmatprep.subr.bf16.mxu0 %v658
  %1601 = vmatpush1.bf16.msra.mxu0 %v657
  %1602 = vmatprep.subr.bf16.mxu0 %v654
  %1603 = vmatpush1.bf16.msra.mxu0 %v653
  %1604 = vmatprep.subr.bf16.mxu0 %v650
  %1605 = vmatpush1.bf16.msra.mxu0 %v649
  %1606 = vmatprep.subr.bf16.mxu0 %v646
  %1607 = vmatpush1.bf16.msra.mxu0 %v645
  %1608 = vmatprep.subr.bf16.mxu0 %v706
  %1609 = vmatpush2.bf16.msra.mxu0 %v705
  %1610 = vmatprep.subr.bf16.mxu0 %v702
  %1611 = vmatpush2.bf16.msra.mxu0 %v701
  %1612 = vmatprep.subr.bf16.mxu0 %v698
  %1613 = vmatpush2.bf16.msra.mxu0 %v697
  %1614 = vmatprep.subr.bf16.mxu0 %v694
  %1615 = vmatpush2.bf16.msra.mxu0 %v693
  %1616 = vmatprep.subr.bf16.mxu0 %v690
  %1617 = vmatpush2.bf16.msra.mxu0 %v689
  %1618 = vmatprep.subr.bf16.mxu0 %v686
  %1619 = vmatpush2.bf16.msra.mxu0 %v685
  %1620 = vmatprep.subr.bf16.mxu0 %v682
  %1621 = vmatpush2.bf16.msra.mxu0 %v681
  %1622 = vmatprep.subr.bf16.mxu0 %v678
  %1623 = vmatpush2.bf16.msra.mxu0 %v677
  %1624 = vmatprep.mubr.bf16.mxu0 %v1591
  %1625 = vmatmul.mubr.bf16.gmra.mxu0 %v1590
  %v1626 = vpop.f32.mrf.mxu0
  %v1627 = vadd.f32 %v436, %v1626
  %v1628 = vpop.f32.mrf.mxu0
  %v1629 = vadd.f32 %v440, %v1628
  %v1630 = vpop.f32.mrf.mxu0
  %v1631 = vpop.f32.mrf.mxu0
  %1632 = vdwg.mxu0
  %1633 = vmatprep.subr.bf16.mxu0 %v676
  %1634 = vmatpush1.bf16.msra.mxu0 %v675
  %1635 = vmatprep.subr.bf16.mxu0 %v672
  %1636 = vmatpush1.bf16.msra.mxu0 %v671
  %1637 = vmatprep.subr.bf16.mxu0 %v668
  %1638 = vmatpush1.bf16.msra.mxu0 %v667
  %1639 = vmatprep.subr.bf16.mxu0 %v664
  %1640 = vmatpush1.bf16.msra.mxu0 %v663
  %1641 = vmatprep.subr.bf16.mxu0 %v660
  %1642 = vmatpush1.bf16.msra.mxu0 %v659
  %1643 = vmatprep.subr.bf16.mxu0 %v656
  %1644 = vmatpush1.bf16.msra.mxu0 %v655
  %1645 = vmatprep.subr.bf16.mxu0 %v652
  %1646 = vmatpush1.bf16.msra.mxu0 %v651
  %1647 = vmatprep.subr.bf16.mxu0 %v648
  %1648 = vmatpush1.bf16.msra.mxu0 %v647
  %1649 = vmatprep.subr.bf16.mxu0 %v708
  %1650 = vmatpush2.bf16.msra.mxu0 %v707
  %1651 = vmatprep.subr.bf16.mxu0 %v704
  %1652 = vmatpush2.bf16.msra.mxu0 %v703
  %1653 = vmatprep.subr.bf16.mxu0 %v700
  %1654 = vmatpush2.bf16.msra.mxu0 %v699
  %1655 = vmatprep.subr.bf16.mxu0 %v696
  %1656 = vmatpush2.bf16.msra.mxu0 %v695
  %1657 = vmatprep.subr.bf16.mxu0 %v692
  %1658 = vmatpush2.bf16.msra.mxu0 %v691
  %1659 = vmatprep.subr.bf16.mxu0 %v688
  %1660 = vmatpush2.bf16.msra.mxu0 %v687
  %1661 = vmatprep.subr.bf16.mxu0 %v684
  %1662 = vmatpush2.bf16.msra.mxu0 %v683
  %1663 = vmatprep.subr.bf16.mxu0 %v680
  %1664 = vmatpush2.bf16.msra.mxu0 %v679
  %1665 = vmatprep.mubr.bf16.mxu0 %v1591
  %1666 = vmatmul.mubr.bf16.gmra.mxu0 %v1590
  %v1667 = vpop.f32.mrf.mxu0
  %v1668 = vadd.f32 %v444, %v1667
  %v1669 = vpop.f32.mrf.mxu0
  %v1670 = vadd.f32 %v448, %v1669
  %v1671 = vpop.f32.mrf.mxu0
  %v1672 = vpop.f32.mrf.mxu0
  %1673 = vdwg.mxu0
  %1674 = vmatprep.subr.bf16.mxu0 %v980
  %1675 = vmatpush1.bf16.msra.mxu0 %v979
  %1676 = vmatprep.subr.bf16.mxu0 %v976
  %1677 = vmatpush1.bf16.msra.mxu0 %v975
  %1678 = vmatprep.subr.bf16.mxu0 %v972
  %1679 = vmatpush1.bf16.msra.mxu0 %v971
  %1680 = vmatprep.subr.bf16.mxu0 %v968
  %1681 = vmatpush1.bf16.msra.mxu0 %v967
  %1682 = vmatprep.subr.bf16.mxu0 %v964
  %1683 = vmatpush1.bf16.msra.mxu0 %v963
  %1684 = vmatprep.subr.bf16.mxu0 %v960
  %1685 = vmatpush1.bf16.msra.mxu0 %v959
  %1686 = vmatprep.subr.bf16.mxu0 %v956
  %1687 = vmatpush1.bf16.msra.mxu0 %v955
  %1688 = vmatprep.subr.bf16.mxu0 %v952
  %1689 = vmatpush1.bf16.msra.mxu0 %v951
  %1690 = vmatprep.subr.bf16.mxu0 0
  %1691 = vmatpush2.bf16.msra.mxu0 0
  %1692 = vmatprep.subr.bf16.mxu0 0
  %1693 = vmatpush2.bf16.msra.mxu0 0
  %1694 = vmatprep.subr.bf16.mxu0 0
  %1695 = vmatpush2.bf16.msra.mxu0 0
  %1696 = vmatprep.subr.bf16.mxu0 0
  %1697 = vmatpush2.bf16.msra.mxu0 0
  %1698 = vmatprep.subr.bf16.mxu0 0
  %1699 = vmatpush2.bf16.msra.mxu0 0
  %1700 = vmatprep.subr.bf16.mxu0 0
  %1701 = vmatpush2.bf16.msra.mxu0 0
  %1702 = vmatprep.subr.bf16.mxu0 0
  %1703 = vmatpush2.bf16.msra.mxu0 0
  %1704 = vmatprep.subr.bf16.mxu0 0
  %1705 = vmatpush2.bf16.msra.mxu0 0
  %1706 = vmatprep.mubr.bf16.mxu0 0
  %1707 = vmatmul.mubr.bf16.gmra.mxu0 %v1590
  %v1708 = vpop.f32.mrf.mxu0
  %v1709 = vadd.f32 0.0, %v1708
  %v1710 = vpop.f32.mrf.mxu0
  %v1711 = vadd.f32 0.0, %v1710
  %v1712 = vpop.f32.mrf.mxu0
  %v1713 = vpop.f32.mrf.mxu0
  %1714 = vdwg.mxu0
  %1715 = vmatprep.subr.bf16.mxu0 %v982
  %1716 = vmatpush1.bf16.msra.mxu0 %v981
  %1717 = vmatprep.subr.bf16.mxu0 %v978
  %1718 = vmatpush1.bf16.msra.mxu0 %v977
  %1719 = vmatprep.subr.bf16.mxu0 %v974
  %1720 = vmatpush1.bf16.msra.mxu0 %v973
  %1721 = vmatprep.subr.bf16.mxu0 %v970
  %1722 = vmatpush1.bf16.msra.mxu0 %v969
  %1723 = vmatprep.subr.bf16.mxu0 %v966
  %1724 = vmatpush1.bf16.msra.mxu0 %v965
  %1725 = vmatprep.subr.bf16.mxu0 %v962
  %1726 = vmatpush1.bf16.msra.mxu0 %v961
  %1727 = vmatprep.subr.bf16.mxu0 %v958
  %1728 = vmatpush1.bf16.msra.mxu0 %v957
  %1729 = vmatprep.subr.bf16.mxu0 %v954
  %1730 = vmatpush1.bf16.msra.mxu0 %v953
  %1731 = vmatprep.subr.bf16.mxu0 0
  %1732 = vmatpush2.bf16.msra.mxu0 0
  %1733 = vmatprep.subr.bf16.mxu0 0
  %1734 = vmatpush2.bf16.msra.mxu0 0
  %1735 = vmatprep.subr.bf16.mxu0 0
  %1736 = vmatpush2.bf16.msra.mxu0 0
  %1737 = vmatprep.subr.bf16.mxu0 0
  %1738 = vmatpush2.bf16.msra.mxu0 0
  %1739 = vmatprep.subr.bf16.mxu0 0
  %1740 = vmatpush2.bf16.msra.mxu0 0
  %1741 = vmatprep.subr.bf16.mxu0 0
  %1742 = vmatpush2.bf16.msra.mxu0 0
  %1743 = vmatprep.subr.bf16.mxu0 0
  %1744 = vmatpush2.bf16.msra.mxu0 0
  %1745 = vmatprep.subr.bf16.mxu0 0
  %1746 = vmatpush2.bf16.msra.mxu0 0
  %1747 = vmatprep.mubr.bf16.mxu0 0
  %1748 = vmatmul.mubr.bf16.gmra.mxu0 %v1590
  %v1749 = vpop.f32.mrf.mxu0
  %v1750 = vadd.f32 0.0, %v1749
  %v1751 = vpop.f32.mrf.mxu0
  %v1752 = vadd.f32 0.0, %v1751
  %v1753 = vpop.f32.mrf.mxu0
  %v1754 = vpop.f32.mrf.mxu0
  %1755 = vdwg.mxu0
  %v1756 = vadd.f32 %v214, %v1709
  %v1757 = vadd.f32 %v216, %v1711
  %v1758 = vadd.f32 %v287, %v1750
  %v1759 = vadd.f32 %v289, %v1752
  %v1760 = vxor.u32 %v1627, 2147483648
  %v1761 = vxor.u32 %v1629, 2147483648
  %v1762 = vmul.f32 %v1760, 1.442695
  %v1763 = vpow.pop %v1762
  %v1764 = vmul.f32 %v1761, 1.442695
  %v1765 = vpow.pop %v1764
  %v1766 = vadd.f32 %v1763, 1.0
  %v1767 = vadd.f32 %v1765, 1.0
  %v1768 = vrcp.pop %v1766
  %v1769 = vmul.f32 1.0, %v1768
  %v1770 = vrcp.pop %v1767
  %v1771 = vmul.f32 1.0, %v1770
  %v1772 = vtanh.pop %v1668
  %v1773 = vxor.u32 %v1670, 2147483648
  %v1774 = vmul.f32 %v1773, 1.442695
  %v1775 = vpow.pop %v1774
  %v1776 = vadd.f32 %v1775, 1.0
  %v1777 = vrcp.pop %v1776
  %v1778 = vmul.f32 1.0, %v1777
  %v1779 = vmul.f32 %v1771, %v1561
  %v1780 = vmul.f32 %v1769, %v1772
  %v1781 = vadd.f32 %v1779, %v1780
  %v1782 = vtanh.pop %v1781
  %v1783 = vmul.f32 %v1778, %v1782
  %s1784 = scalar_lea.vmem [#allocation2], 24
  %1785 = vst [vmem:[%s1784] sm:$0xff] %v1783
  %v1786 = vxor.u32 %v1756, 2147483648
  %v1787 = vxor.u32 %v1757, 2147483648
  %v1788 = vmul.f32 %v1786, 1.442695
  %v1789 = vpow.pop %v1788
  %v1790 = vmul.f32 %v1787, 1.442695
  %v1791 = vpow.pop %v1790
  %v1792 = vadd.f32 %v1789, 1.0
  %v1793 = vadd.f32 %v1791, 1.0
  %v1794 = vrcp.pop %v1792
  %v1795 = vmul.f32 1.0, %v1794
  %v1796 = vrcp.pop %v1793
  %v1797 = vmul.f32 1.0, %v1796
  %v1798 = vtanh.pop %v1758
  %v1799 = vxor.u32 %v1759, 2147483648
  %v1800 = vmul.f32 %v1799, 1.442695
  %v1801 = vpow.pop %v1800
  %v1802 = vadd.f32 %v1801, 1.0
  %v1803 = vrcp.pop %v1802
  %v1804 = vmul.f32 1.0, %v1803
  %v1805 = vmul.f32 %v1797, %v1587
  %v1806 = vmul.f32 %v1795, %v1798
  %v1807 = vadd.f32 %v1805, %v1806
  %v1808 = vtanh.pop %v1807
  %v1809 = vmul.f32 %v1804, %v1808
  %v1810 = vpack.c.bf16 %v1809, %v1809
  %v1811 = vpack.c.bf16 %v1783, %v1783
  %1812 = vmatprep.subr.bf16.mxu0 %v674
  %1813 = vmatpush1.bf16.msra.mxu0 %v673
  %1814 = vmatprep.subr.bf16.mxu0 %v670
  %1815 = vmatpush1.bf16.msra.mxu0 %v669
  %1816 = vmatprep.subr.bf16.mxu0 %v666
  %1817 = vmatpush1.bf16.msra.mxu0 %v665
  %1818 = vmatprep.subr.bf16.mxu0 %v662
  %1819 = vmatpush1.bf16.msra.mxu0 %v661
  %1820 = vmatprep.subr.bf16.mxu0 %v658
  %1821 = vmatpush1.bf16.msra.mxu0 %v657
  %1822 = vmatprep.subr.bf16.mxu0 %v654
  %1823 = vmatpush1.bf16.msra.mxu0 %v653
  %1824 = vmatprep.subr.bf16.mxu0 %v650
  %1825 = vmatpush1.bf16.msra.mxu0 %v649
  %1826 = vmatprep.subr.bf16.mxu0 %v646
  %1827 = vmatpush1.bf16.msra.mxu0 %v645
  %1828 = vmatprep.subr.bf16.mxu0 %v706
  %1829 = vmatpush2.bf16.msra.mxu0 %v705
  %1830 = vmatprep.subr.bf16.mxu0 %v702
  %1831 = vmatpush2.bf16.msra.mxu0 %v701
  %1832 = vmatprep.subr.bf16.mxu0 %v698
  %1833 = vmatpush2.bf16.msra.mxu0 %v697
  %1834 = vmatprep.subr.bf16.mxu0 %v694
  %1835 = vmatpush2.bf16.msra.mxu0 %v693
  %1836 = vmatprep.subr.bf16.mxu0 %v690
  %1837 = vmatpush2.bf16.msra.mxu0 %v689
  %1838 = vmatprep.subr.bf16.mxu0 %v686
  %1839 = vmatpush2.bf16.msra.mxu0 %v685
  %1840 = vmatprep.subr.bf16.mxu0 %v682
  %1841 = vmatpush2.bf16.msra.mxu0 %v681
  %1842 = vmatprep.subr.bf16.mxu0 %v678
  %1843 = vmatpush2.bf16.msra.mxu0 %v677
  %1844 = vmatprep.mubr.bf16.mxu0 %v1811
  %1845 = vmatmul.mubr.bf16.gmra.mxu0 %v1810
  %v1846 = vpop.f32.mrf.mxu0
  %v1847 = vadd.f32 %v436, %v1846
  %v1848 = vpop.f32.mrf.mxu0
  %v1849 = vadd.f32 %v440, %v1848
  %v1850 = vpop.f32.mrf.mxu0
  %v1851 = vpop.f32.mrf.mxu0
  %1852 = vdwg.mxu0
  %1853 = vmatprep.subr.bf16.mxu0 %v676
  %1854 = vmatpush1.bf16.msra.mxu0 %v675
  %1855 = vmatprep.subr.bf16.mxu0 %v672
  %1856 = vmatpush1.bf16.msra.mxu0 %v671
  %1857 = vmatprep.subr.bf16.mxu0 %v668
  %1858 = vmatpush1.bf16.msra.mxu0 %v667
  %1859 = vmatprep.subr.bf16.mxu0 %v664
  %1860 = vmatpush1.bf16.msra.mxu0 %v663
  %1861 = vmatprep.subr.bf16.mxu0 %v660
  %1862 = vmatpush1.bf16.msra.mxu0 %v659
  %1863 = vmatprep.subr.bf16.mxu0 %v656
  %1864 = vmatpush1.bf16.msra.mxu0 %v655
  %1865 = vmatprep.subr.bf16.mxu0 %v652
  %1866 = vmatpush1.bf16.msra.mxu0 %v651
  %1867 = vmatprep.subr.bf16.mxu0 %v648
  %1868 = vmatpush1.bf16.msra.mxu0 %v647
  %1869 = vmatprep.subr.bf16.mxu0 %v708
  %1870 = vmatpush2.bf16.msra.mxu0 %v707
  %1871 = vmatprep.subr.bf16.mxu0 %v704
  %1872 = vmatpush2.bf16.msra.mxu0 %v703
  %1873 = vmatprep.subr.bf16.mxu0 %v700
  %1874 = vmatpush2.bf16.msra.mxu0 %v699
  %1875 = vmatprep.subr.bf16.mxu0 %v696
  %1876 = vmatpush2.bf16.msra.mxu0 %v695
  %1877 = vmatprep.subr.bf16.mxu0 %v692
  %1878 = vmatpush2.bf16.msra.mxu0 %v691
  %1879 = vmatprep.subr.bf16.mxu0 %v688
  %1880 = vmatpush2.bf16.msra.mxu0 %v687
  %1881 = vmatprep.subr.bf16.mxu0 %v684
  %1882 = vmatpush2.bf16.msra.mxu0 %v683
  %1883 = vmatprep.subr.bf16.mxu0 %v680
  %1884 = vmatpush2.bf16.msra.mxu0 %v679
  %1885 = vmatprep.mubr.bf16.mxu0 %v1811
  %1886 = vmatmul.mubr.bf16.gmra.mxu0 %v1810
  %v1887 = vpop.f32.mrf.mxu0
  %v1888 = vadd.f32 %v444, %v1887
  %v1889 = vpop.f32.mrf.mxu0
  %v1890 = vadd.f32 %v448, %v1889
  %v1891 = vpop.f32.mrf.mxu0
  %v1892 = vpop.f32.mrf.mxu0
  %1893 = vdwg.mxu0
  %1894 = vmatprep.subr.bf16.mxu0 %v980
  %1895 = vmatpush1.bf16.msra.mxu0 %v979
  %1896 = vmatprep.subr.bf16.mxu0 %v976
  %1897 = vmatpush1.bf16.msra.mxu0 %v975
  %1898 = vmatprep.subr.bf16.mxu0 %v972
  %1899 = vmatpush1.bf16.msra.mxu0 %v971
  %1900 = vmatprep.subr.bf16.mxu0 %v968
  %1901 = vmatpush1.bf16.msra.mxu0 %v967
  %1902 = vmatprep.subr.bf16.mxu0 %v964
  %1903 = vmatpush1.bf16.msra.mxu0 %v963
  %1904 = vmatprep.subr.bf16.mxu0 %v960
  %1905 = vmatpush1.bf16.msra.mxu0 %v959
  %1906 = vmatprep.subr.bf16.mxu0 %v956
  %1907 = vmatpush1.bf16.msra.mxu0 %v955
  %1908 = vmatprep.subr.bf16.mxu0 %v952
  %1909 = vmatpush1.bf16.msra.mxu0 %v951
  %1910 = vmatprep.subr.bf16.mxu0 0
  %1911 = vmatpush2.bf16.msra.mxu0 0
  %1912 = vmatprep.subr.bf16.mxu0 0
  %1913 = vmatpush2.bf16.msra.mxu0 0
  %1914 = vmatprep.subr.bf16.mxu0 0
  %1915 = vmatpush2.bf16.msra.mxu0 0
  %1916 = vmatprep.subr.bf16.mxu0 0
  %1917 = vmatpush2.bf16.msra.mxu0 0
  %1918 = vmatprep.subr.bf16.mxu0 0
  %1919 = vmatpush2.bf16.msra.mxu0 0
  %1920 = vmatprep.subr.bf16.mxu0 0
  %1921 = vmatpush2.bf16.msra.mxu0 0
  %1922 = vmatprep.subr.bf16.mxu0 0
  %1923 = vmatpush2.bf16.msra.mxu0 0
  %1924 = vmatprep.subr.bf16.mxu0 0
  %1925 = vmatpush2.bf16.msra.mxu0 0
  %1926 = vmatprep.mubr.bf16.mxu0 0
  %1927 = vmatmul.mubr.bf16.gmra.mxu0 %v1810
  %v1928 = vpop.f32.mrf.mxu0
  %v1929 = vadd.f32 0.0, %v1928
  %v1930 = vpop.f32.mrf.mxu0
  %v1931 = vadd.f32 0.0, %v1930
  %v1932 = vpop.f32.mrf.mxu0
  %v1933 = vpop.f32.mrf.mxu0
  %1934 = vdwg.mxu0
  %1935 = vmatprep.subr.bf16.mxu0 %v982
  %1936 = vmatpush1.bf16.msra.mxu0 %v981
  %1937 = vmatprep.subr.bf16.mxu0 %v978
  %1938 = vmatpush1.bf16.msra.mxu0 %v977
  %1939 = vmatprep.subr.bf16.mxu0 %v974
  %1940 = vmatpush1.bf16.msra.mxu0 %v973
  %1941 = vmatprep.subr.bf16.mxu0 %v970
  %1942 = vmatpush1.bf16.msra.mxu0 %v969
  %1943 = vmatprep.subr.bf16.mxu0 %v966
  %1944 = vmatpush1.bf16.msra.mxu0 %v965
  %1945 = vmatprep.subr.bf16.mxu0 %v962
  %1946 = vmatpush1.bf16.msra.mxu0 %v961
  %1947 = vmatprep.subr.bf16.mxu0 %v958
  %1948 = vmatpush1.bf16.msra.mxu0 %v957
  %1949 = vmatprep.subr.bf16.mxu0 %v954
  %1950 = vmatpush1.bf16.msra.mxu0 %v953
  %1951 = vmatprep.subr.bf16.mxu0 0
  %1952 = vmatpush2.bf16.msra.mxu0 0
  %1953 = vmatprep.subr.bf16.mxu0 0
  %1954 = vmatpush2.bf16.msra.mxu0 0
  %1955 = vmatprep.subr.bf16.mxu0 0
  %1956 = vmatpush2.bf16.msra.mxu0 0
  %1957 = vmatprep.subr.bf16.mxu0 0
  %1958 = vmatpush2.bf16.msra.mxu0 0
  %1959 = vmatprep.subr.bf16.mxu0 0
  %1960 = vmatpush2.bf16.msra.mxu0 0
  %1961 = vmatprep.subr.bf16.mxu0 0
  %1962 = vmatpush2.bf16.msra.mxu0 0
  %1963 = vmatprep.subr.bf16.mxu0 0
  %1964 = vmatpush2.bf16.msra.mxu0 0
  %1965 = vmatprep.subr.bf16.mxu0 0
  %1966 = vmatpush2.bf16.msra.mxu0 0
  %1967 = vmatprep.mubr.bf16.mxu0 0
  %1968 = vmatmul.mubr.bf16.gmra.mxu0 %v1810
  %v1969 = vpop.f32.mrf.mxu0
  %v1970 = vadd.f32 0.0, %v1969
  %v1971 = vpop.f32.mrf.mxu0
  %v1972 = vadd.f32 0.0, %v1971
  %v1973 = vpop.f32.mrf.mxu0
  %v1974 = vpop.f32.mrf.mxu0
  %1975 = vdwg.mxu0
  %v1976 = vadd.f32 %v218, %v1929
  %v1977 = vadd.f32 %v220, %v1931
  %v1978 = vadd.f32 %v291, %v1970
  %v1979 = vadd.f32 %v293, %v1972
  %v1980 = vxor.u32 %v1847, 2147483648
  %v1981 = vxor.u32 %v1849, 2147483648
  %v1982 = vmul.f32 %v1980, 1.442695
  %v1983 = vpow.pop %v1982
  %v1984 = vmul.f32 %v1981, 1.442695
  %v1985 = vpow.pop %v1984
  %v1986 = vadd.f32 %v1983, 1.0
  %v1987 = vadd.f32 %v1985, 1.0
  %v1988 = vrcp.pop %v1986
  %v1989 = vmul.f32 1.0, %v1988
  %v1990 = vrcp.pop %v1987
  %v1991 = vmul.f32 1.0, %v1990
  %v1992 = vtanh.pop %v1888
  %v1993 = vxor.u32 %v1890, 2147483648
  %v1994 = vmul.f32 %v1993, 1.442695
  %v1995 = vpow.pop %v1994
  %v1996 = vadd.f32 %v1995, 1.0
  %v1997 = vrcp.pop %v1996
  %v1998 = vmul.f32 1.0, %v1997
  %v1999 = vmul.f32 %v1991, %v1781
  %v2000 = vmul.f32 %v1989, %v1992
  %v2001 = vadd.f32 %v1999, %v2000
  %v2002 = vtanh.pop %v2001
  %v2003 = vmul.f32 %v1998, %v2002
  %s2004 = scalar_lea.vmem [#allocation2], 32
  %2005 = vst [vmem:[%s2004] sm:$0xff] %v2003
  %v2006 = vxor.u32 %v1976, 2147483648
  %v2007 = vxor.u32 %v1977, 2147483648
  %v2008 = vmul.f32 %v2006, 1.442695
  %v2009 = vpow.pop %v2008
  %v2010 = vmul.f32 %v2007, 1.442695
  %v2011 = vpow.pop %v2010
  %v2012 = vadd.f32 %v2009, 1.0
  %v2013 = vadd.f32 %v2011, 1.0
  %v2014 = vrcp.pop %v2012
  %v2015 = vmul.f32 1.0, %v2014
  %v2016 = vrcp.pop %v2013
  %v2017 = vmul.f32 1.0, %v2016
  %v2018 = vtanh.pop %v1978
  %v2019 = vxor.u32 %v1979, 2147483648
  %v2020 = vmul.f32 %v2019, 1.442695
  %v2021 = vpow.pop %v2020
  %v2022 = vadd.f32 %v2021, 1.0
  %v2023 = vrcp.pop %v2022
  %v2024 = vmul.f32 1.0, %v2023
  %v2025 = vmul.f32 %v2017, %v1807
  %v2026 = vmul.f32 %v2015, %v2018
  %v2027 = vadd.f32 %v2025, %v2026
  %v2028 = vtanh.pop %v2027
  %v2029 = vmul.f32 %v2024, %v2028
  %v2030 = vpack.c.bf16 %v2029, %v2029
  %v2031 = vpack.c.bf16 %v2003, %v2003
  %2032 = vmatprep.subr.bf16.mxu0 %v674
  %2033 = vmatpush1.bf16.msra.mxu0 %v673
  %2034 = vmatprep.subr.bf16.mxu0 %v670
  %2035 = vmatpush1.bf16.msra.mxu0 %v669
  %2036 = vmatprep.subr.bf16.mxu0 %v666
  %2037 = vmatpush1.bf16.msra.mxu0 %v665
  %2038 = vmatprep.subr.bf16.mxu0 %v662
  %2039 = vmatpush1.bf16.msra.mxu0 %v661
  %2040 = vmatprep.subr.bf16.mxu0 %v658
  %2041 = vmatpush1.bf16.msra.mxu0 %v657
  %2042 = vmatprep.subr.bf16.mxu0 %v654
  %2043 = vmatpush1.bf16.msra.mxu0 %v653
  %2044 = vmatprep.subr.bf16.mxu0 %v650
  %2045 = vmatpush1.bf16.msra.mxu0 %v649
  %2046 = vmatprep.subr.bf16.mxu0 %v646
  %2047 = vmatpush1.bf16.msra.mxu0 %v645
  %2048 = vmatprep.subr.bf16.mxu0 %v706
  %2049 = vmatpush2.bf16.msra.mxu0 %v705
  %2050 = vmatprep.subr.bf16.mxu0 %v702
  %2051 = vmatpush2.bf16.msra.mxu0 %v701
  %2052 = vmatprep.subr.bf16.mxu0 %v698
  %2053 = vmatpush2.bf16.msra.mxu0 %v697
  %2054 = vmatprep.subr.bf16.mxu0 %v694
  %2055 = vmatpush2.bf16.msra.mxu0 %v693
  %2056 = vmatprep.subr.bf16.mxu0 %v690
  %2057 = vmatpush2.bf16.msra.mxu0 %v689
  %2058 = vmatprep.subr.bf16.mxu0 %v686
  %2059 = vmatpush2.bf16.msra.mxu0 %v685
  %2060 = vmatprep.subr.bf16.mxu0 %v682
  %2061 = vmatpush2.bf16.msra.mxu0 %v681
  %2062 = vmatprep.subr.bf16.mxu0 %v678
  %2063 = vmatpush2.bf16.msra.mxu0 %v677
  %2064 = vmatprep.mubr.bf16.mxu0 %v2031
  %2065 = vmatmul.mubr.bf16.gmra.mxu0 %v2030
  %v2066 = vpop.f32.mrf.mxu0
  %v2067 = vadd.f32 %v436, %v2066
  %v2068 = vpop.f32.mrf.mxu0
  %v2069 = vadd.f32 %v440, %v2068
  %v2070 = vpop.f32.mrf.mxu0
  %v2071 = vpop.f32.mrf.mxu0
  %2072 = vdwg.mxu0
  %2073 = vmatprep.subr.bf16.mxu0 %v676
  %2074 = vmatpush1.bf16.msra.mxu0 %v675
  %2075 = vmatprep.subr.bf16.mxu0 %v672
  %2076 = vmatpush1.bf16.msra.mxu0 %v671
  %2077 = vmatprep.subr.bf16.mxu0 %v668
  %2078 = vmatpush1.bf16.msra.mxu0 %v667
  %2079 = vmatprep.subr.bf16.mxu0 %v664
  %2080 = vmatpush1.bf16.msra.mxu0 %v663
  %2081 = vmatprep.subr.bf16.mxu0 %v660
  %2082 = vmatpush1.bf16.msra.mxu0 %v659
  %2083 = vmatprep.subr.bf16.mxu0 %v656
  %2084 = vmatpush1.bf16.msra.mxu0 %v655
  %2085 = vmatprep.subr.bf16.mxu0 %v652
  %2086 = vmatpush1.bf16.msra.mxu0 %v651
  %2087 = vmatprep.subr.bf16.mxu0 %v648
  %2088 = vmatpush1.bf16.msra.mxu0 %v647
  %2089 = vmatprep.subr.bf16.mxu0 %v708
  %2090 = vmatpush2.bf16.msra.mxu0 %v707
  %2091 = vmatprep.subr.bf16.mxu0 %v704
  %2092 = vmatpush2.bf16.msra.mxu0 %v703
  %2093 = vmatprep.subr.bf16.mxu0 %v700
  %2094 = vmatpush2.bf16.msra.mxu0 %v699
  %2095 = vmatprep.subr.bf16.mxu0 %v696
  %2096 = vmatpush2.bf16.msra.mxu0 %v695
  %2097 = vmatprep.subr.bf16.mxu0 %v692
  %2098 = vmatpush2.bf16.msra.mxu0 %v691
  %2099 = vmatprep.subr.bf16.mxu0 %v688
  %2100 = vmatpush2.bf16.msra.mxu0 %v687
  %2101 = vmatprep.subr.bf16.mxu0 %v684
  %2102 = vmatpush2.bf16.msra.mxu0 %v683
  %2103 = vmatprep.subr.bf16.mxu0 %v680
  %2104 = vmatpush2.bf16.msra.mxu0 %v679
  %2105 = vmatprep.mubr.bf16.mxu0 %v2031
  %2106 = vmatmul.mubr.bf16.gmra.mxu0 %v2030
  %v2107 = vpop.f32.mrf.mxu0
  %v2108 = vadd.f32 %v444, %v2107
  %v2109 = vpop.f32.mrf.mxu0
  %v2110 = vadd.f32 %v448, %v2109
  %v2111 = vpop.f32.mrf.mxu0
  %v2112 = vpop.f32.mrf.mxu0
  %2113 = vdwg.mxu0
  %2114 = vmatprep.subr.bf16.mxu0 %v980
  %2115 = vmatpush1.bf16.msra.mxu0 %v979
  %2116 = vmatprep.subr.bf16.mxu0 %v976
  %2117 = vmatpush1.bf16.msra.mxu0 %v975
  %2118 = vmatprep.subr.bf16.mxu0 %v972
  %2119 = vmatpush1.bf16.msra.mxu0 %v971
  %2120 = vmatprep.subr.bf16.mxu0 %v968
  %2121 = vmatpush1.bf16.msra.mxu0 %v967
  %2122 = vmatprep.subr.bf16.mxu0 %v964
  %2123 = vmatpush1.bf16.msra.mxu0 %v963
  %2124 = vmatprep.subr.bf16.mxu0 %v960
  %2125 = vmatpush1.bf16.msra.mxu0 %v959
  %2126 = vmatprep.subr.bf16.mxu0 %v956
  %2127 = vmatpush1.bf16.msra.mxu0 %v955
  %2128 = vmatprep.subr.bf16.mxu0 %v952
  %2129 = vmatpush1.bf16.msra.mxu0 %v951
  %2130 = vmatprep.subr.bf16.mxu0 0
  %2131 = vmatpush2.bf16.msra.mxu0 0
  %2132 = vmatprep.subr.bf16.mxu0 0
  %2133 = vmatpush2.bf16.msra.mxu0 0
  %2134 = vmatprep.subr.bf16.mxu0 0
  %2135 = vmatpush2.bf16.msra.mxu0 0
  %2136 = vmatprep.subr.bf16.mxu0 0
  %2137 = vmatpush2.bf16.msra.mxu0 0
  %2138 = vmatprep.subr.bf16.mxu0 0
  %2139 = vmatpush2.bf16.msra.mxu0 0
  %2140 = vmatprep.subr.bf16.mxu0 0
  %2141 = vmatpush2.bf16.msra.mxu0 0
  %2142 = vmatprep.subr.bf16.mxu0 0
  %2143 = vmatpush2.bf16.msra.mxu0 0
  %2144 = vmatprep.subr.bf16.mxu0 0
  %2145 = vmatpush2.bf16.msra.mxu0 0
  %2146 = vmatprep.mubr.bf16.mxu0 0
  %2147 = vmatmul.mubr.bf16.gmra.mxu0 %v2030
  %v2148 = vpop.f32.mrf.mxu0
  %v2149 = vadd.f32 0.0, %v2148
  %v2150 = vpop.f32.mrf.mxu0
  %v2151 = vadd.f32 0.0, %v2150
  %v2152 = vpop.f32.mrf.mxu0
  %v2153 = vpop.f32.mrf.mxu0
  %2154 = vdwg.mxu0
  %2155 = vmatprep.subr.bf16.mxu0 %v982
  %2156 = vmatpush1.bf16.msra.mxu0 %v981
  %2157 = vmatprep.subr.bf16.mxu0 %v978
  %2158 = vmatpush1.bf16.msra.mxu0 %v977
  %2159 = vmatprep.subr.bf16.mxu0 %v974
  %2160 = vmatpush1.bf16.msra.mxu0 %v973
  %2161 = vmatprep.subr.bf16.mxu0 %v970
  %2162 = vmatpush1.bf16.msra.mxu0 %v969
  %2163 = vmatprep.subr.bf16.mxu0 %v966
  %2164 = vmatpush1.bf16.msra.mxu0 %v965
  %2165 = vmatprep.subr.bf16.mxu0 %v962
  %2166 = vmatpush1.bf16.msra.mxu0 %v961
  %2167 = vmatprep.subr.bf16.mxu0 %v958
  %2168 = vmatpush1.bf16.msra.mxu0 %v957
  %2169 = vmatprep.subr.bf16.mxu0 %v954
  %2170 = vmatpush1.bf16.msra.mxu0 %v953
  %2171 = vmatprep.subr.bf16.mxu0 0
  %2172 = vmatpush2.bf16.msra.mxu0 0
  %2173 = vmatprep.subr.bf16.mxu0 0
  %2174 = vmatpush2.bf16.msra.mxu0 0
  %2175 = vmatprep.subr.bf16.mxu0 0
  %2176 = vmatpush2.bf16.msra.mxu0 0
  %2177 = vmatprep.subr.bf16.mxu0 0
  %2178 = vmatpush2.bf16.msra.mxu0 0
  %2179 = vmatprep.subr.bf16.mxu0 0
  %2180 = vmatpush2.bf16.msra.mxu0 0
  %2181 = vmatprep.subr.bf16.mxu0 0
  %2182 = vmatpush2.bf16.msra.mxu0 0
  %2183 = vmatprep.subr.bf16.mxu0 0
  %2184 = vmatpush2.bf16.msra.mxu0 0
  %2185 = vmatprep.subr.bf16.mxu0 0
  %2186 = vmatpush2.bf16.msra.mxu0 0
  %2187 = vmatprep.mubr.bf16.mxu0 0
  %2188 = vmatmul.mubr.bf16.gmra.mxu0 %v2030
  %v2189 = vpop.f32.mrf.mxu0
  %v2190 = vadd.f32 0.0, %v2189
  %v2191 = vpop.f32.mrf.mxu0
  %v2192 = vadd.f32 0.0, %v2191
  %v2193 = vpop.f32.mrf.mxu0
  %v2194 = vpop.f32.mrf.mxu0
  %2195 = vdwg.mxu0
  %v2196 = vadd.f32 %v224, %v2149
  %v2197 = vadd.f32 %v226, %v2151
  %v2198 = vadd.f32 %v297, %v2190
  %v2199 = vadd.f32 %v299, %v2192
  %v2200 = vxor.u32 %v2067, 2147483648
  %v2201 = vxor.u32 %v2069, 2147483648
  %v2202 = vmul.f32 %v2200, 1.442695
  %v2203 = vpow.pop %v2202
  %v2204 = vmul.f32 %v2201, 1.442695
  %v2205 = vpow.pop %v2204
  %v2206 = vadd.f32 %v2203, 1.0
  %v2207 = vadd.f32 %v2205, 1.0
  %v2208 = vrcp.pop %v2206
  %v2209 = vmul.f32 1.0, %v2208
  %v2210 = vrcp.pop %v2207
  %v2211 = vmul.f32 1.0, %v2210
  %v2212 = vtanh.pop %v2108
  %v2213 = vxor.u32 %v2110, 2147483648
  %v2214 = vmul.f32 %v2213, 1.442695
  %v2215 = vpow.pop %v2214
  %v2216 = vadd.f32 %v2215, 1.0
  %v2217 = vrcp.pop %v2216
  %v2218 = vmul.f32 1.0, %v2217
  %v2219 = vmul.f32 %v2211, %v2001
  %v2220 = vmul.f32 %v2209, %v2212
  %v2221 = vadd.f32 %v2219, %v2220
  %v2222 = vtanh.pop %v2221
  %v2223 = vmul.f32 %v2218, %v2222
  %s2224 = scalar_lea.vmem [#allocation2], 40
  %2225 = vst [vmem:[%s2224] sm:$0xff] %v2223
  %v2226 = vxor.u32 %v2196, 2147483648
  %v2227 = vxor.u32 %v2197, 2147483648
  %v2228 = vmul.f32 %v2226, 1.442695
  %v2229 = vpow.pop %v2228
  %v2230 = vmul.f32 %v2227, 1.442695
  %v2231 = vpow.pop %v2230
  %v2232 = vadd.f32 %v2229, 1.0
  %v2233 = vadd.f32 %v2231, 1.0
  %v2234 = vrcp.pop %v2232
  %v2235 = vmul.f32 1.0, %v2234
  %v2236 = vrcp.pop %v2233
  %v2237 = vmul.f32 1.0, %v2236
  %v2238 = vtanh.pop %v2198
  %v2239 = vxor.u32 %v2199, 2147483648
  %v2240 = vmul.f32 %v2239, 1.442695
  %v2241 = vpow.pop %v2240
  %v2242 = vadd.f32 %v2241, 1.0
  %v2243 = vrcp.pop %v2242
  %v2244 = vmul.f32 1.0, %v2243
  %v2245 = vmul.f32 %v2237, %v2027
  %v2246 = vmul.f32 %v2235, %v2238
  %v2247 = vadd.f32 %v2245, %v2246
  %v2248 = vtanh.pop %v2247
  %v2249 = vmul.f32 %v2244, %v2248
  %v2250 = vpack.c.bf16 %v2249, %v2249
  %v2251 = vpack.c.bf16 %v2223, %v2223
  %2252 = vmatprep.subr.bf16.mxu0 %v674
  %2253 = vmatpush1.bf16.msra.mxu0 %v673
  %2254 = vmatprep.subr.bf16.mxu0 %v670
  %2255 = vmatpush1.bf16.msra.mxu0 %v669
  %2256 = vmatprep.subr.bf16.mxu0 %v666
  %2257 = vmatpush1.bf16.msra.mxu0 %v665
  %2258 = vmatprep.subr.bf16.mxu0 %v662
  %2259 = vmatpush1.bf16.msra.mxu0 %v661
  %2260 = vmatprep.subr.bf16.mxu0 %v658
  %2261 = vmatpush1.bf16.msra.mxu0 %v657
  %2262 = vmatprep.subr.bf16.mxu0 %v654
  %2263 = vmatpush1.bf16.msra.mxu0 %v653
  %2264 = vmatprep.subr.bf16.mxu0 %v650
  %2265 = vmatpush1.bf16.msra.mxu0 %v649
  %2266 = vmatprep.subr.bf16.mxu0 %v646
  %2267 = vmatpush1.bf16.msra.mxu0 %v645
  %2268 = vmatprep.subr.bf16.mxu0 %v706
  %2269 = vmatpush2.bf16.msra.mxu0 %v705
  %2270 = vmatprep.subr.bf16.mxu0 %v702
  %2271 = vmatpush2.bf16.msra.mxu0 %v701
  %2272 = vmatprep.subr.bf16.mxu0 %v698
  %2273 = vmatpush2.bf16.msra.mxu0 %v697
  %2274 = vmatprep.subr.bf16.mxu0 %v694
  %2275 = vmatpush2.bf16.msra.mxu0 %v693
  %2276 = vmatprep.subr.bf16.mxu0 %v690
  %2277 = vmatpush2.bf16.msra.mxu0 %v689
  %2278 = vmatprep.subr.bf16.mxu0 %v686
  %2279 = vmatpush2.bf16.msra.mxu0 %v685
  %2280 = vmatprep.subr.bf16.mxu0 %v682
  %2281 = vmatpush2.bf16.msra.mxu0 %v681
  %2282 = vmatprep.subr.bf16.mxu0 %v678
  %2283 = vmatpush2.bf16.msra.mxu0 %v677
  %2284 = vmatprep.mubr.bf16.mxu0 %v2251
  %2285 = vmatmul.mubr.bf16.gmra.mxu0 %v2250
  %v2286 = vpop.f32.mrf.mxu0
  %v2287 = vadd.f32 %v436, %v2286
  %v2288 = vpop.f32.mrf.mxu0
  %v2289 = vadd.f32 %v440, %v2288
  %v2290 = vpop.f32.mrf.mxu0
  %v2291 = vpop.f32.mrf.mxu0
  %2292 = vdwg.mxu0
  %2293 = vmatprep.subr.bf16.mxu0 %v676
  %2294 = vmatpush1.bf16.msra.mxu0 %v675
  %2295 = vmatprep.subr.bf16.mxu0 %v672
  %2296 = vmatpush1.bf16.msra.mxu0 %v671
  %2297 = vmatprep.subr.bf16.mxu0 %v668
  %2298 = vmatpush1.bf16.msra.mxu0 %v667
  %2299 = vmatprep.subr.bf16.mxu0 %v664
  %2300 = vmatpush1.bf16.msra.mxu0 %v663
  %2301 = vmatprep.subr.bf16.mxu0 %v660
  %2302 = vmatpush1.bf16.msra.mxu0 %v659
  %2303 = vmatprep.subr.bf16.mxu0 %v656
  %2304 = vmatpush1.bf16.msra.mxu0 %v655
  %2305 = vmatprep.subr.bf16.mxu0 %v652
  %2306 = vmatpush1.bf16.msra.mxu0 %v651
  %2307 = vmatprep.subr.bf16.mxu0 %v648
  %2308 = vmatpush1.bf16.msra.mxu0 %v647
  %2309 = vmatprep.subr.bf16.mxu0 %v708
  %2310 = vmatpush2.bf16.msra.mxu0 %v707
  %2311 = vmatprep.subr.bf16.mxu0 %v704
  %2312 = vmatpush2.bf16.msra.mxu0 %v703
  %2313 = vmatprep.subr.bf16.mxu0 %v700
  %2314 = vmatpush2.bf16.msra.mxu0 %v699
  %2315 = vmatprep.subr.bf16.mxu0 %v696
  %2316 = vmatpush2.bf16.msra.mxu0 %v695
  %2317 = vmatprep.subr.bf16.mxu0 %v692
  %2318 = vmatpush2.bf16.msra.mxu0 %v691
  %2319 = vmatprep.subr.bf16.mxu0 %v688
  %2320 = vmatpush2.bf16.msra.mxu0 %v687
  %2321 = vmatprep.subr.bf16.mxu0 %v684
  %2322 = vmatpush2.bf16.msra.mxu0 %v683
  %2323 = vmatprep.subr.bf16.mxu0 %v680
  %2324 = vmatpush2.bf16.msra.mxu0 %v679
  %2325 = vmatprep.mubr.bf16.mxu0 %v2251
  %2326 = vmatmul.mubr.bf16.gmra.mxu0 %v2250
  %v2327 = vpop.f32.mrf.mxu0
  %v2328 = vadd.f32 %v444, %v2327
  %v2329 = vpop.f32.mrf.mxu0
  %v2330 = vadd.f32 %v448, %v2329
  %v2331 = vpop.f32.mrf.mxu0
  %v2332 = vpop.f32.mrf.mxu0
  %2333 = vdwg.mxu0
  %2334 = vmatprep.subr.bf16.mxu0 %v980
  %2335 = vmatpush1.bf16.msra.mxu0 %v979
  %2336 = vmatprep.subr.bf16.mxu0 %v976
  %2337 = vmatpush1.bf16.msra.mxu0 %v975
  %2338 = vmatprep.subr.bf16.mxu0 %v972
  %2339 = vmatpush1.bf16.msra.mxu0 %v971
  %2340 = vmatprep.subr.bf16.mxu0 %v968
  %2341 = vmatpush1.bf16.msra.mxu0 %v967
  %2342 = vmatprep.subr.bf16.mxu0 %v964
  %2343 = vmatpush1.bf16.msra.mxu0 %v963
  %2344 = vmatprep.subr.bf16.mxu0 %v960
  %2345 = vmatpush1.bf16.msra.mxu0 %v959
  %2346 = vmatprep.subr.bf16.mxu0 %v956
  %2347 = vmatpush1.bf16.msra.mxu0 %v955
  %2348 = vmatprep.subr.bf16.mxu0 %v952
  %2349 = vmatpush1.bf16.msra.mxu0 %v951
  %2350 = vmatprep.subr.bf16.mxu0 0
  %2351 = vmatpush2.bf16.msra.mxu0 0
  %2352 = vmatprep.subr.bf16.mxu0 0
  %2353 = vmatpush2.bf16.msra.mxu0 0
  %2354 = vmatprep.subr.bf16.mxu0 0
  %2355 = vmatpush2.bf16.msra.mxu0 0
  %2356 = vmatprep.subr.bf16.mxu0 0
  %2357 = vmatpush2.bf16.msra.mxu0 0
  %2358 = vmatprep.subr.bf16.mxu0 0
  %2359 = vmatpush2.bf16.msra.mxu0 0
  %2360 = vmatprep.subr.bf16.mxu0 0
  %2361 = vmatpush2.bf16.msra.mxu0 0
  %2362 = vmatprep.subr.bf16.mxu0 0
  %2363 = vmatpush2.bf16.msra.mxu0 0
  %2364 = vmatprep.subr.bf16.mxu0 0
  %2365 = vmatpush2.bf16.msra.mxu0 0
  %2366 = vmatprep.mubr.bf16.mxu0 0
  %2367 = vmatmul.mubr.bf16.gmra.mxu0 %v2250
  %v2368 = vpop.f32.mrf.mxu0
  %v2369 = vadd.f32 0.0, %v2368
  %v2370 = vpop.f32.mrf.mxu0
  %v2371 = vadd.f32 0.0, %v2370
  %v2372 = vpop.f32.mrf.mxu0
  %v2373 = vpop.f32.mrf.mxu0
  %2374 = vdwg.mxu0
  %2375 = vmatprep.subr.bf16.mxu0 %v982
  %2376 = vmatpush1.bf16.msra.mxu0 %v981
  %2377 = vmatprep.subr.bf16.mxu0 %v978
  %2378 = vmatpush1.bf16.msra.mxu0 %v977
  %2379 = vmatprep.subr.bf16.mxu0 %v974
  %2380 = vmatpush1.bf16.msra.mxu0 %v973
  %2381 = vmatprep.subr.bf16.mxu0 %v970
  %2382 = vmatpush1.bf16.msra.mxu0 %v969
  %2383 = vmatprep.subr.bf16.mxu0 %v966
  %2384 = vmatpush1.bf16.msra.mxu0 %v965
  %2385 = vmatprep.subr.bf16.mxu0 %v962
  %2386 = vmatpush1.bf16.msra.mxu0 %v961
  %2387 = vmatprep.subr.bf16.mxu0 %v958
  %2388 = vmatpush1.bf16.msra.mxu0 %v957
  %2389 = vmatprep.subr.bf16.mxu0 %v954
  %2390 = vmatpush1.bf16.msra.mxu0 %v953
  %2391 = vmatprep.subr.bf16.mxu0 0
  %2392 = vmatpush2.bf16.msra.mxu0 0
  %2393 = vmatprep.subr.bf16.mxu0 0
  %2394 = vmatpush2.bf16.msra.mxu0 0
  %2395 = vmatprep.subr.bf16.mxu0 0
  %2396 = vmatpush2.bf16.msra.mxu0 0
  %2397 = vmatprep.subr.bf16.mxu0 0
  %2398 = vmatpush2.bf16.msra.mxu0 0
  %2399 = vmatprep.subr.bf16.mxu0 0
  %2400 = vmatpush2.bf16.msra.mxu0 0
  %2401 = vmatprep.subr.bf16.mxu0 0
  %2402 = vmatpush2.bf16.msra.mxu0 0
  %2403 = vmatprep.subr.bf16.mxu0 0
  %2404 = vmatpush2.bf16.msra.mxu0 0
  %2405 = vmatprep.subr.bf16.mxu0 0
  %2406 = vmatpush2.bf16.msra.mxu0 0
  %2407 = vmatprep.mubr.bf16.mxu0 0
  %2408 = vmatmul.mubr.bf16.gmra.mxu0 %v2250
  %v2409 = vpop.f32.mrf.mxu0
  %v2410 = vadd.f32 0.0, %v2409
  %v2411 = vpop.f32.mrf.mxu0
  %v2412 = vadd.f32 0.0, %v2411
  %v2413 = vpop.f32.mrf.mxu0
  %v2414 = vpop.f32.mrf.mxu0
  %2415 = vdwg.mxu0
  %v2416 = vadd.f32 %v228, %v2369
  %v2417 = vadd.f32 %v230, %v2371
  %v2418 = vadd.f32 %v301, %v2410
  %v2419 = vadd.f32 %v303, %v2412
  %v2420 = vxor.u32 %v2287, 2147483648
  %v2421 = vxor.u32 %v2289, 2147483648
  %v2422 = vmul.f32 %v2420, 1.442695
  %v2423 = vpow.pop %v2422
  %v2424 = vmul.f32 %v2421, 1.442695
  %v2425 = vpow.pop %v2424
  %v2426 = vadd.f32 %v2423, 1.0
  %v2427 = vadd.f32 %v2425, 1.0
  %v2428 = vrcp.pop %v2426
  %v2429 = vmul.f32 1.0, %v2428
  %v2430 = vrcp.pop %v2427
  %v2431 = vmul.f32 1.0, %v2430
  %v2432 = vtanh.pop %v2328
  %v2433 = vxor.u32 %v2330, 2147483648
  %v2434 = vmul.f32 %v2433, 1.442695
  %v2435 = vpow.pop %v2434
  %v2436 = vadd.f32 %v2435, 1.0
  %v2437 = vrcp.pop %v2436
  %v2438 = vmul.f32 1.0, %v2437
  %v2439 = vmul.f32 %v2431, %v2221
  %v2440 = vmul.f32 %v2429, %v2432
  %v2441 = vadd.f32 %v2439, %v2440
  %v2442 = vtanh.pop %v2441
  %v2443 = vmul.f32 %v2438, %v2442
  %s2444 = scalar_lea.vmem [#allocation2], 48
  %2445 = vst [vmem:[%s2444] sm:$0xff] %v2443
  %v2446 = vxor.u32 %v2416, 2147483648
  %v2447 = vxor.u32 %v2417, 2147483648
  %v2448 = vmul.f32 %v2446, 1.442695
  %v2449 = vpow.pop %v2448
  %v2450 = vmul.f32 %v2447, 1.442695
  %v2451 = vpow.pop %v2450
  %v2452 = vadd.f32 %v2449, 1.0
  %v2453 = vadd.f32 %v2451, 1.0
  %v2454 = vrcp.pop %v2452
  %v2455 = vmul.f32 1.0, %v2454
  %v2456 = vrcp.pop %v2453
  %v2457 = vmul.f32 1.0, %v2456
  %v2458 = vtanh.pop %v2418
  %v2459 = vxor.u32 %v2419, 2147483648
  %v2460 = vmul.f32 %v2459, 1.442695
  %v2461 = vpow.pop %v2460
  %v2462 = vadd.f32 %v2461, 1.0
  %v2463 = vrcp.pop %v2462
  %v2464 = vmul.f32 1.0, %v2463
  %v2465 = vmul.f32 %v2457, %v2247
  %v2466 = vmul.f32 %v2455, %v2458
  %v2467 = vadd.f32 %v2465, %v2466
  %v2468 = vtanh.pop %v2467
  %v2469 = vmul.f32 %v2464, %v2468
  %v2470 = vpack.c.bf16 %v2469, %v2469
  %v2471 = vpack.c.bf16 %v2443, %v2443
  %2472 = vmatprep.subr.bf16.mxu0 %v674
  %2473 = vmatpush1.bf16.msra.mxu0 %v673
  %2474 = vmatprep.subr.bf16.mxu0 %v670
  %2475 = vmatpush1.bf16.msra.mxu0 %v669
  %2476 = vmatprep.subr.bf16.mxu0 %v666
  %2477 = vmatpush1.bf16.msra.mxu0 %v665
  %2478 = vmatprep.subr.bf16.mxu0 %v662
  %2479 = vmatpush1.bf16.msra.mxu0 %v661
  %2480 = vmatprep.subr.bf16.mxu0 %v658
  %2481 = vmatpush1.bf16.msra.mxu0 %v657
  %2482 = vmatprep.subr.bf16.mxu0 %v654
  %2483 = vmatpush1.bf16.msra.mxu0 %v653
  %2484 = vmatprep.subr.bf16.mxu0 %v650
  %2485 = vmatpush1.bf16.msra.mxu0 %v649
  %2486 = vmatprep.subr.bf16.mxu0 %v646
  %2487 = vmatpush1.bf16.msra.mxu0 %v645
  %2488 = vmatprep.subr.bf16.mxu0 %v706
  %2489 = vmatpush2.bf16.msra.mxu0 %v705
  %2490 = vmatprep.subr.bf16.mxu0 %v702
  %2491 = vmatpush2.bf16.msra.mxu0 %v701
  %2492 = vmatprep.subr.bf16.mxu0 %v698
  %2493 = vmatpush2.bf16.msra.mxu0 %v697
  %2494 = vmatprep.subr.bf16.mxu0 %v694
  %2495 = vmatpush2.bf16.msra.mxu0 %v693
  %2496 = vmatprep.subr.bf16.mxu0 %v690
  %2497 = vmatpush2.bf16.msra.mxu0 %v689
  %2498 = vmatprep.subr.bf16.mxu0 %v686
  %2499 = vmatpush2.bf16.msra.mxu0 %v685
  %2500 = vmatprep.subr.bf16.mxu0 %v682
  %2501 = vmatpush2.bf16.msra.mxu0 %v681
  %2502 = vmatprep.subr.bf16.mxu0 %v678
  %2503 = vmatpush2.bf16.msra.mxu0 %v677
  %2504 = vmatprep.mubr.bf16.mxu0 %v2471
  %2505 = vmatmul.mubr.bf16.gmra.mxu0 %v2470
  %v2506 = vpop.f32.mrf.mxu0
  %v2507 = vadd.f32 %v436, %v2506
  %v2508 = vpop.f32.mrf.mxu0
  %v2509 = vadd.f32 %v440, %v2508
  %v2510 = vpop.f32.mrf.mxu0
  %v2511 = vpop.f32.mrf.mxu0
  %2512 = vdwg.mxu0
  %2513 = vmatprep.subr.bf16.mxu0 %v676
  %2514 = vmatpush1.bf16.msra.mxu0 %v675
  %2515 = vmatprep.subr.bf16.mxu0 %v672
  %2516 = vmatpush1.bf16.msra.mxu0 %v671
  %2517 = vmatprep.subr.bf16.mxu0 %v668
  %2518 = vmatpush1.bf16.msra.mxu0 %v667
  %2519 = vmatprep.subr.bf16.mxu0 %v664
  %2520 = vmatpush1.bf16.msra.mxu0 %v663
  %2521 = vmatprep.subr.bf16.mxu0 %v660
  %2522 = vmatpush1.bf16.msra.mxu0 %v659
  %2523 = vmatprep.subr.bf16.mxu0 %v656
  %2524 = vmatpush1.bf16.msra.mxu0 %v655
  %2525 = vmatprep.subr.bf16.mxu0 %v652
  %2526 = vmatpush1.bf16.msra.mxu0 %v651
  %2527 = vmatprep.subr.bf16.mxu0 %v648
  %2528 = vmatpush1.bf16.msra.mxu0 %v647
  %2529 = vmatprep.subr.bf16.mxu0 %v708
  %2530 = vmatpush2.bf16.msra.mxu0 %v707
  %2531 = vmatprep.subr.bf16.mxu0 %v704
  %2532 = vmatpush2.bf16.msra.mxu0 %v703
  %2533 = vmatprep.subr.bf16.mxu0 %v700
  %2534 = vmatpush2.bf16.msra.mxu0 %v699
  %2535 = vmatprep.subr.bf16.mxu0 %v696
  %2536 = vmatpush2.bf16.msra.mxu0 %v695
  %2537 = vmatprep.subr.bf16.mxu0 %v692
  %2538 = vmatpush2.bf16.msra.mxu0 %v691
  %2539 = vmatprep.subr.bf16.mxu0 %v688
  %2540 = vmatpush2.bf16.msra.mxu0 %v687
  %2541 = vmatprep.subr.bf16.mxu0 %v684
  %2542 = vmatpush2.bf16.msra.mxu0 %v683
  %2543 = vmatprep.subr.bf16.mxu0 %v680
  %2544 = vmatpush2.bf16.msra.mxu0 %v679
  %2545 = vmatprep.mubr.bf16.mxu0 %v2471
  %2546 = vmatmul.mubr.bf16.gmra.mxu0 %v2470
  %v2547 = vpop.f32.mrf.mxu0
  %v2548 = vadd.f32 %v444, %v2547
  %v2549 = vpop.f32.mrf.mxu0
  %v2550 = vadd.f32 %v448, %v2549
  %v2551 = vpop.f32.mrf.mxu0
  %v2552 = vpop.f32.mrf.mxu0
  %2553 = vdwg.mxu0
  %v2554 = vxor.u32 %v2507, 2147483648
  %v2555 = vxor.u32 %v2509, 2147483648
  %v2556 = vmul.f32 %v2554, 1.442695
  %v2557 = vpow.pop %v2556
  %v2558 = vmul.f32 %v2555, 1.442695
  %v2559 = vpow.pop %v2558
  %v2560 = vadd.f32 %v2557, 1.0
  %v2561 = vadd.f32 %v2559, 1.0
  %v2562 = vrcp.pop %v2560
  %v2563 = vmul.f32 1.0, %v2562
  %v2564 = vrcp.pop %v2561
  %v2565 = vmul.f32 1.0, %v2564
  %v2566 = vtanh.pop %v2548
  %v2567 = vxor.u32 %v2550, 2147483648
  %v2568 = vmul.f32 %v2567, 1.442695
  %v2569 = vpow.pop %v2568
  %v2570 = vadd.f32 %v2569, 1.0
  %v2571 = vrcp.pop %v2570
  %v2572 = vmul.f32 1.0, %v2571
  %v2573 = vmul.f32 %v2565, %v2441
  %v2574 = vmul.f32 %v2563, %v2566
  %v2575 = vadd.f32 %v2573, %v2574
  %v2576 = vtanh.pop %v2575
  %v2577 = vmul.f32 %v2572, %v2576
  %s2578 = scalar_lea.vmem [#allocation2], 56
  %2579 = vst [vmem:[%s2578] sm:$0xff] %v2577
  %v2580 = vld [vmem:[#allocation2] sm:$0xff]
  %v2581 = vld [vmem:[#allocation2 + $0x8] sm:$0xff]
  %v2582 = vld [vmem:[#allocation2 + $0x10] sm:$0xff]
  %v2583 = vld [vmem:[#allocation2 + $0x18] sm:$0xff]
  %v2584 = vld [vmem:[#allocation2 + $0x20] sm:$0xff]
  %v2585 = vld [vmem:[#allocation2 + $0x28] sm:$0xff]
  %v2586 = vld [vmem:[#allocation2 + $0x30] sm:$0xff]
  %v2587 = vld [vmem:[#allocation2 + $0x38] sm:$0xff]
  %v2588 = vld [vmem:[%s6] sm:$0xf]
  %v2589 = vld [vmem:[%s6 + $0x4] sm:$0xf]
  %v2590 = vld [vmem:[%s6 + $0x8] sm:$0xf]
  %v2591 = vld [vmem:[%s6 + $0xc] sm:$0xf]
  %v2592 = vld [vmem:[%s6 + $0x10] sm:$0xf]
  %v2593 = vld [vmem:[%s6 + $0x14] sm:$0xf]
  %v2594 = vld [vmem:[%s6 + $0x18] sm:$0xf]
  %v2595 = vld [vmem:[%s6 + $0x1c] sm:$0xf]
  %v2596 = vld [vmem:[%s6 + $0x20] sm:$0xf]
  %v2597 = vld [vmem:[%s6 + $0x24] sm:$0xf]
  %v2598 = vld [vmem:[%s6 + $0x28] sm:$0xf]
  %v2599 = vld [vmem:[%s6 + $0x2c] sm:$0xf]
  %v2600 = vld [vmem:[%s6 + $0x30] sm:$0xf]
  %v2601 = vld [vmem:[%s6 + $0x34] sm:$0xf]
  %v2602 = vld [vmem:[%s6 + $0x38] sm:$0xf]
  %v2603 = vld [vmem:[%s6 + $0x3c] sm:$0xf]
  %v2604 = vpack.c.bf16 %v2581, %v2580
  %v2605 = vpack.c.bf16 %v2583, %v2582
  %v2606 = vpack.c.bf16 %v2585, %v2584
  %v2607 = vpack.c.bf16 %v2587, %v2586
  %v2608 = vld [vmem:[%s7] sm:$0x1]
  %v2610 = vlaneseq
  %v2611 = vshrl.u32 %v2610, 7
  %v2612 = vsub.s32 0, %v2611
  %v2613 = vrot.slane %v2608, %v2612
  %v2631 = vunpack.c.l.b16 %v2588
  %v2632 = vunpack.c.l.b16 %v2589
  %v2633 = vunpack.c.l.b16 %v2590
  %v2634 = vunpack.c.l.b16 %v2591
  %v2635 = vunpack.c.l.b16 %v2592
  %v2636 = vunpack.c.l.b16 %v2593
  %v2637 = vunpack.c.l.b16 %v2594
  %v2638 = vunpack.c.l.b16 %v2595
  %v2639 = vunpack.c.l.b16 %v2596
  %v2640 = vunpack.c.l.b16 %v2597
  %v2641 = vunpack.c.l.b16 %v2598
  %v2642 = vunpack.c.l.b16 %v2599
  %v2643 = vunpack.c.l.b16 %v2600
  %v2644 = vunpack.c.l.b16 %v2601
  %v2645 = vunpack.c.l.b16 %v2602
  %v2646 = vunpack.c.l.b16 %v2603
  %v2647 = vpack.c.b16 %v2632, %v2631
  %v2648 = vpack.c.b16 %v2634, %v2633
  %v2649 = vpack.c.b16 %v2636, %v2635
  %v2650 = vpack.c.b16 %v2638, %v2637
  %v2651 = vpack.c.b16 %v2640, %v2639
  %v2652 = vpack.c.b16 %v2642, %v2641
  %v2653 = vpack.c.b16 %v2644, %v2643
  %v2654 = vpack.c.b16 %v2646, %v2645
  %2663 = vmatprep.subr.bf16.mxu0 0
  %2664 = vmatpush1.bf16.msra.mxu0 %v2654
  %2665 = vmatprep.subr.bf16.mxu0 0
  %2666 = vmatpush1.bf16.msra.mxu0 %v2653
  %2667 = vmatprep.subr.bf16.mxu0 0
  %2668 = vmatpush1.bf16.msra.mxu0 %v2652
  %2669 = vmatprep.subr.bf16.mxu0 0
  %2670 = vmatpush1.bf16.msra.mxu0 %v2651
  %2671 = vmatprep.subr.bf16.mxu0 0
  %2672 = vmatpush1.bf16.msra.mxu0 %v2650
  %2673 = vmatprep.subr.bf16.mxu0 0
  %2674 = vmatpush1.bf16.msra.mxu0 %v2649
  %2675 = vmatprep.subr.bf16.mxu0 0
  %2676 = vmatpush1.bf16.msra.mxu0 %v2648
  %2677 = vmatprep.subr.bf16.mxu0 0
  %2678 = vmatpush1.bf16.msra.mxu0 %v2647
  %2679 = vmatprep.subr.bf16.mxu0 0
  %2680 = vmatpush2.bf16.msra.mxu0 0
  %2681 = vmatprep.subr.bf16.mxu0 0
  %2682 = vmatpush2.bf16.msra.mxu0 0
  %2683 = vmatprep.subr.bf16.mxu0 0
  %2684 = vmatpush2.bf16.msra.mxu0 0
  %2685 = vmatprep.subr.bf16.mxu0 0
  %2686 = vmatpush2.bf16.msra.mxu0 0
  %2687 = vmatprep.subr.bf16.mxu0 0
  %2688 = vmatpush2.bf16.msra.mxu0 0
  %2689 = vmatprep.subr.bf16.mxu0 0
  %2690 = vmatpush2.bf16.msra.mxu0 0
  %2691 = vmatprep.subr.bf16.mxu0 0
  %2692 = vmatpush2.bf16.msra.mxu0 0
  %2693 = vmatprep.subr.bf16.mxu0 0
  %2694 = vmatpush2.bf16.msra.mxu0 0
  %2695 = vmatprep.mubr.bf16.mxu0 0
  %2696 = vmatmul.mubr.bf16.gmra.mxu0 %v2604
  %v2697 = vpop.f32.mrf.mxu0
  %v2698 = vadd.f32 %v2613, %v2697
  %v2699 = vpop.f32.mrf.mxu0
  %v2700 = vpop.f32.mrf.mxu0
  %v2701 = vadd.f32 %v2613, %v2700
  %v2702 = vpop.f32.mrf.mxu0
  %2703 = vmatprep.mubr.bf16.mxu0 0
  %2704 = vmatmul.mubr.bf16.gmra.mxu0 %v2605
  %v2705 = vpop.f32.mrf.mxu0
  %v2706 = vadd.f32 %v2613, %v2705
  %v2707 = vpop.f32.mrf.mxu0
  %v2708 = vpop.f32.mrf.mxu0
  %v2709 = vadd.f32 %v2613, %v2708
  %v2710 = vpop.f32.mrf.mxu0
  %2711 = vmatprep.mubr.bf16.mxu0 0
  %2712 = vmatmul.mubr.bf16.gmra.mxu0 %v2606
  %v2713 = vpop.f32.mrf.mxu0
  %v2714 = vadd.f32 %v2613, %v2713
  %v2715 = vpop.f32.mrf.mxu0
  %v2716 = vpop.f32.mrf.mxu0
  %v2717 = vadd.f32 %v2613, %v2716
  %v2718 = vpop.f32.mrf.mxu0
  %2719 = vmatprep.mubr.bf16.mxu0 0
  %2720 = vmatmul.mubr.bf16.gmra.mxu0 %v2607
  %v2721 = vpop.f32.mrf.mxu0
  %v2722 = vadd.f32 %v2613, %v2721
  %v2723 = vpop.f32.mrf.mxu0
  %v2724 = vpop.f32.mrf.mxu0
  %v2725 = vadd.f32 %v2613, %v2724
  %v2726 = vpop.f32.mrf.mxu0
  %2727 = vdwg.mxu0
  %v2728 = vtanh.pop %v2698
  %v2729 = vtanh.pop %v2701
  %v2730 = vtanh.pop %v2706
  %v2731 = vtanh.pop %v2709
  %v2732 = vtanh.pop %v2714
  %v2733 = vtanh.pop %v2717
  %v2734 = vtanh.pop %v2722
  %v2735 = vtanh.pop %v2725
  %v2736 = vld [vmem:[%s8] sm:$0x1]
  %v2738 = vlaneseq
  %v2739 = vshrl.u32 %v2738, 7
  %v2740 = vsub.s32 0, %v2739
  %v2741 = vrot.slane %v2736, %v2740
  %v2743 = vmul.f32 %v2728, %v2741
  %v2744 = vmul.f32 %v2729, %v2741
  %v2745 = vmul.f32 %v2730, %v2741
  %v2746 = vmul.f32 %v2731, %v2741
  %v2747 = vmul.f32 %v2732, %v2741
  %v2748 = vmul.f32 %v2733, %v2741
  %v2749 = vmul.f32 %v2734, %v2741
  %v2750 = vmul.f32 %v2735, %v2741
  %vm2751 = vcmask 523264
  %v2752 = vsel %vm2751, %v2743, 0.0
  %2753 = vadd.xlane.f32.xlu0 %v2752
  %v2754 = vpop.xlane.xlu0 %2753
  %v2755 = vsel %vm2751, %v2744, 0.0
  %2756 = vadd.xlane.f32.xlu0 %v2755
  %v2757 = vpop.xlane.xlu0 %2756
  %v2758 = vsel %vm2751, %v2745, 0.0
  %2759 = vadd.xlane.f32.xlu0 %v2758
  %v2760 = vpop.xlane.xlu0 %2759
  %v2761 = vsel %vm2751, %v2746, 0.0
  %2762 = vadd.xlane.f32.xlu0 %v2761
  %v2763 = vpop.xlane.xlu0 %2762
  %v2764 = vsel %vm2751, %v2747, 0.0
  %2765 = vadd.xlane.f32.xlu0 %v2764
  %v2766 = vpop.xlane.xlu0 %2765
  %v2767 = vsel %vm2751, %v2748, 0.0
  %2768 = vadd.xlane.f32.xlu0 %v2767
  %v2769 = vpop.xlane.xlu0 %2768
  %v2770 = vsel %vm2751, %v2749, 0.0
  %2771 = vadd.xlane.f32.xlu0 %v2770
  %v2772 = vpop.xlane.xlu0 %2771
  %v2773 = vsel %vm2751, %v2750, 0.0
  %2774 = vadd.xlane.f32.xlu0 %v2773
  %v2775 = vpop.xlane.xlu0 %2774
  %v2776 = vld [vmem:[#allocation5] sm:$0x1]
  %v2778 = vlaneseq
  %v2779 = vshrl.u32 %v2778, 7
  %v2780 = vsub.s32 0, %v2779
  %v2781 = vrot.slane %v2776, %v2780
  %v2783 = vadd.f32 %v2754, %v2781
  %v2784 = vadd.f32 %v2757, %v2781
  %v2785 = vadd.f32 %v2760, %v2781
  %v2786 = vadd.f32 %v2763, %v2781
  %v2787 = vadd.f32 %v2766, %v2781
  %v2788 = vadd.f32 %v2769, %v2781
  %v2789 = vadd.f32 %v2772, %v2781
  %v2790 = vadd.f32 %v2775, %v2781
  %vm2791 = vcmask 7168
  %v2792 = vsel %vm2791, %v2783, -inf
  %v2793 = vsel %vm2791, %v2784, -inf
  %v2794 = vsel %vm2791, %v2785, -inf
  %v2795 = vsel %vm2791, %v2786, -inf
  %v2796 = vsel %vm2791, %v2787, -inf
  %v2797 = vmax.f32 %v2792, %v2796
  %v2798 = vsel %vm2791, %v2788, -inf
  %v2799 = vmax.f32 %v2793, %v2798
  %v2800 = vsel %vm2791, %v2789, -inf
  %v2801 = vmax.f32 %v2794, %v2800
  %v2802 = vsel %vm2791, %v2790, -inf
  %v2803 = vmax.f32 %v2795, %v2802
  %v2804 = vmax.f32 %v2797, %v2799
  %v2805 = vmax.f32 %v2801, %v2803
  %v2806 = vmax.f32 %v2804, %v2805
  %v2807 = vsub.f32 %v2783, %v2806
  %v2808 = vsub.f32 %v2784, %v2806
  %v2809 = vsub.f32 %v2785, %v2806
  %v2810 = vsub.f32 %v2786, %v2806
  %v2811 = vsub.f32 %v2787, %v2806
  %v2812 = vsub.f32 %v2788, %v2806
  %v2813 = vsub.f32 %v2789, %v2806
  %v2814 = vsub.f32 %v2790, %v2806
  %v2815 = vmul.f32 %v2807, 1.442695
  %v2816 = vpow.pop %v2815
  %v2817 = vmul.f32 %v2808, 1.442695
  %v2818 = vpow.pop %v2817
  %v2819 = vmul.f32 %v2809, 1.442695
  %v2820 = vpow.pop %v2819
  %v2821 = vmul.f32 %v2810, 1.442695
  %v2822 = vpow.pop %v2821
  %v2823 = vmul.f32 %v2811, 1.442695
  %v2824 = vpow.pop %v2823
  %v2825 = vmul.f32 %v2812, 1.442695
  %v2826 = vpow.pop %v2825
  %v2827 = vmul.f32 %v2813, 1.442695
  %v2828 = vpow.pop %v2827
  %v2829 = vmul.f32 %v2814, 1.442695
  %v2830 = vpow.pop %v2829
  %v2831 = vsel %vm2791, %v2816, 0.0
  %v2832 = vsel %vm2791, %v2818, 0.0
  %v2833 = vadd.f32 %v2831, %v2832
  %v2834 = vsel %vm2791, %v2820, 0.0
  %v2835 = vadd.f32 %v2833, %v2834
  %v2836 = vsel %vm2791, %v2822, 0.0
  %v2837 = vadd.f32 %v2835, %v2836
  %v2838 = vsel %vm2791, %v2824, 0.0
  %v2839 = vadd.f32 %v2837, %v2838
  %v2840 = vsel %vm2791, %v2826, 0.0
  %v2841 = vadd.f32 %v2839, %v2840
  %v2842 = vsel %vm2791, %v2828, 0.0
  %v2843 = vadd.f32 %v2841, %v2842
  %v2844 = vsel %vm2791, %v2830, 0.0
  %v2845 = vadd.f32 %v2843, %v2844
  %v2846 = vrcp.pop %v2845
  %v2847 = vmul.f32 %v2816, %v2846
  %v2848 = vmul.f32 %v2818, %v2846
  %v2849 = vmul.f32 %v2820, %v2846
  %v2850 = vmul.f32 %v2822, %v2846
  %v2851 = vmul.f32 %v2824, %v2846
  %v2852 = vmul.f32 %v2826, %v2846
  %v2853 = vmul.f32 %v2828, %v2846
  %v2854 = vmul.f32 %v2830, %v2846
  %2856 = vset.pattern.permute.xlu0 0
  %2857 = vperm.xlu0 %2856, %v2847
  %v2858 = vpop.permute.xlu0 %2857
  %2861 = vset.pattern.permute.xlu0 0
  %2862 = vperm.xlu0 %2861, %v2848
  %v2863 = vpop.permute.xlu0 %2862
  %2866 = vset.pattern.permute.xlu0 0
  %2867 = vperm.xlu0 %2866, %v2849
  %v2868 = vpop.permute.xlu0 %2867
  %2871 = vset.pattern.permute.xlu0 0
  %2872 = vperm.xlu0 %2871, %v2850
  %v2873 = vpop.permute.xlu0 %2872
  %2876 = vset.pattern.permute.xlu0 0
  %2877 = vperm.xlu0 %2876, %v2851
  %v2878 = vpop.permute.xlu0 %2877
  %2881 = vset.pattern.permute.xlu0 0
  %2882 = vperm.xlu0 %2881, %v2852
  %v2883 = vpop.permute.xlu0 %2882
  %2886 = vset.pattern.permute.xlu0 0
  %2887 = vperm.xlu0 %2886, %v2853
  %v2888 = vpop.permute.xlu0 %2887
  %2891 = vset.pattern.permute.xlu0 0
  %2892 = vperm.xlu0 %2891, %v2854
  %v2893 = vpop.permute.xlu0 %2892
  %v2895 = vmul.f32 %v2858, %v2580
  %v2896 = vmul.f32 %v2863, %v2581
  %v2897 = vmul.f32 %v2868, %v2582
  %v2898 = vmul.f32 %v2873, %v2583
  %v2899 = vmul.f32 %v2878, %v2584
  %v2900 = vmul.f32 %v2883, %v2585
  %v2901 = vmul.f32 %v2888, %v2586
  %v2902 = vmul.f32 %v2893, %v2587
  %v2903 = vadd.f32 %v2895, %v2896
  %v2904 = vadd.f32 %v2903, %v2897
  %v2905 = vadd.f32 %v2904, %v2898
  %v2906 = vadd.f32 %v2905, %v2899
  %v2907 = vadd.f32 %v2906, %v2900
  %v2908 = vadd.f32 %v2907, %v2901
  %v2909 = vadd.f32 %v2908, %v2902
  %v2910 = vld [vmem:[%s10] sm:$0xf]
  %v2911 = vld [vmem:[%s10 + $0x4] sm:$0xf]
  %v2912 = vld [vmem:[%s10 + $0x8] sm:$0xf]
  %v2913 = vld [vmem:[%s10 + $0xc] sm:$0xf]
  %v2914 = vld [vmem:[%s10 + $0x10] sm:$0xf]
  %v2915 = vld [vmem:[%s10 + $0x14] sm:$0xf]
  %v2916 = vld [vmem:[%s10 + $0x18] sm:$0xf]
  %v2917 = vld [vmem:[%s10 + $0x1c] sm:$0xf]
  %v2918 = vld [vmem:[%s10 + $0x20] sm:$0xf]
  %v2919 = vld [vmem:[%s10 + $0x24] sm:$0xf]
  %v2920 = vld [vmem:[%s10 + $0x28] sm:$0xf]
  %v2921 = vld [vmem:[%s10 + $0x2c] sm:$0xf]
  %v2922 = vld [vmem:[%s10 + $0x30] sm:$0xf]
  %v2923 = vld [vmem:[%s10 + $0x34] sm:$0xf]
  %v2924 = vld [vmem:[%s10 + $0x38] sm:$0xf]
  %v2925 = vld [vmem:[%s10 + $0x3c] sm:$0xf]
  %v2926 = vpack.c.bf16 %v2909, %v2909
  %v2927 = vld [vmem:[%s11] sm:$0x1]
  %v2929 = vlaneseq
  %v2930 = vshrl.u32 %v2929, 7
  %v2931 = vsub.s32 0, %v2930
  %v2932 = vrot.slane %v2927, %v2931
  %v2950 = vunpack.c.l.b16 %v2910
  %v2951 = vunpack.c.l.b16 %v2911
  %v2952 = vunpack.c.l.b16 %v2912
  %v2953 = vunpack.c.l.b16 %v2913
  %v2954 = vunpack.c.l.b16 %v2914
  %v2955 = vunpack.c.l.b16 %v2915
  %v2956 = vunpack.c.l.b16 %v2916
  %v2957 = vunpack.c.l.b16 %v2917
  %v2958 = vunpack.c.l.b16 %v2918
  %v2959 = vunpack.c.l.b16 %v2919
  %v2960 = vunpack.c.l.b16 %v2920
  %v2961 = vunpack.c.l.b16 %v2921
  %v2962 = vunpack.c.l.b16 %v2922
  %v2963 = vunpack.c.l.b16 %v2923
  %v2964 = vunpack.c.l.b16 %v2924
  %v2965 = vunpack.c.l.b16 %v2925
  %v2966 = vpack.c.b16 %v2951, %v2950
  %v2967 = vpack.c.b16 %v2953, %v2952
  %v2968 = vpack.c.b16 %v2955, %v2954
  %v2969 = vpack.c.b16 %v2957, %v2956
  %v2970 = vpack.c.b16 %v2959, %v2958
  %v2971 = vpack.c.b16 %v2961, %v2960
  %v2972 = vpack.c.b16 %v2963, %v2962
  %v2973 = vpack.c.b16 %v2965, %v2964
  %2982 = vmatprep.subr.bf16.mxu0 0
  %2983 = vmatpush1.bf16.msra.mxu0 %v2973
  %2984 = vmatprep.subr.bf16.mxu0 0
  %2985 = vmatpush1.bf16.msra.mxu0 %v2972
  %2986 = vmatprep.subr.bf16.mxu0 0
  %2987 = vmatpush1.bf16.msra.mxu0 %v2971
  %2988 = vmatprep.subr.bf16.mxu0 0
  %2989 = vmatpush1.bf16.msra.mxu0 %v2970
  %2990 = vmatprep.subr.bf16.mxu0 0
  %2991 = vmatpush1.bf16.msra.mxu0 %v2969
  %2992 = vmatprep.subr.bf16.mxu0 0
  %2993 = vmatpush1.bf16.msra.mxu0 %v2968
  %2994 = vmatprep.subr.bf16.mxu0 0
  %2995 = vmatpush1.bf16.msra.mxu0 %v2967
  %2996 = vmatprep.subr.bf16.mxu0 0
  %2997 = vmatpush1.bf16.msra.mxu0 %v2966
  %2998 = vmatprep.subr.bf16.mxu0 0
  %2999 = vmatpush2.bf16.msra.mxu0 0
  %3000 = vmatprep.subr.bf16.mxu0 0
  %3001 = vmatpush2.bf16.msra.mxu0 0
  %3002 = vmatprep.subr.bf16.mxu0 0
  %3003 = vmatpush2.bf16.msra.mxu0 0
  %3004 = vmatprep.subr.bf16.mxu0 0
  %3005 = vmatpush2.bf16.msra.mxu0 0
  %3006 = vmatprep.subr.bf16.mxu0 0
  %3007 = vmatpush2.bf16.msra.mxu0 0
  %3008 = vmatprep.subr.bf16.mxu0 0
  %3009 = vmatpush2.bf16.msra.mxu0 0
  %3010 = vmatprep.subr.bf16.mxu0 0
  %3011 = vmatpush2.bf16.msra.mxu0 0
  %3012 = vmatprep.subr.bf16.mxu0 0
  %3013 = vmatpush2.bf16.msra.mxu0 0
  %3014 = vmatprep.mubr.bf16.mxu0 0
  %3015 = vmatmul.mubr.bf16.gmra.mxu0 %v2926
  %v3016 = vpop.f32.mrf.mxu0
  %v3017 = vadd.f32 %v2932, %v3016
  %v3018 = vpop.f32.mrf.mxu0
  %v3019 = vpop.f32.mrf.mxu0
  %v3020 = vpop.f32.mrf.mxu0
  %3021 = vdwg.mxu0
  %v3022 = vmax.f32 %v3017, 0.0
  %v3023 = vld [vmem:[%s12] sm:$0x1]
  %v3025 = vlaneseq
  %v3026 = vshrl.u32 %v3025, 7
  %v3027 = vsub.s32 0, %v3026
  %v3028 = vrot.slane %v3023, %v3027
  %v3030 = vmul.f32 %v3022, %v3028
  %v3031 = vsel %vm2751, %v3030, 0.0
  %3032 = vadd.xlane.f32.xlu0 %v3031
  %v3033 = vpop.xlane.xlu0 %3032
  %v3034 = vld [vmem:[#allocation6] sm:$0x1]
  %v3036 = vlaneseq
  %v3037 = vshrl.u32 %v3036, 7
  %v3038 = vsub.s32 0, %v3037
  %v3039 = vrot.slane %v3034, %v3038
  %v3041 = vadd.f32 %v3033, %v3039
  %3043 = vset.pattern.permute.xlu0 0
  %3044 = vperm.xlu0 %3043, %v3041
  %v3045 = vpop.permute.xlu0 %3044
  %3047 = vst [vmem:[%s14] sm:$0xff] %v3045
  // Predicated region
  $region58: #{forward.1} parent=0 // pred_check
    _
  $region59: #{forward.1} parent=0 // pred_check_branch
    %3049 = sbr.rel (0) target = $region61
  $region60: #{forward.1} parent=0 // pred_region
    _
  $region61: #{forward.1} parent=0 // pred_fallthru
    _
  // Predicated region
  $region62: #{forward.1} parent=0 // pred_check
    _
  $region63: #{forward.1} parent=0 // pred_check_branch
    %3051 = sbr.rel (0) target = $region65
  $region64: #{forward.1} parent=0 // pred_region
    _
  $region65: #{forward.1} parent=0 // pred_fallthru
    _
  %3052 = vsyncmov [#allocation4]
  %s3053 = vpop.sfrf %3052
  %p3054 = scmp.eq.s32.totalorder %s3053, 0
  %p3055 = pneg %p3054
  %3057 = shalt.err (%p3055)

</llo_original>
